<compile_context>
chip_gen: v7x
topology: tpu7x:2x2x1
jax: 0.10.0
libtpu: 0.0.40
codegen_flags: <defaults>
</compile_context>

<pallas_src>
import functools

import jax
import jax.numpy as jnp
import numpy as np
from jax.experimental import pallas as pl
from jax.experimental.pallas import tpu as pltpu

BN_EPS = 1e-5


# ----------------------------------------------------------------------------
# Kernel 1: per-batch-tile point feature extractor (matmuls + max reduces)
# ----------------------------------------------------------------------------
def _encoder_kernel(
    x_ref,                      # (Bt, N, 3)   f32
    w1_ref, b1_ref,             # 3->128 (BN folded), f32 (VPU path)
    w2_ref, b2_ref,             # 128->256, bf16 weight / f32 bias
    w3g_ref, w3l_ref, b3_ref,   # 512->512 split global/local (BN folded), bf16 / f32
    w4_ref, b4_ref,             # 512->F, bf16 / f32
    out_ref,                    # (1, Bt, F)   f32
    *, bt, n, feat_dim,
):
    x = x_ref[...].reshape(bt * n, 3)                       # (Bt*N, 3) f32

    # --- first_conv layer 1: K=3 contraction as VPU broadcast-MACs ---
    w1 = w1_ref[...]                                        # (3, 128)
    h = (x[:, 0:1] * w1[0:1, :]
         + x[:, 1:2] * w1[1:2, :]
         + x[:, 2:3] * w1[2:3, :]
         + b1_ref[...])
    h = jnp.maximum(h, 0.0)                                 # (Bt*N, 128), BN folded

    # --- first_conv layer 2: 128 -> 256 on the MXU (bf16 operands, f32 acc) ---
    f1 = jnp.dot(h.astype(jnp.bfloat16), w2_ref[...],
                 preferred_element_type=jnp.float32) + b2_ref[...]      # (Bt*N, 256)

    # global max over points (per batch element)
    g1 = jnp.max(f1.reshape(bt, n, 256), axis=1)            # (Bt, 256)

    # --- second_conv layer 1: concat([global, local]) @ W3 == g1@W3g + f1@W3l ---
    ug = jnp.dot(g1.astype(jnp.bfloat16), w3g_ref[...],
                 preferred_element_type=jnp.float32)        # (Bt, 512)
    ul = jnp.dot(f1.astype(jnp.bfloat16), w3l_ref[...],
                 preferred_element_type=jnp.float32)        # (Bt*N, 512)
    u = ul.reshape(bt, n, 512) + ug[:, None, :] + b3_ref[...]
    h2 = jnp.maximum(u, 0.0).reshape(bt * n, 512)           # BN folded into w3/b3

    # --- second_conv layer 2: 512 -> F ---
    f2 = jnp.dot(h2.astype(jnp.bfloat16), w4_ref[...],
                 preferred_element_type=jnp.float32) + b4_ref[...]      # (Bt*N, F)

    # global max over points -> per-batch global feature, sublane-dense store
    out_ref[0] = jnp.max(f2.reshape(bt, n, feat_dim), axis=1)           # (Bt, F)


# ----------------------------------------------------------------------------
# Kernel 2: Linear_ResBlock + fc1 + ReLU + fc2 head
# ----------------------------------------------------------------------------
def _head_kernel(
    g_ref,                      # (B, F)       f32 global feature
    wr1_ref, br1_ref,           # res conv1 F->F
    wrs_ref, brs_ref,           # stacked [conv2; conv_res] (2F, F), fused bias
    wf1_ref, bf1_ref,           # fc1 F->F
    wf2r_ref, bf2_ref,          # fc2 as a (1, F) row + scalar bias
    out_ref,                    # (B, 1)
):
    f = g_ref[...]                                          # (B, F) f32
    a = jnp.maximum(f, 0.0)
    h = jnp.maximum(
        jnp.dot(a.astype(jnp.bfloat16), wr1_ref[...],
                preferred_element_type=jnp.float32) + br1_ref[...], 0.0)
    cat = jnp.concatenate([h.astype(jnp.bfloat16), f.astype(jnp.bfloat16)],
                          axis=-1)                          # (B, 2F)
    r = jnp.dot(cat, wrs_ref[...],
                preferred_element_type=jnp.float32) + brs_ref[...]      # (B, F)
    y = jnp.dot(r.astype(jnp.bfloat16), wf1_ref[...],
                preferred_element_type=jnp.float32) + bf1_ref[...]      # (B, F)
    # fc2 (F -> 1): VPU multiply + lane reduce (avoids a lane-width-1 MXU matmul)
    out_ref[...] = (jnp.sum(jnp.maximum(y, 0.0) * wf2r_ref[...],
                            axis=-1, keepdims=True) + bf2_ref[...])


# ----------------------------------------------------------------------------
# Wrapper
# ----------------------------------------------------------------------------
def _const_spec(shape):
    nd = len(shape)
    return pl.BlockSpec(shape, lambda *args: (0,) * nd)


def _pick_bt(b):
    # Largest divisor of B (<=8) that still leaves >=2 grid blocks
    # (keeps both v7x TensorCores busy via the parallel batch axis).
    for bt in (8, 4, 2):
        if b % bt == 0 and b // bt >= 2:
            return bt
    return 1


@functools.partial(jax.jit, static_argnames=("feat_dim",))
def predictor_forward(pts, kp, feat_dim):
    B, N, _ = pts.shape
    F = feat_dim
    bt = _pick_bt(B)
    g = B // bt

    # ---- stage 1: points -> per-batch global feature (B, F) ----
    stage1_inputs = (
        pts.astype(jnp.float32),
        kp["w1"], kp["b1"],
        kp["w2"], kp["b2"],
        kp["w3g"], kp["w3l"], kp["b3"],
        kp["w4"], kp["b4"],
    )
    in_specs = [pl.BlockSpec((bt, N, 3), lambda b: (b, 0, 0))]
    in_specs += [_const_spec(a.shape) for a in stage1_inputs[1:]]

    flops = 2 * B * N * (3 * 128 + 128 * 256 + 512 * 512 + 512 * F)
    bytes_accessed = int(
        pts.size * 4 + B * F * 4
        + sum(int(np.prod(a.shape)) * a.dtype.itemsize for a in stage1_inputs[1:]))

    gfeat = pl.pallas_call(
        functools.partial(_encoder_kernel, bt=bt, n=N, feat_dim=F),
        out_shape=jax.ShapeDtypeStruct((g, bt, F), jnp.float32),
        grid_spec=pltpu.PrefetchScalarGridSpec(
            num_scalar_prefetch=0,
            grid=(g,),
            in_specs=in_specs,
            out_specs=pl.BlockSpec((1, bt, F), lambda b: (b, 0, 0)),
        ),
        compiler_params=pltpu.CompilerParams(
            dimension_semantics=("parallel",),
            vmem_limit_bytes=32 * 1024 * 1024),
        cost_estimate=pl.CostEstimate(
            flops=flops, transcendentals=0, bytes_accessed=bytes_accessed),
    )(*stage1_inputs)
    gfeat = gfeat.reshape(B, F)

    # ---- stage 2: residual MLP head -> (B, 1) ----
    head_inputs = (
        gfeat,
        kp["wr1"], kp["br1"],
        kp["wrs"], kp["brs"],
        kp["wf1"], kp["bf1"],
        kp["wf2r"], kp["bf2"],
    )
    head_specs = [_const_spec(a.shape) for a in head_inputs]

    vol = pl.pallas_call(
        _head_kernel,
        out_shape=jax.ShapeDtypeStruct((B, 1), jnp.float32),
        grid_spec=pltpu.PrefetchScalarGridSpec(
            num_scalar_prefetch=0,
            grid=(1,),
            in_specs=head_specs,
            out_specs=pl.BlockSpec((B, 1), lambda i: (0, 0)),
        ),
    )(*head_inputs)
    return vol


# ----------------------------------------------------------------------------
# Parameters: raw (torch-like, eval-mode BN) + host-side folding for the kernel
# ----------------------------------------------------------------------------
def trunc_normal(key, shape, std=0.02):
    return std * jax.random.truncated_normal(key, -2.0, 2.0, shape, jnp.float32)


def init_raw_params(key, feat_dim):
    F = feat_dim
    ks = jax.random.split(key, 10)
    p = {}
    # first_conv: Conv1d(3,128,1) -> BN(128) -> ReLU -> Conv1d(128,256,1)
    p["w1"] = trunc_normal(ks[0], (3, 128))                 # stored (C_in, C_out)
    p["b1"] = jnp.zeros((128,), jnp.float32)
    p["bn1_gamma"] = jnp.ones((128,), jnp.float32)
    p["bn1_beta"] = jnp.zeros((128,), jnp.float32)
    p["bn1_mean"] = jnp.zeros((128,), jnp.float32)
    p["bn1_var"] = jnp.ones((128,), jnp.float32)
    p["w2"] = trunc_normal(ks[1], (128, 256))
    p["b2"] = jnp.zeros((256,), jnp.float32)
    # second_conv: Conv1d(512,512,1) -> BN(512) -> ReLU -> Conv1d(512,F,1)
    p["w3"] = trunc_normal(ks[2], (512, 512))
    p["b3"] = jnp.zeros((512,), jnp.float32)
    p["bn2_gamma"] = jnp.ones((512,), jnp.float32)
    p["bn2_beta"] = jnp.zeros((512,), jnp.float32)
    p["bn2_mean"] = jnp.zeros((512,), jnp.float32)
    p["bn2_var"] = jnp.ones((512,), jnp.float32)
    p["w4"] = trunc_normal(ks[3], (512, F))
    p["b4"] = jnp.zeros((F,), jnp.float32)
    # Linear_ResBlock
    p["wr1"] = trunc_normal(ks[4], (F, F)); p["br1"] = jnp.zeros((F,), jnp.float32)
    p["wr2"] = trunc_normal(ks[5], (F, F)); p["br2"] = jnp.zeros((F,), jnp.float32)
    p["wrr"] = trunc_normal(ks[6], (F, F)); p["brr"] = jnp.zeros((F,), jnp.float32)
    # fc1 / fc2
    p["wf1"] = trunc_normal(ks[7], (F, F)); p["bf1"] = jnp.zeros((F,), jnp.float32)
    p["wf2"] = trunc_normal(ks[8], (F, 1)); p["bf2"] = jnp.zeros((1,), jnp.float32)
    return p


def prepare_kernel_params(p):
    """Fold eval-mode BN into conv weights, fuse residual weights, transpose
    fc2, and cast MXU operands to bf16 (biases stay f32)."""
    F32, BF16 = jnp.float32, jnp.bfloat16
    s1 = p["bn1_gamma"] / jnp.sqrt(p["bn1_var"] + BN_EPS)
    s2 = p["bn2_gamma"] / jnp.sqrt(p["bn2_var"] + BN_EPS)
    kp = {}
    kp["w1"] = (p["w1"] * s1[None, :]).astype(F32)          # VPU MAC layer stays f32
    kp["b1"] = ((p["b1"] - p["bn1_mean"]) * s1 + p["bn1_beta"]).reshape(1, -1).astype(F32)
    kp["w2"] = p["w2"].astype(BF16)
    kp["b2"] = p["b2"].reshape(1, -1).astype(F32)
    w3f = p["w3"] * s2[None, :]
    kp["w3g"] = w3f[:256, :].astype(BF16)                   # rows hit by the global feature
    kp["w3l"] = w3f[256:, :].astype(BF16)                   # rows hit by per-point features
    kp["b3"] = ((p["b3"] - p["bn2_mean"]) * s2 + p["bn2_beta"]).reshape(1, -1).astype(F32)
    kp["w4"] = p["w4"].astype(BF16)
    kp["b4"] = p["b4"].reshape(1, -1).astype(F32)
    # head
    kp["wr1"] = p["wr1"].astype(BF16)
    kp["br1"] = p["br1"].reshape(1, -1).astype(F32)
    kp["wrs"] = jnp.concatenate([p["wr2"], p["wrr"]], axis=0).astype(BF16)   # (2F, F)
    kp["brs"] = (p["br2"] + p["brr"]).reshape(1, -1).astype(F32)
    kp["wf1"] = p["wf1"].astype(BF16)
    kp["bf1"] = p["bf1"].reshape(1, -1).astype(F32)
    kp["wf2r"] = p["wf2"].T.astype(F32)                     # (1, F)
    kp["bf2"] = p["bf2"].reshape(1, 1).astype(F32)
    return kp


# Plain-JAX reference of the PyTorch forward (explicit eval-mode BN, concat).
def reference_forward(pts, p):
    def bn(x, g_, b_, m_, v_):
        return (x - m_) / jnp.sqrt(v_ + BN_EPS) * g_ + b_

    h = jnp.maximum(bn(pts @ p["w1"] + p["b1"], p["bn1_gamma"], p["bn1_beta"],
                       p["bn1_mean"], p["bn1_var"]), 0.0)
    f1 = h @ p["w2"] + p["b2"]                              # (B, N, 256)
    g1 = jnp.max(f1, axis=1, keepdims=True)                 # (B, 1, 256)
    cat = jnp.concatenate([jnp.broadcast_to(g1, f1.shape), f1], axis=-1)   # (B, N, 512)
    u = bn(cat @ p["w3"] + p["b3"], p["bn2_gamma"], p["bn2_beta"],
           p["bn2_mean"], p["bn2_var"])
    f2 = jnp.maximum(u, 0.0) @ p["w4"] + p["b4"]            # (B, N, F)
    g2 = jnp.max(f2, axis=1)                                # (B, F)
    a = jnp.maximum(g2, 0.0)
    h3 = jnp.maximum(a @ p["wr1"] + p["br1"], 0.0)
    r = h3 @ p["wr2"] + p["br2"] + g2 @ p["wrr"] + p["brr"]
    y = r @ p["wf1"] + p["bf1"]
    return jnp.maximum(y, 0.0) @ p["wf2"] + p["bf2"]        # (B, 1)


if __name__ == "__main__":
    # Small shapes consistent with the module: a point cloud (B, N, 3)
    B, N, FEAT_DIM = 2, 128, 256

    key = jax.random.PRNGKey(0)
    k_pts, k_par = jax.random.split(key)
    pts = jax.random.normal(k_pts, (B, N, 3), jnp.float32)
    raw_params = init_raw_params(k_par, FEAT_DIM)
    kernel_params = prepare_kernel_params(raw_params)

    vol = predictor_forward(pts, kernel_params, FEAT_DIM)
    vol = jax.block_until_ready(vol)

    ref = jax.block_until_ready(reference_forward(pts, raw_params))
    assert vol.shape == (B, 1)
    np.testing.assert_allclose(np.asarray(vol), np.asarray(ref),
                               rtol=2e-3, atol=2e-3)
    print("KERNEL_OK")
</pallas_src>

<mosaic_0001>
module attributes {stable_mosaic.version = 11 : i64} {
  func.func @_head_kernel(%arg0: i32, %arg1: memref<2x256xf32, #tpu.memory_space<vmem>>, %arg2: memref<256x256xbf16, #tpu.memory_space<vmem>>, %arg3: memref<1x256xf32, #tpu.memory_space<vmem>>, %arg4: memref<512x256xbf16, #tpu.memory_space<vmem>>, %arg5: memref<1x256xf32, #tpu.memory_space<vmem>>, %arg6: memref<256x256xbf16, #tpu.memory_space<vmem>>, %arg7: memref<1x256xf32, #tpu.memory_space<vmem>>, %arg8: memref<1x256xf32, #tpu.memory_space<vmem>>, %arg9: memref<1x1xf32, #tpu.memory_space<vmem>>, %arg10: memref<2x1xf32, #tpu.memory_space<vmem>>) attributes {dimension_semantics = [#tpu.dimension_semantics<arbitrary>], iteration_bounds = array<i64: 1>, scalar_prefetch = 0 : i64, scratch_operands = 0 : i64, tpu.core_type = #tpu.core_type<tc>, window_params = [{pipeline_mode = #tpu.pipeline_mode<synchronous>, transform_indices = @transform_0, window_bounds = array<i64: 2, 256>}, {pipeline_mode = #tpu.pipeline_mode<synchronous>, transform_indices = @transform_1, window_bounds = array<i64: 256, 256>}, {pipeline_mode = #tpu.pipeline_mode<synchronous>, transform_indices = @transform_2, window_bounds = array<i64: 1, 256>}, {pipeline_mode = #tpu.pipeline_mode<synchronous>, transform_indices = @transform_3, window_bounds = array<i64: 512, 256>}, {pipeline_mode = #tpu.pipeline_mode<synchronous>, transform_indices = @transform_4, window_bounds = array<i64: 1, 256>}, {pipeline_mode = #tpu.pipeline_mode<synchronous>, transform_indices = @transform_5, window_bounds = array<i64: 256, 256>}, {pipeline_mode = #tpu.pipeline_mode<synchronous>, transform_indices = @transform_6, window_bounds = array<i64: 1, 256>}, {pipeline_mode = #tpu.pipeline_mode<synchronous>, transform_indices = @transform_7, window_bounds = array<i64: 1, 256>}, {pipeline_mode = #tpu.pipeline_mode<synchronous>, transform_indices = @transform_8, window_bounds = array<i64: 1, 1>}, {pipeline_mode = #tpu.pipeline_mode<synchronous>, transform_indices = @transform_9, window_bounds = array<i64: 2, 1>}]} {
    %c0 = arith.constant 0 : index
    %c0_0 = arith.constant 0 : index
    %0 = vector.load %arg1[%c0, %c0_0] : memref<2x256xf32, #tpu.memory_space<vmem>>, vector<2x256xf32>
    %cst = arith.constant 0.000000e+00 : f32
    %1 = vector.broadcast %cst : f32 to vector<2x256xf32>
    %2 = arith.maximumf %0, %1 : vector<2x256xf32>
    %3 = arith.truncf %2 : vector<2x256xf32> to vector<2x256xbf16>
    %c0_1 = arith.constant 0 : index
    %c0_2 = arith.constant 0 : index
    %4 = vector.load %arg2[%c0_1, %c0_2] : memref<256x256xbf16, #tpu.memory_space<vmem>>, vector<256x256xbf16>
    %cst_3 = arith.constant dense<0.000000e+00> : vector<2x256xf32>
    %5 = tpu.matmul %3, %4, %cst_3 {dimension_numbers = #tpu.dot_dimension_numbers<[1], [0], [0], [1], [0, 0, 1, 1], [], []>} : vector<2x256xbf16>, vector<256x256xbf16>, vector<2x256xf32> -> vector<2x256xf32>
    %c0_4 = arith.constant 0 : index
    %c0_5 = arith.constant 0 : index
    %6 = vector.load %arg3[%c0_4, %c0_5] : memref<1x256xf32, #tpu.memory_space<vmem>>, vector<1x256xf32>
    %7 = vector.broadcast %6 : vector<1x256xf32> to vector<2x256xf32>
    %8 = arith.addf %5, %7 : vector<2x256xf32>
    %cst_6 = arith.constant 0.000000e+00 : f32
    %9 = vector.broadcast %cst_6 : f32 to vector<2x256xf32>
    %10 = arith.maximumf %8, %9 : vector<2x256xf32>
    %11 = arith.truncf %10 : vector<2x256xf32> to vector<2x256xbf16>
    %12 = arith.truncf %0 : vector<2x256xf32> to vector<2x256xbf16>
    %13 = tpu.concatenate %11, %12 in 1 : vector<2x256xbf16>, vector<2x256xbf16> -> vector<2x512xbf16>
    %c0_7 = arith.constant 0 : index
    %c0_8 = arith.constant 0 : index
    %14 = vector.load %arg4[%c0_7, %c0_8] : memref<512x256xbf16, #tpu.memory_space<vmem>>, vector<512x256xbf16>
    %cst_9 = arith.constant dense<0.000000e+00> : vector<2x256xf32>
    %15 = tpu.matmul %13, %14, %cst_9 {dimension_numbers = #tpu.dot_dimension_numbers<[1], [0], [0], [1], [0, 0, 1, 1], [], []>} : vector<2x512xbf16>, vector<512x256xbf16>, vector<2x256xf32> -> vector<2x256xf32>
    %c0_10 = arith.constant 0 : index
    %c0_11 = arith.constant 0 : index
    %16 = vector.load %arg5[%c0_10, %c0_11] : memref<1x256xf32, #tpu.memory_space<vmem>>, vector<1x256xf32>
    %17 = vector.broadcast %16 : vector<1x256xf32> to vector<2x256xf32>
    %18 = arith.addf %15, %17 : vector<2x256xf32>
    %19 = arith.truncf %18 : vector<2x256xf32> to vector<2x256xbf16>
    %c0_12 = arith.constant 0 : index
    %c0_13 = arith.constant 0 : index
    %20 = vector.load %arg6[%c0_12, %c0_13] : memref<256x256xbf16, #tpu.memory_space<vmem>>, vector<256x256xbf16>
    %cst_14 = arith.constant dense<0.000000e+00> : vector<2x256xf32>
    %21 = tpu.matmul %19, %20, %cst_14 {dimension_numbers = #tpu.dot_dimension_numbers<[1], [0], [0], [1], [0, 0, 1, 1], [], []>} : vector<2x256xbf16>, vector<256x256xbf16>, vector<2x256xf32> -> vector<2x256xf32>
    %c0_15 = arith.constant 0 : index
    %c0_16 = arith.constant 0 : index
    %22 = vector.load %arg7[%c0_15, %c0_16] : memref<1x256xf32, #tpu.memory_space<vmem>>, vector<1x256xf32>
    %23 = vector.broadcast %22 : vector<1x256xf32> to vector<2x256xf32>
    %24 = arith.addf %21, %23 : vector<2x256xf32>
    %cst_17 = arith.constant 0.000000e+00 : f32
    %25 = vector.broadcast %cst_17 : f32 to vector<2x256xf32>
    %26 = arith.maximumf %24, %25 : vector<2x256xf32>
    %c0_18 = arith.constant 0 : index
    %c0_19 = arith.constant 0 : index
    %27 = vector.load %arg8[%c0_18, %c0_19] : memref<1x256xf32, #tpu.memory_space<vmem>>, vector<1x256xf32>
    %28 = vector.broadcast %27 : vector<1x256xf32> to vector<2x256xf32>
    %29 = arith.mulf %26, %28 : vector<2x256xf32>
    %cst_20 = arith.constant dense<0.000000e+00> : vector<2xf32>
    %30 = vector.multi_reduction <add>, %29, %cst_20 [1] : vector<2x256xf32> to vector<2xf32>
    %31 = vector.shape_cast %30 : vector<2xf32> to vector<2x1xf32>
    %c0_21 = arith.constant 0 : index
    %c0_22 = arith.constant 0 : index
    %32 = vector.load %arg9[%c0_21, %c0_22] : memref<1x1xf32, #tpu.memory_space<vmem>>, vector<1x1xf32>
    %33 = vector.broadcast %32 : vector<1x1xf32> to vector<2x1xf32>
    %34 = arith.addf %31, %33 : vector<2x1xf32>
    %c0_23 = arith.constant 0 : index
    %c0_24 = arith.constant 0 : index
    %35 = vector.load %arg10[%c0_23, %c0_24] : memref<2x1xf32, #tpu.memory_space<vmem>>, vector<2x1xf32>
    tpu.vector_store %arg10[%c0_23, %c0_24], %34 {strides = array<i32>} : memref<2x1xf32, #tpu.memory_space<vmem>>, vector<2x1xf32>,
    return
  }
  func.func @transform_0(%arg0: i32) -> (i32, i32) {
    %c0_i32 = arith.constant 0 : i32
    %c0_i32_0 = arith.constant 0 : i32
    %c0_i32_1 = arith.constant 0 : i32
    return %c0_i32, %c0_i32_0 : i32, i32
  }
  func.func @transform_1(%arg0: i32) -> (i32, i32) {
    %c0_i32 = arith.constant 0 : i32
    %c0_i32_0 = arith.constant 0 : i32
    %c0_i32_1 = arith.constant 0 : i32
    return %c0_i32, %c0_i32_0 : i32, i32
  }
  func.func @transform_2(%arg0: i32) -> (i32, i32) {
    %c0_i32 = arith.constant 0 : i32
    %c0_i32_0 = arith.constant 0 : i32
    %c0_i32_1 = arith.constant 0 : i32
    return %c0_i32, %c0_i32_0 : i32, i32
  }
  func.func @transform_3(%arg0: i32) -> (i32, i32) {
    %c0_i32 = arith.constant 0 : i32
    %c0_i32_0 = arith.constant 0 : i32
    %c0_i32_1 = arith.constant 0 : i32
    return %c0_i32, %c0_i32_0 : i32, i32
  }
  func.func @transform_4(%arg0: i32) -> (i32, i32) {
    %c0_i32 = arith.constant 0 : i32
    %c0_i32_0 = arith.constant 0 : i32
    %c0_i32_1 = arith.constant 0 : i32
    return %c0_i32, %c0_i32_0 : i32, i32
  }
  func.func @transform_5(%arg0: i32) -> (i32, i32) {
    %c0_i32 = arith.constant 0 : i32
    %c0_i32_0 = arith.constant 0 : i32
    %c0_i32_1 = arith.constant 0 : i32
    return %c0_i32, %c0_i32_0 : i32, i32
  }
  func.func @transform_6(%arg0: i32) -> (i32, i32) {
    %c0_i32 = arith.constant 0 : i32
    %c0_i32_0 = arith.constant 0 : i32
    %c0_i32_1 = arith.constant 0 : i32
    return %c0_i32, %c0_i32_0 : i32, i32
  }
  func.func @transform_7(%arg0: i32) -> (i32, i32) {
    %c0_i32 = arith.constant 0 : i32
    %c0_i32_0 = arith.constant 0 : i32
    %c0_i32_1 = arith.constant 0 : i32
    return %c0_i32, %c0_i32_0 : i32, i32
  }
  func.func @transform_8(%arg0: i32) -> (i32, i32) {
    %c0_i32 = arith.constant 0 : i32
    %c0_i32_0 = arith.constant 0 : i32
    %c0_i32_1 = arith.constant 0 : i32
    return %c0_i32, %c0_i32_0 : i32, i32
  }
  func.func @transform_9(%arg0: i32) -> (i32, i32) {
    %c0_i32 = arith.constant 0 : i32
    %c0_i32_0 = arith.constant 0 : i32
    %c0_i32_1 = arith.constant 0 : i32
    return %c0_i32, %c0_i32_0 : i32, i32
  }
}

module attributes {stable_mosaic.version = 11 : i64} {
  func.func @_encoder_kernel(%arg0: i32, %arg1: memref<1x128x3xf32, #tpu.memory_space<vmem>>, %arg2: memref<3x128xf32, #tpu.memory_space<vmem>>, %arg3: memref<1x128xf32, #tpu.memory_space<vmem>>, %arg4: memref<128x256xbf16, #tpu.memory_space<vmem>>, %arg5: memref<1x256xf32, #tpu.memory_space<vmem>>, %arg6: memref<256x512xbf16, #tpu.memory_space<vmem>>, %arg7: memref<256x512xbf16, #tpu.memory_space<vmem>>, %arg8: memref<1x512xf32, #tpu.memory_space<vmem>>, %arg9: memref<512x256xbf16, #tpu.memory_space<vmem>>, %arg10: memref<1x256xf32, #tpu.memory_space<vmem>>, %arg11: memref<1x1x256xf32, #tpu.memory_space<vmem>>) attributes {dimension_semantics = [#tpu.dimension_semantics<parallel>], iteration_bounds = array<i64: 2>, scalar_prefetch = 0 : i64, scratch_operands = 0 : i64, tpu.core_type = #tpu.core_type<tc>, window_params = [{transform_indices = @transform_0, window_bounds = array<i64: 1, 128, 3>}, {pipeline_mode = #tpu.pipeline_mode<synchronous>, transform_indices = @transform_1, window_bounds = array<i64: 3, 128>}, {pipeline_mode = #tpu.pipeline_mode<synchronous>, transform_indices = @transform_2, window_bounds = array<i64: 1, 128>}, {pipeline_mode = #tpu.pipeline_mode<synchronous>, transform_indices = @transform_3, window_bounds = array<i64: 128, 256>}, {pipeline_mode = #tpu.pipeline_mode<synchronous>, transform_indices = @transform_4, window_bounds = array<i64: 1, 256>}, {pipeline_mode = #tpu.pipeline_mode<synchronous>, transform_indices = @transform_5, window_bounds = array<i64: 256, 512>}, {pipeline_mode = #tpu.pipeline_mode<synchronous>, transform_indices = @transform_6, window_bounds = array<i64: 256, 512>}, {pipeline_mode = #tpu.pipeline_mode<synchronous>, transform_indices = @transform_7, window_bounds = array<i64: 1, 512>}, {pipeline_mode = #tpu.pipeline_mode<synchronous>, transform_indices = @transform_8, window_bounds = array<i64: 512, 256>}, {pipeline_mode = #tpu.pipeline_mode<synchronous>, transform_indices = @transform_9, window_bounds = array<i64: 1, 256>}, {transform_indices = @transform_10, window_bounds = array<i64: 1, 1, 256>}]} {
    %c0 = arith.constant 0 : index
    %c0_0 = arith.constant 0 : index
    %c0_1 = arith.constant 0 : index
    %0 = vector.load %arg1[%c0, %c0_0, %c0_1] : memref<1x128x3xf32, #tpu.memory_space<vmem>>, vector<1x128x3xf32>
    %1 = vector.shape_cast %0 : vector<1x128x3xf32> to vector<128x3xf32>
    %c0_2 = arith.constant 0 : index
    %c0_3 = arith.constant 0 : index
    %2 = vector.load %arg2[%c0_2, %c0_3] : memref<3x128xf32, #tpu.memory_space<vmem>>, vector<3x128xf32>
    %3 = vector.extract_strided_slice %1 {offsets = [0, 0], sizes = [128, 1], strides = [1, 1]} : vector<128x3xf32> to vector<128x1xf32>
    %4 = vector.extract_strided_slice %2 {offsets = [0, 0], sizes = [1, 128], strides = [1, 1]} : vector<3x128xf32> to vector<1x128xf32>
    %5 = vector.broadcast %3 : vector<128x1xf32> to vector<128x128xf32>
    %6 = vector.broadcast %4 : vector<1x128xf32> to vector<128x128xf32>
    %7 = arith.mulf %5, %6 : vector<128x128xf32>
    %8 = vector.extract_strided_slice %1 {offsets = [0, 1], sizes = [128, 1], strides = [1, 1]} : vector<128x3xf32> to vector<128x1xf32>
    %9 = vector.extract_strided_slice %2 {offsets = [1, 0], sizes = [1, 128], strides = [1, 1]} : vector<3x128xf32> to vector<1x128xf32>
    %10 = vector.broadcast %8 : vector<128x1xf32> to vector<128x128xf32>
    %11 = vector.broadcast %9 : vector<1x128xf32> to vector<128x128xf32>
    %12 = arith.mulf %10, %11 : vector<128x128xf32>
    %13 = arith.addf %7, %12 : vector<128x128xf32>
    %14 = vector.extract_strided_slice %1 {offsets = [0, 2], sizes = [128, 1], strides = [1, 1]} : vector<128x3xf32> to vector<128x1xf32>
    %15 = vector.extract_strided_slice %2 {offsets = [2, 0], sizes = [1, 128], strides = [1, 1]} : vector<3x128xf32> to vector<1x128xf32>
    %16 = vector.broadcast %14 : vector<128x1xf32> to vector<128x128xf32>
    %17 = vector.broadcast %15 : vector<1x128xf32> to vector<128x128xf32>
    %18 = arith.mulf %16, %17 : vector<128x128xf32>
    %19 = arith.addf %13, %18 : vector<128x128xf32>
    %c0_4 = arith.constant 0 : index
    %c0_5 = arith.constant 0 : index
    %20 = vector.load %arg3[%c0_4, %c0_5] : memref<1x128xf32, #tpu.memory_space<vmem>>, vector<1x128xf32>
    %21 = vector.broadcast %20 : vector<1x128xf32> to vector<128x128xf32>
    %22 = arith.addf %19, %21 : vector<128x128xf32>
    %cst = arith.constant 0.000000e+00 : f32
    %23 = vector.broadcast %cst : f32 to vector<128x128xf32>
    %24 = arith.maximumf %22, %23 : vector<128x128xf32>
    %25 = arith.truncf %24 : vector<128x128xf32> to vector<128x128xbf16>
    %c0_6 = arith.constant 0 : index
    %c0_7 = arith.constant 0 : index
    %26 = vector.load %arg4[%c0_6, %c0_7] : memref<128x256xbf16, #tpu.memory_space<vmem>>, vector<128x256xbf16>
    %cst_8 = arith.constant dense<0.000000e+00> : vector<128x256xf32>
    %27 = tpu.matmul %25, %26, %cst_8 {dimension_numbers = #tpu.dot_dimension_numbers<[1], [0], [0], [1], [0, 0, 1, 1], [], []>} : vector<128x128xbf16>, vector<128x256xbf16>, vector<128x256xf32> -> vector<128x256xf32>
    %c0_9 = arith.constant 0 : index
    %c0_10 = arith.constant 0 : index
    %28 = vector.load %arg5[%c0_9, %c0_10] : memref<1x256xf32, #tpu.memory_space<vmem>>, vector<1x256xf32>
    %29 = vector.broadcast %28 : vector<1x256xf32> to vector<128x256xf32>
    %30 = arith.addf %27, %29 : vector<128x256xf32>
    %31 = vector.shape_cast %30 : vector<128x256xf32> to vector<1x128x256xf32>
    %cst_11 = arith.constant dense<0xFF800000> : vector<1x256xf32>
    %32 = vector.multi_reduction <maximumf>, %31, %cst_11 [1] : vector<1x128x256xf32> to vector<1x256xf32>
    %33 = arith.truncf %32 : vector<1x256xf32> to vector<1x256xbf16>
    %c0_12 = arith.constant 0 : index
    %c0_13 = arith.constant 0 : index
    %34 = vector.load %arg6[%c0_12, %c0_13] : memref<256x512xbf16, #tpu.memory_space<vmem>>, vector<256x512xbf16>
    %cst_14 = arith.constant dense<0.000000e+00> : vector<1x512xf32>
    %35 = tpu.matmul %33, %34, %cst_14 {dimension_numbers = #tpu.dot_dimension_numbers<[1], [0], [0], [1], [0, 0, 1, 1], [], []>} : vector<1x256xbf16>, vector<256x512xbf16>, vector<1x512xf32> -> vector<1x512xf32>
    %36 = arith.truncf %30 : vector<128x256xf32> to vector<128x256xbf16>
    %c0_15 = arith.constant 0 : index
    %c0_16 = arith.constant 0 : index
    %37 = vector.load %arg7[%c0_15, %c0_16] : memref<256x512xbf16, #tpu.memory_space<vmem>>, vector<256x512xbf16>
    %cst_17 = arith.constant dense<0.000000e+00> : vector<128x512xf32>
    %38 = tpu.matmul %36, %37, %cst_17 {dimension_numbers = #tpu.dot_dimension_numbers<[1], [0], [0], [1], [0, 0, 1, 1], [], []>} : vector<128x256xbf16>, vector<256x512xbf16>, vector<128x512xf32> -> vector<128x512xf32>
    %39 = vector.shape_cast %38 : vector<128x512xf32> to vector<1x128x512xf32>
    %40 = vector.shape_cast %35 : vector<1x512xf32> to vector<1x1x512xf32>
    %41 = vector.broadcast %40 : vector<1x1x512xf32> to vector<1x128x512xf32>
    %42 = arith.addf %39, %41 : vector<1x128x512xf32>
    %c0_18 = arith.constant 0 : index
    %c0_19 = arith.constant 0 : index
    %43 = vector.load %arg8[%c0_18, %c0_19] : memref<1x512xf32, #tpu.memory_space<vmem>>, vector<1x512xf32>
    %44 = vector.shape_cast %43 : vector<1x512xf32> to vector<1x1x512xf32>
    %45 = vector.broadcast %44 : vector<1x1x512xf32> to vector<1x128x512xf32>
    %46 = arith.addf %42, %45 : vector<1x128x512xf32>
    %cst_20 = arith.constant 0.000000e+00 : f32
    %47 = vector.broadcast %cst_20 : f32 to vector<1x128x512xf32>
    %48 = arith.maximumf %46, %47 : vector<1x128x512xf32>
    %49 = vector.shape_cast %48 : vector<1x128x512xf32> to vector<128x512xf32>
    %50 = arith.truncf %49 : vector<128x512xf32> to vector<128x512xbf16>
    %c0_21 = arith.constant 0 : index
    %c0_22 = arith.constant 0 : index
    %51 = vector.load %arg9[%c0_21, %c0_22] : memref<512x256xbf16, #tpu.memory_space<vmem>>, vector<512x256xbf16>
    %cst_23 = arith.constant dense<0.000000e+00> : vector<128x256xf32>
    %52 = tpu.matmul %50, %51, %cst_23 {dimension_numbers = #tpu.dot_dimension_numbers<[1], [0], [0], [1], [0, 0, 1, 1], [], []>} : vector<128x512xbf16>, vector<512x256xbf16>, vector<128x256xf32> -> vector<128x256xf32>
    %c0_24 = arith.constant 0 : index
    %c0_25 = arith.constant 0 : index
    %53 = vector.load %arg10[%c0_24, %c0_25] : memref<1x256xf32, #tpu.memory_space<vmem>>, vector<1x256xf32>
    %54 = vector.broadcast %53 : vector<1x256xf32> to vector<128x256xf32>
    %55 = arith.addf %52, %54 : vector<128x256xf32>
    %56 = vector.shape_cast %55 : vector<128x256xf32> to vector<1x128x256xf32>
    %cst_26 = arith.constant dense<0xFF800000> : vector<1x256xf32>
    %57 = vector.multi_reduction <maximumf>, %56, %cst_26 [1] : vector<1x128x256xf32> to vector<1x256xf32>
    %c0_27 = arith.constant 0 : index
    %c0_28 = arith.constant 0 : index
    %c0_29 = arith.constant 0 : index
    %58 = vector.load %arg11[%c0_27, %c0_28, %c0_29] : memref<1x1x256xf32, #tpu.memory_space<vmem>>, vector<1x1x256xf32>
    %59 = vector.shape_cast %58 : vector<1x1x256xf32> to vector<1x256xf32>
    %60 = vector.shape_cast %57 : vector<1x256xf32> to vector<1x1x256xf32>
    tpu.vector_store %arg11[%c0_27, %c0_28, %c0_29], %60 {strides = array<i32>} : memref<1x1x256xf32, #tpu.memory_space<vmem>>, vector<1x1x256xf32>,
    return
  }
  func.func @transform_0(%arg0: i32) -> (i32, i32, i32) {
    %c0_i32 = arith.constant 0 : i32
    %c0_i32_0 = arith.constant 0 : i32
    %c0_i32_1 = arith.constant 0 : i32
    return %arg0, %c0_i32, %c0_i32_0 : i32, i32, i32
  }
  func.func @transform_1(%arg0: i32) -> (i32, i32) {
    %c0_i32 = arith.constant 0 : i32
    %c0_i32_0 = arith.constant 0 : i32
    %c0_i32_1 = arith.constant 0 : i32
    return %c0_i32, %c0_i32_0 : i32, i32
  }
  func.func @transform_2(%arg0: i32) -> (i32, i32) {
    %c0_i32 = arith.constant 0 : i32
    %c0_i32_0 = arith.constant 0 : i32
    %c0_i32_1 = arith.constant 0 : i32
    return %c0_i32, %c0_i32_0 : i32, i32
  }
  func.func @transform_3(%arg0: i32) -> (i32, i32) {
    %c0_i32 = arith.constant 0 : i32
    %c0_i32_0 = arith.constant 0 : i32
    %c0_i32_1 = arith.constant 0 : i32
    return %c0_i32, %c0_i32_0 : i32, i32
  }
  func.func @transform_4(%arg0: i32) -> (i32, i32) {
    %c0_i32 = arith.constant 0 : i32
    %c0_i32_0 = arith.constant 0 : i32
    %c0_i32_1 = arith.constant 0 : i32
    return %c0_i32, %c0_i32_0 : i32, i32
  }
  func.func @transform_5(%arg0: i32) -> (i32, i32) {
    %c0_i32 = arith.constant 0 : i32
    %c0_i32_0 = arith.constant 0 : i32
    %c0_i32_1 = arith.constant 0 : i32
    return %c0_i32, %c0_i32_0 : i32, i32
  }
  func.func @transform_6(%arg0: i32) -> (i32, i32) {
    %c0_i32 = arith.constant 0 : i32
    %c0_i32_0 = arith.constant 0 : i32
    %c0_i32_1 = arith.constant 0 : i32
    return %c0_i32, %c0_i32_0 : i32, i32
  }
  func.func @transform_7(%arg0: i32) -> (i32, i32) {
    %c0_i32 = arith.constant 0 : i32
    %c0_i32_0 = arith.constant 0 : i32
    %c0_i32_1 = arith.constant 0 : i32
    return %c0_i32, %c0_i32_0 : i32, i32
  }
  func.func @transform_8(%arg0: i32) -> (i32, i32) {
    %c0_i32 = arith.constant 0 : i32
    %c0_i32_0 = arith.constant 0 : i32
    %c0_i32_1 = arith.constant 0 : i32
    return %c0_i32, %c0_i32_0 : i32, i32
  }
  func.func @transform_9(%arg0: i32) -> (i32, i32) {
    %c0_i32 = arith.constant 0 : i32
    %c0_i32_0 = arith.constant 0 : i32
    %c0_i32_1 = arith.constant 0 : i32
    return %c0_i32, %c0_i32_0 : i32, i32
  }
  func.func @transform_10(%arg0: i32) -> (i32, i32, i32) {
    %c0_i32 = arith.constant 0 : i32
    %c0_i32_0 = arith.constant 0 : i32
    %c0_i32_1 = arith.constant 0 : i32
    return %arg0, %c0_i32, %c0_i32_0 : i32, i32, i32
  }
}

</mosaic_0001>

<llo_original>
// kernel: predictor_forward.3
$region0: #{predictor_forward.3}
  #allocation0 [shape = 'u32[]', space=smem, size = 0x4, offset = 0x4, fixed_abs, tag = 'smem constant byte address 0x4 - core index']
  #allocation1 [shape = 'u32[144,128]{1,0:T(1,128)}', space=vmem, size = 0x12000, scoped, tag = 'internal scratch']
  #allocation2 [shape = 'f32[1,1]{1,0:T(1,128)S(1)}', space=vmem, size = 0x200, scoped, tag = 'scoped memory for predictor_forward.3']
  %s0 = inlined_call_operand.vmem [shape: f32[2,256], index: 0, kind: input, shape index: {}]
  %s1 = inlined_call_operand.vmem [shape: bf16[256,256], index: 1, kind: input, shape index: {}]
  %s2 = inlined_call_operand.vmem [shape: f32[1,256], index: 2, kind: input, shape index: {}]
  %s3 = inlined_call_operand.vmem [shape: bf16[512,256], index: 3, kind: input, shape index: {}]
  %s4 = inlined_call_operand.vmem [shape: f32[1,256], index: 4, kind: input, shape index: {}]
  %s5 = inlined_call_operand.vmem [shape: bf16[256,256], index: 5, kind: input, shape index: {}]
  %s6 = inlined_call_operand.vmem [shape: f32[1,256], index: 6, kind: input, shape index: {}]
  %s7 = inlined_call_operand.vmem [shape: f32[1,256], index: 7, kind: input, shape index: {}]
  %s8 = inlined_call_operand.<no memory space> [shape: f32[1,1], index: 8, kind: input, shape index: {}]
  %s9 = inlined_call_operand.vmem [shape: f32[2,1], index: 9, kind: output, shape index: {}]
  %s10 = sld [smem:[#allocation0]]
  $region46: #{predictor_forward.3} parent=0
    _
  %s12 = ssub.s32 1, %s10
  %s13 = scalar_select 0, %s12, %s10
  %v14 = vstv %s8
  %15 = vst [vmem:[#allocation2] sm:$0x1] %v14
  // Predicated region
  $region2: #{predictor_forward.3} parent=0 // pred_check
    _
  $region3: #{predictor_forward.3} parent=0 // pred_check_branch
    %17 = sbr.rel (0) target = $region5
  $region4: #{predictor_forward.3} parent=0 // pred_region
    _
  $region5: #{predictor_forward.3} parent=0 // pred_fallthru
    _
  // Predicated region
  $region6: #{predictor_forward.3} parent=0 // pred_check
    _
  $region7: #{predictor_forward.3} parent=0 // pred_check_branch
    %19 = sbr.rel (0) target = $region9
  $region8: #{predictor_forward.3} parent=0 // pred_region
    _
  $region9: #{predictor_forward.3} parent=0 // pred_fallthru
    _
  // Predicated region
  $region10: #{predictor_forward.3} parent=0 // pred_check
    _
  $region11: #{predictor_forward.3} parent=0 // pred_check_branch
    %21 = sbr.rel (0) target = $region13
  $region12: #{predictor_forward.3} parent=0 // pred_region
    _
  $region13: #{predictor_forward.3} parent=0 // pred_fallthru
    _
  // Predicated region
  $region14: #{predictor_forward.3} parent=0 // pred_check
    _
  $region15: #{predictor_forward.3} parent=0 // pred_check_branch
    %23 = sbr.rel (0) target = $region17
  $region16: #{predictor_forward.3} parent=0 // pred_region
    _
  $region17: #{predictor_forward.3} parent=0 // pred_fallthru
    _
  // Predicated region
  $region18: #{predictor_forward.3} parent=0 // pred_check
    _
  $region19: #{predictor_forward.3} parent=0 // pred_check_branch
    %25 = sbr.rel (0) target = $region21
  $region20: #{predictor_forward.3} parent=0 // pred_region
    _
  $region21: #{predictor_forward.3} parent=0 // pred_fallthru
    _
  // Predicated region
  $region22: #{predictor_forward.3} parent=0 // pred_check
    _
  $region23: #{predictor_forward.3} parent=0 // pred_check_branch
    %27 = sbr.rel (0) target = $region25
  $region24: #{predictor_forward.3} parent=0 // pred_region
    _
  $region25: #{predictor_forward.3} parent=0 // pred_fallthru
    _
  // Predicated region
  $region26: #{predictor_forward.3} parent=0 // pred_check
    _
  $region27: #{predictor_forward.3} parent=0 // pred_check_branch
    %29 = sbr.rel (0) target = $region29
  $region28: #{predictor_forward.3} parent=0 // pred_region
    _
  $region29: #{predictor_forward.3} parent=0 // pred_fallthru
    _
  // Predicated region
  $region30: #{predictor_forward.3} parent=0 // pred_check
    _
  $region31: #{predictor_forward.3} parent=0 // pred_check_branch
    %31 = sbr.rel (0) target = $region33
  $region32: #{predictor_forward.3} parent=0 // pred_region
    _
  $region33: #{predictor_forward.3} parent=0 // pred_fallthru
    _
  // Predicated region
  $region34: #{predictor_forward.3} parent=0 // pred_check
    _
  $region35: #{predictor_forward.3} parent=0 // pred_check_branch
    %33 = sbr.rel (0) target = $region37
  $region36: #{predictor_forward.3} parent=0 // pred_region
    _
  $region37: #{predictor_forward.3} parent=0 // pred_fallthru
    _
  %v34 = vld [vmem:[%s0] sm:$0xf]
  %v35 = vmax.f32 %v34, 0.0
  %v38 = vunpack.c.l.s4 1983009808
  %v39 = vunpack.c.0.s8 %v38
  %v40 = vlaneseq
  %v41 = vshrl.u32 %v40, 7
  %v42 = vsub.s32 %v39, %v41
  %v43 = vrot.slane %v35, %v42
  %v44 = vcombine.high %v43, %v43
  %v47 = vpack.c.bf16 %v43, %v43
  %v48 = vpack.c.bf16 %v44, %v44
  %v49 = vld [vmem:[%s1] sm:$0xff]
  %v50 = vld [vmem:[%s1 + $0x8] sm:$0xff]
  %v51 = vld [vmem:[%s1 + $0x10] sm:$0xff]
  %v52 = vld [vmem:[%s1 + $0x18] sm:$0xff]
  %v53 = vld [vmem:[%s1 + $0x20] sm:$0xff]
  %v54 = vld [vmem:[%s1 + $0x28] sm:$0xff]
  %v55 = vld [vmem:[%s1 + $0x30] sm:$0xff]
  %v56 = vld [vmem:[%s1 + $0x38] sm:$0xff]
  %v57 = vld [vmem:[%s1 + $0x40] sm:$0xff]
  %v58 = vld [vmem:[%s1 + $0x48] sm:$0xff]
  %v59 = vld [vmem:[%s1 + $0x50] sm:$0xff]
  %v60 = vld [vmem:[%s1 + $0x58] sm:$0xff]
  %v61 = vld [vmem:[%s1 + $0x60] sm:$0xff]
  %v62 = vld [vmem:[%s1 + $0x68] sm:$0xff]
  %v63 = vld [vmem:[%s1 + $0x70] sm:$0xff]
  %v64 = vld [vmem:[%s1 + $0x78] sm:$0xff]
  %v65 = vld [vmem:[%s1 + $0x80] sm:$0xff]
  %v66 = vld [vmem:[%s1 + $0x88] sm:$0xff]
  %v67 = vld [vmem:[%s1 + $0x90] sm:$0xff]
  %v68 = vld [vmem:[%s1 + $0x98] sm:$0xff]
  %v69 = vld [vmem:[%s1 + $0xa0] sm:$0xff]
  %v70 = vld [vmem:[%s1 + $0xa8] sm:$0xff]
  %v71 = vld [vmem:[%s1 + $0xb0] sm:$0xff]
  %v72 = vld [vmem:[%s1 + $0xb8] sm:$0xff]
  %v73 = vld [vmem:[%s1 + $0xc0] sm:$0xff]
  %v74 = vld [vmem:[%s1 + $0xc8] sm:$0xff]
  %v75 = vld [vmem:[%s1 + $0xd0] sm:$0xff]
  %v76 = vld [vmem:[%s1 + $0xd8] sm:$0xff]
  %v77 = vld [vmem:[%s1 + $0xe0] sm:$0xff]
  %v78 = vld [vmem:[%s1 + $0xe8] sm:$0xff]
  %v79 = vld [vmem:[%s1 + $0xf0] sm:$0xff]
  %v80 = vld [vmem:[%s1 + $0xf8] sm:$0xff]
  %v81 = vld [vmem:[%s2] sm:$0x3]
  %v83 = vlaneseq
  %v84 = vshrl.u32 %v83, 7
  %v85 = vsub.s32 0, %v84
  %v86 = vrot.slane %v81, %v85
  %v87 = vlaneseq
  %v88 = vshrl.u32 %v87, 7
  %v89 = vsub.s32 1, %v88
  %v90 = vrot.slane %v81, %v89
  %v125 = vunpack.c.l.b16 %v49
  %v126 = vunpack.c.h.b16 %v49
  %v127 = vunpack.c.l.b16 %v50
  %v128 = vunpack.c.h.b16 %v50
  %v129 = vunpack.c.l.b16 %v51
  %v130 = vunpack.c.h.b16 %v51
  %v131 = vunpack.c.l.b16 %v52
  %v132 = vunpack.c.h.b16 %v52
  %v133 = vunpack.c.l.b16 %v53
  %v134 = vunpack.c.h.b16 %v53
  %v135 = vunpack.c.l.b16 %v54
  %v136 = vunpack.c.h.b16 %v54
  %v137 = vunpack.c.l.b16 %v55
  %v138 = vunpack.c.h.b16 %v55
  %v139 = vunpack.c.l.b16 %v56
  %v140 = vunpack.c.h.b16 %v56
  %v141 = vunpack.c.l.b16 %v57
  %v142 = vunpack.c.h.b16 %v57
  %v143 = vunpack.c.l.b16 %v58
  %v144 = vunpack.c.h.b16 %v58
  %v145 = vunpack.c.l.b16 %v59
  %v146 = vunpack.c.h.b16 %v59
  %v147 = vunpack.c.l.b16 %v60
  %v148 = vunpack.c.h.b16 %v60
  %v149 = vunpack.c.l.b16 %v61
  %v150 = vunpack.c.h.b16 %v61
  %v151 = vunpack.c.l.b16 %v62
  %v152 = vunpack.c.h.b16 %v62
  %v153 = vunpack.c.l.b16 %v63
  %v154 = vunpack.c.h.b16 %v63
  %v155 = vunpack.c.l.b16 %v64
  %v156 = vunpack.c.h.b16 %v64
  %v157 = vunpack.c.l.b16 %v65
  %v158 = vunpack.c.h.b16 %v65
  %v159 = vunpack.c.l.b16 %v66
  %v160 = vunpack.c.h.b16 %v66
  %v161 = vunpack.c.l.b16 %v67
  %v162 = vunpack.c.h.b16 %v67
  %v163 = vunpack.c.l.b16 %v68
  %v164 = vunpack.c.h.b16 %v68
  %v165 = vunpack.c.l.b16 %v69
  %v166 = vunpack.c.h.b16 %v69
  %v167 = vunpack.c.l.b16 %v70
  %v168 = vunpack.c.h.b16 %v70
  %v169 = vunpack.c.l.b16 %v71
  %v170 = vunpack.c.h.b16 %v71
  %v171 = vunpack.c.l.b16 %v72
  %v172 = vunpack.c.h.b16 %v72
  %v173 = vunpack.c.l.b16 %v73
  %v174 = vunpack.c.h.b16 %v73
  %v175 = vunpack.c.l.b16 %v74
  %v176 = vunpack.c.h.b16 %v74
  %v177 = vunpack.c.l.b16 %v75
  %v178 = vunpack.c.h.b16 %v75
  %v179 = vunpack.c.l.b16 %v76
  %v180 = vunpack.c.h.b16 %v76
  %v181 = vunpack.c.l.b16 %v77
  %v182 = vunpack.c.h.b16 %v77
  %v183 = vunpack.c.l.b16 %v78
  %v184 = vunpack.c.h.b16 %v78
  %v185 = vunpack.c.l.b16 %v79
  %v186 = vunpack.c.h.b16 %v79
  %v187 = vunpack.c.l.b16 %v80
  %v188 = vunpack.c.h.b16 %v80
  %v189 = vpack.c.b16 %v127, %v125
  %v190 = vpack.c.b16 %v128, %v126
  %v191 = vpack.c.b16 %v131, %v129
  %v192 = vpack.c.b16 %v132, %v130
  %v193 = vpack.c.b16 %v135, %v133
  %v194 = vpack.c.b16 %v136, %v134
  %v195 = vpack.c.b16 %v139, %v137
  %v196 = vpack.c.b16 %v140, %v138
  %v197 = vpack.c.b16 %v143, %v141
  %v198 = vpack.c.b16 %v144, %v142
  %v199 = vpack.c.b16 %v147, %v145
  %v200 = vpack.c.b16 %v148, %v146
  %v201 = vpack.c.b16 %v151, %v149
  %v202 = vpack.c.b16 %v152, %v150
  %v203 = vpack.c.b16 %v155, %v153
  %v204 = vpack.c.b16 %v156, %v154
  %v205 = vpack.c.b16 %v159, %v157
  %v206 = vpack.c.b16 %v160, %v158
  %v207 = vpack.c.b16 %v163, %v161
  %v208 = vpack.c.b16 %v164, %v162
  %v209 = vpack.c.b16 %v167, %v165
  %v210 = vpack.c.b16 %v168, %v166
  %v211 = vpack.c.b16 %v171, %v169
  %v212 = vpack.c.b16 %v172, %v170
  %v213 = vpack.c.b16 %v175, %v173
  %v214 = vpack.c.b16 %v176, %v174
  %v215 = vpack.c.b16 %v179, %v177
  %v216 = vpack.c.b16 %v180, %v178
  %v217 = vpack.c.b16 %v183, %v181
  %v218 = vpack.c.b16 %v184, %v182
  %v219 = vpack.c.b16 %v187, %v185
  %v220 = vpack.c.b16 %v188, %v186
  %253 = vmatprep.subr.bf16.mxu0 %v190
  %254 = vmatpush1.bf16.msra.mxu0 %v189
  %255 = vmatprep.subr.bf16.mxu0 %v192
  %256 = vmatpush1.bf16.msra.mxu0 %v191
  %257 = vmatprep.subr.bf16.mxu0 %v194
  %258 = vmatpush1.bf16.msra.mxu0 %v193
  %259 = vmatprep.subr.bf16.mxu0 %v196
  %260 = vmatpush1.bf16.msra.mxu0 %v195
  %261 = vmatprep.subr.bf16.mxu0 %v198
  %262 = vmatpush1.bf16.msra.mxu0 %v197
  %263 = vmatprep.subr.bf16.mxu0 %v200
  %264 = vmatpush1.bf16.msra.mxu0 %v199
  %265 = vmatprep.subr.bf16.mxu0 %v202
  %266 = vmatpush1.bf16.msra.mxu0 %v201
  %267 = vmatprep.subr.bf16.mxu0 %v204
  %268 = vmatpush1.bf16.msra.mxu0 %v203
  %269 = vmatprep.subr.bf16.mxu0 %v206
  %270 = vmatpush1.bf16.msra.mxu0 %v205
  %271 = vmatprep.subr.bf16.mxu0 %v208
  %272 = vmatpush1.bf16.msra.mxu0 %v207
  %273 = vmatprep.subr.bf16.mxu0 %v210
  %274 = vmatpush1.bf16.msra.mxu0 %v209
  %275 = vmatprep.subr.bf16.mxu0 %v212
  %276 = vmatpush1.bf16.msra.mxu0 %v211
  %277 = vmatprep.subr.bf16.mxu0 %v214
  %278 = vmatpush1.bf16.msra.mxu0 %v213
  %279 = vmatprep.subr.bf16.mxu0 %v216
  %280 = vmatpush1.bf16.msra.mxu0 %v215
  %281 = vmatprep.subr.bf16.mxu0 %v218
  %282 = vmatpush1.bf16.msra.mxu0 %v217
  %283 = vmatprep.subr.bf16.mxu0 %v220
  %284 = vmatpush1.bf16.msra.mxu0 %v219
  %285 = vmatprep.mubr.bf16.mxu0 %v48
  %286 = vmatmul.mubr.bf16.gmra.mrb[0].mxu0 %v47
  %v287 = vpop.f32.mrb[0].mxu0
  %v288 = vadd.f32 %v86, %v287
  %v289 = vpop.f32.mrb[0].mxu0
  %v290 = vadd.f32 %v90, %v289
  %v291 = vpop.f32.mrb[0].mxu0
  %v292 = vpop.f32.mrb[0].mxu0
  %293 = vdwg.mxu0
  %v294 = vmax.f32 %v288, 0.0
  %v295 = vmax.f32 %v290, 0.0
  %v296 = vpack.c.bf16 %v294, %v294
  %v297 = vpack.c.bf16 %v295, %v295
  %v300 = vunpack.c.l.s4 1983009808
  %v301 = vunpack.c.0.s8 %v300
  %v302 = vlaneseq
  %v303 = vshrl.u32 %v302, 7
  %v304 = vsub.s32 %v301, %v303
  %v305 = vrot.slane %v34, %v304
  %v306 = vcombine.high %v305, %v305
  %v309 = vpack.c.bf16 %v305, %v305
  %v310 = vpack.c.bf16 %v306, %v306
  %v311 = vld [vmem:[%s3] sm:$0xff]
  %v312 = vld [vmem:[%s3 + $0x8] sm:$0xff]
  %v313 = vld [vmem:[%s3 + $0x10] sm:$0xff]
  %v314 = vld [vmem:[%s3 + $0x18] sm:$0xff]
  %v315 = vld [vmem:[%s3 + $0x20] sm:$0xff]
  %v316 = vld [vmem:[%s3 + $0x28] sm:$0xff]
  %v317 = vld [vmem:[%s3 + $0x30] sm:$0xff]
  %v318 = vld [vmem:[%s3 + $0x38] sm:$0xff]
  %v319 = vld [vmem:[%s3 + $0x40] sm:$0xff]
  %v320 = vld [vmem:[%s3 + $0x48] sm:$0xff]
  %v321 = vld [vmem:[%s3 + $0x50] sm:$0xff]
  %v322 = vld [vmem:[%s3 + $0x58] sm:$0xff]
  %v323 = vld [vmem:[%s3 + $0x60] sm:$0xff]
  %v324 = vld [vmem:[%s3 + $0x68] sm:$0xff]
  %v325 = vld [vmem:[%s3 + $0x70] sm:$0xff]
  %v326 = vld [vmem:[%s3 + $0x78] sm:$0xff]
  %v327 = vld [vmem:[%s3 + $0x80] sm:$0xff]
  %v328 = vld [vmem:[%s3 + $0x88] sm:$0xff]
  %v329 = vld [vmem:[%s3 + $0x90] sm:$0xff]
  %v330 = vld [vmem:[%s3 + $0x98] sm:$0xff]
  %v331 = vld [vmem:[%s3 + $0xa0] sm:$0xff]
  %v332 = vld [vmem:[%s3 + $0xa8] sm:$0xff]
  %v333 = vld [vmem:[%s3 + $0xb0] sm:$0xff]
  %v334 = vld [vmem:[%s3 + $0xb8] sm:$0xff]
  %v335 = vld [vmem:[%s3 + $0xc0] sm:$0xff]
  %v336 = vld [vmem:[%s3 + $0xc8] sm:$0xff]
  %v337 = vld [vmem:[%s3 + $0xd0] sm:$0xff]
  %v338 = vld [vmem:[%s3 + $0xd8] sm:$0xff]
  %v339 = vld [vmem:[%s3 + $0xe0] sm:$0xff]
  %v340 = vld [vmem:[%s3 + $0xe8] sm:$0xff]
  %v341 = vld [vmem:[%s3 + $0xf0] sm:$0xff]
  %v342 = vld [vmem:[%s3 + $0xf8] sm:$0xff]
  %v343 = vld [vmem:[%s3 + $0x100] sm:$0xff]
  %v344 = vld [vmem:[%s3 + $0x108] sm:$0xff]
  %v345 = vld [vmem:[%s3 + $0x110] sm:$0xff]
  %v346 = vld [vmem:[%s3 + $0x118] sm:$0xff]
  %v347 = vld [vmem:[%s3 + $0x120] sm:$0xff]
  %v348 = vld [vmem:[%s3 + $0x128] sm:$0xff]
  %v349 = vld [vmem:[%s3 + $0x130] sm:$0xff]
  %v350 = vld [vmem:[%s3 + $0x138] sm:$0xff]
  %v351 = vld [vmem:[%s3 + $0x140] sm:$0xff]
  %v352 = vld [vmem:[%s3 + $0x148] sm:$0xff]
  %v353 = vld [vmem:[%s3 + $0x150] sm:$0xff]
  %v354 = vld [vmem:[%s3 + $0x158] sm:$0xff]
  %v355 = vld [vmem:[%s3 + $0x160] sm:$0xff]
  %v356 = vld [vmem:[%s3 + $0x168] sm:$0xff]
  %v357 = vld [vmem:[%s3 + $0x170] sm:$0xff]
  %v358 = vld [vmem:[%s3 + $0x178] sm:$0xff]
  %v359 = vld [vmem:[%s3 + $0x180] sm:$0xff]
  %v360 = vld [vmem:[%s3 + $0x188] sm:$0xff]
  %v361 = vld [vmem:[%s3 + $0x190] sm:$0xff]
  %v362 = vld [vmem:[%s3 + $0x198] sm:$0xff]
  %v363 = vld [vmem:[%s3 + $0x1a0] sm:$0xff]
  %v364 = vld [vmem:[%s3 + $0x1a8] sm:$0xff]
  %v365 = vld [vmem:[%s3 + $0x1b0] sm:$0xff]
  %v366 = vld [vmem:[%s3 + $0x1b8] sm:$0xff]
  %v367 = vld [vmem:[%s3 + $0x1c0] sm:$0xff]
  %v368 = vld [vmem:[%s3 + $0x1c8] sm:$0xff]
  %v369 = vld [vmem:[%s3 + $0x1d0] sm:$0xff]
  %v370 = vld [vmem:[%s3 + $0x1d8] sm:$0xff]
  %v371 = vld [vmem:[%s3 + $0x1e0] sm:$0xff]
  %v372 = vld [vmem:[%s3 + $0x1e8] sm:$0xff]
  %v373 = vld [vmem:[%s3 + $0x1f0] sm:$0xff]
  %v374 = vld [vmem:[%s3 + $0x1f8] sm:$0xff]
  %v375 = vld [vmem:[%s4] sm:$0x3]
  %v377 = vlaneseq
  %v378 = vshrl.u32 %v377, 7
  %v379 = vsub.s32 0, %v378
  %v380 = vrot.slane %v375, %v379
  %v381 = vlaneseq
  %v382 = vshrl.u32 %v381, 7
  %v383 = vsub.s32 1, %v382
  %v384 = vrot.slane %v375, %v383
  %v451 = vunpack.c.l.b16 %v311
  %v452 = vunpack.c.h.b16 %v311
  %v453 = vunpack.c.l.b16 %v312
  %v454 = vunpack.c.h.b16 %v312
  %v455 = vunpack.c.l.b16 %v313
  %v456 = vunpack.c.h.b16 %v313
  %v457 = vunpack.c.l.b16 %v314
  %v458 = vunpack.c.h.b16 %v314
  %v459 = vunpack.c.l.b16 %v315
  %v460 = vunpack.c.h.b16 %v315
  %v461 = vunpack.c.l.b16 %v316
  %v462 = vunpack.c.h.b16 %v316
  %v463 = vunpack.c.l.b16 %v317
  %v464 = vunpack.c.h.b16 %v317
  %v465 = vunpack.c.l.b16 %v318
  %v466 = vunpack.c.h.b16 %v318
  %v467 = vunpack.c.l.b16 %v319
  %v468 = vunpack.c.h.b16 %v319
  %v469 = vunpack.c.l.b16 %v320
  %v470 = vunpack.c.h.b16 %v320
  %v471 = vunpack.c.l.b16 %v321
  %v472 = vunpack.c.h.b16 %v321
  %v473 = vunpack.c.l.b16 %v322
  %v474 = vunpack.c.h.b16 %v322
  %v475 = vunpack.c.l.b16 %v323
  %v476 = vunpack.c.h.b16 %v323
  %v477 = vunpack.c.l.b16 %v324
  %v478 = vunpack.c.h.b16 %v324
  %v479 = vunpack.c.l.b16 %v325
  %v480 = vunpack.c.h.b16 %v325
  %v481 = vunpack.c.l.b16 %v326
  %v482 = vunpack.c.h.b16 %v326
  %v483 = vunpack.c.l.b16 %v327
  %v484 = vunpack.c.h.b16 %v327
  %v485 = vunpack.c.l.b16 %v328
  %v486 = vunpack.c.h.b16 %v328
  %v487 = vunpack.c.l.b16 %v329
  %v488 = vunpack.c.h.b16 %v329
  %v489 = vunpack.c.l.b16 %v330
  %v490 = vunpack.c.h.b16 %v330
  %v491 = vunpack.c.l.b16 %v331
  %v492 = vunpack.c.h.b16 %v331
  %v493 = vunpack.c.l.b16 %v332
  %v494 = vunpack.c.h.b16 %v332
  %v495 = vunpack.c.l.b16 %v333
  %v496 = vunpack.c.h.b16 %v333
  %v497 = vunpack.c.l.b16 %v334
  %v498 = vunpack.c.h.b16 %v334
  %v499 = vunpack.c.l.b16 %v335
  %v500 = vunpack.c.h.b16 %v335
  %v501 = vunpack.c.l.b16 %v336
  %v502 = vunpack.c.h.b16 %v336
  %v503 = vunpack.c.l.b16 %v337
  %v504 = vunpack.c.h.b16 %v337
  %v505 = vunpack.c.l.b16 %v338
  %v506 = vunpack.c.h.b16 %v338
  %v507 = vunpack.c.l.b16 %v339
  %v508 = vunpack.c.h.b16 %v339
  %v509 = vunpack.c.l.b16 %v340
  %v510 = vunpack.c.h.b16 %v340
  %v511 = vunpack.c.l.b16 %v341
  %v512 = vunpack.c.h.b16 %v341
  %v513 = vunpack.c.l.b16 %v342
  %v514 = vunpack.c.h.b16 %v342
  %v515 = vunpack.c.l.b16 %v343
  %v516 = vunpack.c.h.b16 %v343
  %v517 = vunpack.c.l.b16 %v344
  %v518 = vunpack.c.h.b16 %v344
  %v519 = vunpack.c.l.b16 %v345
  %v520 = vunpack.c.h.b16 %v345
  %v521 = vunpack.c.l.b16 %v346
  %v522 = vunpack.c.h.b16 %v346
  %v523 = vunpack.c.l.b16 %v347
  %v524 = vunpack.c.h.b16 %v347
  %v525 = vunpack.c.l.b16 %v348
  %v526 = vunpack.c.h.b16 %v348
  %v527 = vunpack.c.l.b16 %v349
  %v528 = vunpack.c.h.b16 %v349
  %v529 = vunpack.c.l.b16 %v350
  %v530 = vunpack.c.h.b16 %v350
  %v531 = vunpack.c.l.b16 %v351
  %v532 = vunpack.c.h.b16 %v351
  %v533 = vunpack.c.l.b16 %v352
  %v534 = vunpack.c.h.b16 %v352
  %v535 = vunpack.c.l.b16 %v353
  %v536 = vunpack.c.h.b16 %v353
  %v537 = vunpack.c.l.b16 %v354
  %v538 = vunpack.c.h.b16 %v354
  %v539 = vunpack.c.l.b16 %v355
  %v540 = vunpack.c.h.b16 %v355
  %v541 = vunpack.c.l.b16 %v356
  %v542 = vunpack.c.h.b16 %v356
  %v543 = vunpack.c.l.b16 %v357
  %v544 = vunpack.c.h.b16 %v357
  %v545 = vunpack.c.l.b16 %v358
  %v546 = vunpack.c.h.b16 %v358
  %v547 = vunpack.c.l.b16 %v359
  %v548 = vunpack.c.h.b16 %v359
  %v549 = vunpack.c.l.b16 %v360
  %v550 = vunpack.c.h.b16 %v360
  %v551 = vunpack.c.l.b16 %v361
  %v552 = vunpack.c.h.b16 %v361
  %v553 = vunpack.c.l.b16 %v362
  %v554 = vunpack.c.h.b16 %v362
  %v555 = vunpack.c.l.b16 %v363
  %v556 = vunpack.c.h.b16 %v363
  %v557 = vunpack.c.l.b16 %v364
  %v558 = vunpack.c.h.b16 %v364
  %v559 = vunpack.c.l.b16 %v365
  %v560 = vunpack.c.h.b16 %v365
  %v561 = vunpack.c.l.b16 %v366
  %v562 = vunpack.c.h.b16 %v366
  %v563 = vunpack.c.l.b16 %v367
  %v564 = vunpack.c.h.b16 %v367
  %v565 = vunpack.c.l.b16 %v368
  %v566 = vunpack.c.h.b16 %v368
  %v567 = vunpack.c.l.b16 %v369
  %v568 = vunpack.c.h.b16 %v369
  %v569 = vunpack.c.l.b16 %v370
  %v570 = vunpack.c.h.b16 %v370
  %v571 = vunpack.c.l.b16 %v371
  %v572 = vunpack.c.h.b16 %v371
  %v573 = vunpack.c.l.b16 %v372
  %v574 = vunpack.c.h.b16 %v372
  %v575 = vunpack.c.l.b16 %v373
  %v576 = vunpack.c.h.b16 %v373
  %v577 = vunpack.c.l.b16 %v374
  %v578 = vunpack.c.h.b16 %v374
  %v579 = vpack.c.b16 %v453, %v451
  %v580 = vpack.c.b16 %v454, %v452
  %v581 = vpack.c.b16 %v457, %v455
  %v582 = vpack.c.b16 %v458, %v456
  %v583 = vpack.c.b16 %v461, %v459
  %v584 = vpack.c.b16 %v462, %v460
  %v585 = vpack.c.b16 %v465, %v463
  %v586 = vpack.c.b16 %v466, %v464
  %v587 = vpack.c.b16 %v469, %v467
  %v588 = vpack.c.b16 %v470, %v468
  %v589 = vpack.c.b16 %v473, %v471
  %v590 = vpack.c.b16 %v474, %v472
  %v591 = vpack.c.b16 %v477, %v475
  %v592 = vpack.c.b16 %v478, %v476
  %v593 = vpack.c.b16 %v481, %v479
  %v594 = vpack.c.b16 %v482, %v480
  %v595 = vpack.c.b16 %v485, %v483
  %v596 = vpack.c.b16 %v486, %v484
  %v597 = vpack.c.b16 %v489, %v487
  %v598 = vpack.c.b16 %v490, %v488
  %v599 = vpack.c.b16 %v493, %v491
  %v600 = vpack.c.b16 %v494, %v492
  %v601 = vpack.c.b16 %v497, %v495
  %v602 = vpack.c.b16 %v498, %v496
  %v603 = vpack.c.b16 %v501, %v499
  %v604 = vpack.c.b16 %v502, %v500
  %v605 = vpack.c.b16 %v505, %v503
  %v606 = vpack.c.b16 %v506, %v504
  %v607 = vpack.c.b16 %v509, %v507
  %v608 = vpack.c.b16 %v510, %v508
  %v609 = vpack.c.b16 %v513, %v511
  %v610 = vpack.c.b16 %v514, %v512
  %v611 = vpack.c.b16 %v517, %v515
  %v612 = vpack.c.b16 %v518, %v516
  %v613 = vpack.c.b16 %v521, %v519
  %v614 = vpack.c.b16 %v522, %v520
  %v615 = vpack.c.b16 %v525, %v523
  %v616 = vpack.c.b16 %v526, %v524
  %v617 = vpack.c.b16 %v529, %v527
  %v618 = vpack.c.b16 %v530, %v528
  %v619 = vpack.c.b16 %v533, %v531
  %v620 = vpack.c.b16 %v534, %v532
  %v621 = vpack.c.b16 %v537, %v535
  %v622 = vpack.c.b16 %v538, %v536
  %v623 = vpack.c.b16 %v541, %v539
  %v624 = vpack.c.b16 %v542, %v540
  %v625 = vpack.c.b16 %v545, %v543
  %v626 = vpack.c.b16 %v546, %v544
  %v627 = vpack.c.b16 %v549, %v547
  %v628 = vpack.c.b16 %v550, %v548
  %v629 = vpack.c.b16 %v553, %v551
  %v630 = vpack.c.b16 %v554, %v552
  %v631 = vpack.c.b16 %v557, %v555
  %v632 = vpack.c.b16 %v558, %v556
  %v633 = vpack.c.b16 %v561, %v559
  %v634 = vpack.c.b16 %v562, %v560
  %v635 = vpack.c.b16 %v565, %v563
  %v636 = vpack.c.b16 %v566, %v564
  %v637 = vpack.c.b16 %v569, %v567
  %v638 = vpack.c.b16 %v570, %v568
  %v639 = vpack.c.b16 %v573, %v571
  %v640 = vpack.c.b16 %v574, %v572
  %v641 = vpack.c.b16 %v577, %v575
  %v642 = vpack.c.b16 %v578, %v576
  %707 = vmatprep.subr.bf16.mxu0 %v580
  %708 = vmatpush1.bf16.msra.mxu0 %v579
  %709 = vmatprep.subr.bf16.mxu0 %v582
  %710 = vmatpush1.bf16.msra.mxu0 %v581
  %711 = vmatprep.subr.bf16.mxu0 %v584
  %712 = vmatpush1.bf16.msra.mxu0 %v583
  %713 = vmatprep.subr.bf16.mxu0 %v586
  %714 = vmatpush1.bf16.msra.mxu0 %v585
  %715 = vmatprep.subr.bf16.mxu0 %v588
  %716 = vmatpush1.bf16.msra.mxu0 %v587
  %717 = vmatprep.subr.bf16.mxu0 %v590
  %718 = vmatpush1.bf16.msra.mxu0 %v589
  %719 = vmatprep.subr.bf16.mxu0 %v592
  %720 = vmatpush1.bf16.msra.mxu0 %v591
  %721 = vmatprep.subr.bf16.mxu0 %v594
  %722 = vmatpush1.bf16.msra.mxu0 %v593
  %723 = vmatprep.subr.bf16.mxu0 %v596
  %724 = vmatpush1.bf16.msra.mxu0 %v595
  %725 = vmatprep.subr.bf16.mxu0 %v598
  %726 = vmatpush1.bf16.msra.mxu0 %v597
  %727 = vmatprep.subr.bf16.mxu0 %v600
  %728 = vmatpush1.bf16.msra.mxu0 %v599
  %729 = vmatprep.subr.bf16.mxu0 %v602
  %730 = vmatpush1.bf16.msra.mxu0 %v601
  %731 = vmatprep.subr.bf16.mxu0 %v604
  %732 = vmatpush1.bf16.msra.mxu0 %v603
  %733 = vmatprep.subr.bf16.mxu0 %v606
  %734 = vmatpush1.bf16.msra.mxu0 %v605
  %735 = vmatprep.subr.bf16.mxu0 %v608
  %736 = vmatpush1.bf16.msra.mxu0 %v607
  %737 = vmatprep.subr.bf16.mxu0 %v610
  %738 = vmatpush1.bf16.msra.mxu0 %v609
  %739 = vmatprep.mubr.bf16.mxu0 %v297
  %740 = vmatmul.mubr.bf16.gmra.mrb[0].mxu0 %v296
  %v741 = vpop.f32.mrb[0].mxu0
  %v742 = vadd.f32 %v380, %v741
  %v743 = vpop.f32.mrb[0].mxu0
  %v744 = vadd.f32 %v384, %v743
  %v745 = vpop.f32.mrb[0].mxu0
  %v746 = vpop.f32.mrb[0].mxu0
  %747 = vdwg.mxu0
  %748 = vmatprep.subr.bf16.mxu0 %v612
  %749 = vmatpush1.bf16.msra.mxu0 %v611
  %750 = vmatprep.subr.bf16.mxu0 %v614
  %751 = vmatpush1.bf16.msra.mxu0 %v613
  %752 = vmatprep.subr.bf16.mxu0 %v616
  %753 = vmatpush1.bf16.msra.mxu0 %v615
  %754 = vmatprep.subr.bf16.mxu0 %v618
  %755 = vmatpush1.bf16.msra.mxu0 %v617
  %756 = vmatprep.subr.bf16.mxu0 %v620
  %757 = vmatpush1.bf16.msra.mxu0 %v619
  %758 = vmatprep.subr.bf16.mxu0 %v622
  %759 = vmatpush1.bf16.msra.mxu0 %v621
  %760 = vmatprep.subr.bf16.mxu0 %v624
  %761 = vmatpush1.bf16.msra.mxu0 %v623
  %762 = vmatprep.subr.bf16.mxu0 %v626
  %763 = vmatpush1.bf16.msra.mxu0 %v625
  %764 = vmatprep.subr.bf16.mxu0 %v628
  %765 = vmatpush1.bf16.msra.mxu0 %v627
  %766 = vmatprep.subr.bf16.mxu0 %v630
  %767 = vmatpush1.bf16.msra.mxu0 %v629
  %768 = vmatprep.subr.bf16.mxu0 %v632
  %769 = vmatpush1.bf16.msra.mxu0 %v631
  %770 = vmatprep.subr.bf16.mxu0 %v634
  %771 = vmatpush1.bf16.msra.mxu0 %v633
  %772 = vmatprep.subr.bf16.mxu0 %v636
  %773 = vmatpush1.bf16.msra.mxu0 %v635
  %774 = vmatprep.subr.bf16.mxu0 %v638
  %775 = vmatpush1.bf16.msra.mxu0 %v637
  %776 = vmatprep.subr.bf16.mxu0 %v640
  %777 = vmatpush1.bf16.msra.mxu0 %v639
  %778 = vmatprep.subr.bf16.mxu0 %v642
  %779 = vmatpush1.bf16.msra.mxu0 %v641
  %780 = vmatprep.mubr.bf16.mxu0 %v310
  %781 = vmatmul.mubr.bf16.gmra.mrb[0].mxu0 %v309
  %v782 = vpop.f32.mrb[0].mxu0
  %v783 = vadd.f32 %v742, %v782
  %v784 = vpop.f32.mrb[0].mxu0
  %v785 = vadd.f32 %v744, %v784
  %v786 = vpop.f32.mrb[0].mxu0
  %v787 = vpop.f32.mrb[0].mxu0
  %788 = vdwg.mxu0
  %v789 = vpack.c.bf16 %v783, %v783
  %v790 = vpack.c.bf16 %v785, %v785
  %v791 = vld [vmem:[%s5] sm:$0xff]
  %v792 = vld [vmem:[%s5 + $0x8] sm:$0xff]
  %v793 = vld [vmem:[%s5 + $0x10] sm:$0xff]
  %v794 = vld [vmem:[%s5 + $0x18] sm:$0xff]
  %v795 = vld [vmem:[%s5 + $0x20] sm:$0xff]
  %v796 = vld [vmem:[%s5 + $0x28] sm:$0xff]
  %v797 = vld [vmem:[%s5 + $0x30] sm:$0xff]
  %v798 = vld [vmem:[%s5 + $0x38] sm:$0xff]
  %v799 = vld [vmem:[%s5 + $0x40] sm:$0xff]
  %v800 = vld [vmem:[%s5 + $0x48] sm:$0xff]
  %v801 = vld [vmem:[%s5 + $0x50] sm:$0xff]
  %v802 = vld [vmem:[%s5 + $0x58] sm:$0xff]
  %v803 = vld [vmem:[%s5 + $0x60] sm:$0xff]
  %v804 = vld [vmem:[%s5 + $0x68] sm:$0xff]
  %v805 = vld [vmem:[%s5 + $0x70] sm:$0xff]
  %v806 = vld [vmem:[%s5 + $0x78] sm:$0xff]
  %v807 = vld [vmem:[%s5 + $0x80] sm:$0xff]
  %v808 = vld [vmem:[%s5 + $0x88] sm:$0xff]
  %v809 = vld [vmem:[%s5 + $0x90] sm:$0xff]
  %v810 = vld [vmem:[%s5 + $0x98] sm:$0xff]
  %v811 = vld [vmem:[%s5 + $0xa0] sm:$0xff]
  %v812 = vld [vmem:[%s5 + $0xa8] sm:$0xff]
  %v813 = vld [vmem:[%s5 + $0xb0] sm:$0xff]
  %v814 = vld [vmem:[%s5 + $0xb8] sm:$0xff]
  %v815 = vld [vmem:[%s5 + $0xc0] sm:$0xff]
  %v816 = vld [vmem:[%s5 + $0xc8] sm:$0xff]
  %v817 = vld [vmem:[%s5 + $0xd0] sm:$0xff]
  %v818 = vld [vmem:[%s5 + $0xd8] sm:$0xff]
  %v819 = vld [vmem:[%s5 + $0xe0] sm:$0xff]
  %v820 = vld [vmem:[%s5 + $0xe8] sm:$0xff]
  %v821 = vld [vmem:[%s5 + $0xf0] sm:$0xff]
  %v822 = vld [vmem:[%s5 + $0xf8] sm:$0xff]
  %v823 = vld [vmem:[%s6] sm:$0x3]
  %v825 = vlaneseq
  %v826 = vshrl.u32 %v825, 7
  %v827 = vsub.s32 0, %v826
  %v828 = vrot.slane %v823, %v827
  %v829 = vlaneseq
  %v830 = vshrl.u32 %v829, 7
  %v831 = vsub.s32 1, %v830
  %v832 = vrot.slane %v823, %v831
  %v867 = vunpack.c.l.b16 %v791
  %v868 = vunpack.c.h.b16 %v791
  %v869 = vunpack.c.l.b16 %v792
  %v870 = vunpack.c.h.b16 %v792
  %v871 = vunpack.c.l.b16 %v793
  %v872 = vunpack.c.h.b16 %v793
  %v873 = vunpack.c.l.b16 %v794
  %v874 = vunpack.c.h.b16 %v794
  %v875 = vunpack.c.l.b16 %v795
  %v876 = vunpack.c.h.b16 %v795
  %v877 = vunpack.c.l.b16 %v796
  %v878 = vunpack.c.h.b16 %v796
  %v879 = vunpack.c.l.b16 %v797
  %v880 = vunpack.c.h.b16 %v797
  %v881 = vunpack.c.l.b16 %v798
  %v882 = vunpack.c.h.b16 %v798
  %v883 = vunpack.c.l.b16 %v799
  %v884 = vunpack.c.h.b16 %v799
  %v885 = vunpack.c.l.b16 %v800
  %v886 = vunpack.c.h.b16 %v800
  %v887 = vunpack.c.l.b16 %v801
  %v888 = vunpack.c.h.b16 %v801
  %v889 = vunpack.c.l.b16 %v802
  %v890 = vunpack.c.h.b16 %v802
  %v891 = vunpack.c.l.b16 %v803
  %v892 = vunpack.c.h.b16 %v803
  %v893 = vunpack.c.l.b16 %v804
  %v894 = vunpack.c.h.b16 %v804
  %v895 = vunpack.c.l.b16 %v805
  %v896 = vunpack.c.h.b16 %v805
  %v897 = vunpack.c.l.b16 %v806
  %v898 = vunpack.c.h.b16 %v806
  %v899 = vunpack.c.l.b16 %v807
  %v900 = vunpack.c.h.b16 %v807
  %v901 = vunpack.c.l.b16 %v808
  %v902 = vunpack.c.h.b16 %v808
  %v903 = vunpack.c.l.b16 %v809
  %v904 = vunpack.c.h.b16 %v809
  %v905 = vunpack.c.l.b16 %v810
  %v906 = vunpack.c.h.b16 %v810
  %v907 = vunpack.c.l.b16 %v811
  %v908 = vunpack.c.h.b16 %v811
  %v909 = vunpack.c.l.b16 %v812
  %v910 = vunpack.c.h.b16 %v812
  %v911 = vunpack.c.l.b16 %v813
  %v912 = vunpack.c.h.b16 %v813
  %v913 = vunpack.c.l.b16 %v814
  %v914 = vunpack.c.h.b16 %v814
  %v915 = vunpack.c.l.b16 %v815
  %v916 = vunpack.c.h.b16 %v815
  %v917 = vunpack.c.l.b16 %v816
  %v918 = vunpack.c.h.b16 %v816
  %v919 = vunpack.c.l.b16 %v817
  %v920 = vunpack.c.h.b16 %v817
  %v921 = vunpack.c.l.b16 %v818
  %v922 = vunpack.c.h.b16 %v818
  %v923 = vunpack.c.l.b16 %v819
  %v924 = vunpack.c.h.b16 %v819
  %v925 = vunpack.c.l.b16 %v820
  %v926 = vunpack.c.h.b16 %v820
  %v927 = vunpack.c.l.b16 %v821
  %v928 = vunpack.c.h.b16 %v821
  %v929 = vunpack.c.l.b16 %v822
  %v930 = vunpack.c.h.b16 %v822
  %v931 = vpack.c.b16 %v869, %v867
  %v932 = vpack.c.b16 %v870, %v868
  %v933 = vpack.c.b16 %v873, %v871
  %v934 = vpack.c.b16 %v874, %v872
  %v935 = vpack.c.b16 %v877, %v875
  %v936 = vpack.c.b16 %v878, %v876
  %v937 = vpack.c.b16 %v881, %v879
  %v938 = vpack.c.b16 %v882, %v880
  %v939 = vpack.c.b16 %v885, %v883
  %v940 = vpack.c.b16 %v886, %v884
  %v941 = vpack.c.b16 %v889, %v887
  %v942 = vpack.c.b16 %v890, %v888
  %v943 = vpack.c.b16 %v893, %v891
  %v944 = vpack.c.b16 %v894, %v892
  %v945 = vpack.c.b16 %v897, %v895
  %v946 = vpack.c.b16 %v898, %v896
  %v947 = vpack.c.b16 %v901, %v899
  %v948 = vpack.c.b16 %v902, %v900
  %v949 = vpack.c.b16 %v905, %v903
  %v950 = vpack.c.b16 %v906, %v904
  %v951 = vpack.c.b16 %v909, %v907
  %v952 = vpack.c.b16 %v910, %v908
  %v953 = vpack.c.b16 %v913, %v911
  %v954 = vpack.c.b16 %v914, %v912
  %v955 = vpack.c.b16 %v917, %v915
  %v956 = vpack.c.b16 %v918, %v916
  %v957 = vpack.c.b16 %v921, %v919
  %v958 = vpack.c.b16 %v922, %v920
  %v959 = vpack.c.b16 %v925, %v923
  %v960 = vpack.c.b16 %v926, %v924
  %v961 = vpack.c.b16 %v929, %v927
  %v962 = vpack.c.b16 %v930, %v928
  %995 = vmatprep.subr.bf16.mxu0 %v932
  %996 = vmatpush1.bf16.msra.mxu0 %v931
  %997 = vmatprep.subr.bf16.mxu0 %v934
  %998 = vmatpush1.bf16.msra.mxu0 %v933
  %999 = vmatprep.subr.bf16.mxu0 %v936
  %1000 = vmatpush1.bf16.msra.mxu0 %v935
  %1001 = vmatprep.subr.bf16.mxu0 %v938
  %1002 = vmatpush1.bf16.msra.mxu0 %v937
  %1003 = vmatprep.subr.bf16.mxu0 %v940
  %1004 = vmatpush1.bf16.msra.mxu0 %v939
  %1005 = vmatprep.subr.bf16.mxu0 %v942
  %1006 = vmatpush1.bf16.msra.mxu0 %v941
  %1007 = vmatprep.subr.bf16.mxu0 %v944
  %1008 = vmatpush1.bf16.msra.mxu0 %v943
  %1009 = vmatprep.subr.bf16.mxu0 %v946
  %1010 = vmatpush1.bf16.msra.mxu0 %v945
  %1011 = vmatprep.subr.bf16.mxu0 %v948
  %1012 = vmatpush1.bf16.msra.mxu0 %v947
  %1013 = vmatprep.subr.bf16.mxu0 %v950
  %1014 = vmatpush1.bf16.msra.mxu0 %v949
  %1015 = vmatprep.subr.bf16.mxu0 %v952
  %1016 = vmatpush1.bf16.msra.mxu0 %v951
  %1017 = vmatprep.subr.bf16.mxu0 %v954
  %1018 = vmatpush1.bf16.msra.mxu0 %v953
  %1019 = vmatprep.subr.bf16.mxu0 %v956
  %1020 = vmatpush1.bf16.msra.mxu0 %v955
  %1021 = vmatprep.subr.bf16.mxu0 %v958
  %1022 = vmatpush1.bf16.msra.mxu0 %v957
  %1023 = vmatprep.subr.bf16.mxu0 %v960
  %1024 = vmatpush1.bf16.msra.mxu0 %v959
  %1025 = vmatprep.subr.bf16.mxu0 %v962
  %1026 = vmatpush1.bf16.msra.mxu0 %v961
  %1027 = vmatprep.mubr.bf16.mxu0 %v790
  %1028 = vmatmul.mubr.bf16.gmra.mrb[0].mxu0 %v789
  %v1029 = vpop.f32.mrb[0].mxu0
  %v1030 = vadd.f32 %v828, %v1029
  %v1031 = vpop.f32.mrb[0].mxu0
  %v1032 = vadd.f32 %v832, %v1031
  %v1033 = vpop.f32.mrb[0].mxu0
  %v1034 = vpop.f32.mrb[0].mxu0
  %1035 = vdwg.mxu0
  %v1036 = vmax.f32 %v1030, 0.0
  %v1037 = vmax.f32 %v1032, 0.0
  %v1038 = vld [vmem:[%s7] sm:$0x3]
  %v1040 = vlaneseq
  %v1041 = vshrl.u32 %v1040, 7
  %v1042 = vsub.s32 0, %v1041
  %v1043 = vrot.slane %v1038, %v1042
  %v1044 = vlaneseq
  %v1045 = vshrl.u32 %v1044, 7
  %v1046 = vsub.s32 1, %v1045
  %v1047 = vrot.slane %v1038, %v1046
  %v1050 = vmul.f32 %v1036, %v1043
  %v1051 = vmul.f32 %v1037, %v1047
  %vm1052 = vcmask 1041408
  %v1053 = vsel %vm1052, %v1050, 0.0
  %v1054 = vsel %vm1052, %v1051, 0.0
  %v1055 = vadd.f32 %v1053, %v1054
  %1056 = vadd.xlane.f32.xlu0 %v1055
  %v1057 = vpop.xlane.xlu0 %1056
  %v1058 = vld [vmem:[#allocation2] sm:$0x1]
  %v1060 = vlaneseq
  %v1061 = vshrl.u32 %v1060, 7
  %v1062 = vsub.s32 0, %v1061
  %v1063 = vrot.slane %v1058, %v1062
  %v1065 = vadd.f32 %v1057, %v1063
  %vm1066 = vcmask 1024
  %1067 = vst.msk [vmem:[%s9] sm:$0x3] %vm1066, %v1065
  // Predicated region
  $region38: #{predictor_forward.3} parent=0 // pred_check
    _
  $region39: #{predictor_forward.3} parent=0 // pred_check_branch
    %1069 = sbr.rel (0) target = $region41
  $region40: #{predictor_forward.3} parent=0 // pred_region
    _
  $region41: #{predictor_forward.3} parent=0 // pred_fallthru
    _
  // Predicated region
  $region42: #{predictor_forward.3} parent=0 // pred_check
    _
  $region43: #{predictor_forward.3} parent=0 // pred_check_branch
    %1071 = sbr.rel (0) target = $region45
  $region44: #{predictor_forward.3} parent=0 // pred_region
    _
  $region45: #{predictor_forward.3} parent=0 // pred_fallthru
    _

// kernel: predictor_forward.2
$region0: #{predictor_forward.2}
  #allocation0 [shape = 'u32[]', space=smem, size = 0x4, offset = 0x4, fixed_abs, tag = 'smem constant byte address 0x4 - core index']
  #allocation1 [shape = 'u32[144,128]{1,0:T(1,128)}', space=vmem, size = 0x12000, scoped, tag = 'internal scratch']
  %s0 = inlined_call_operand.vmem [shape: f32[2,128,3], index: 0, kind: input, shape index: {}]
  %s1 = inlined_call_operand.vmem [shape: f32[3,128], index: 1, kind: input, shape index: {}]
  %s2 = inlined_call_operand.vmem [shape: f32[1,128], index: 2, kind: input, shape index: {}]
  %s3 = inlined_call_operand.vmem [shape: bf16[128,256], index: 3, kind: input, shape index: {}]
  %s4 = inlined_call_operand.vmem [shape: f32[1,256], index: 4, kind: input, shape index: {}]
  %s5 = inlined_call_operand.hbm [shape: bf16[256,512], index: 5, kind: input, shape index: {}]
  %s6 = inlined_call_operand.hbm [shape: bf16[256,512], index: 6, kind: input, shape index: {}]
  %s7 = inlined_call_operand.vmem [shape: f32[1,512], index: 7, kind: input, shape index: {}]
  %s8 = inlined_call_operand.hbm [shape: bf16[512,256], index: 8, kind: input, shape index: {}]
  %s9 = inlined_call_operand.vmem [shape: f32[1,256], index: 9, kind: input, shape index: {}]
  %s10 = inlined_call_operand.vmem [shape: f32[2,1,256], index: 10, kind: output, shape index: {}]
  %s11 = sld [smem:[#allocation0]]
  $region85: #{predictor_forward.2} parent=0
    _
  %s13 = ssub.s32 1, %s11
  %s14 = scalar_select 0, %s13, %s11
  $region1: #{predictor_forward.2} parent=0
    #allocation2 [shape = 'u8[262144]{0}', space=vmem, size = 0x40000, scoped, tag = 'input window, operand 5, single buffered']
    #allocation3 [shape = 's32[2]{0}', space=sflag, size = 0x8, scoped, tag = 'scoped memory for predictor_forward.2']
    #allocation4 [shape = 'u8[262144]{0}', space=vmem, size = 0x40000, scoped, tag = 'input window, operand 6, single buffered']
    #allocation5 [shape = 's32[1]{0}', space=sflag, size = 0x4, scoped, tag = 'scoped memory for predictor_forward.2']
    #allocation6 [shape = 'u8[262144]{0}', space=vmem, size = 0x40000, scoped, tag = 'input window, operand 8, single buffered']
    %15 = vsyncpa [#allocation3], 0
    %16 = vsyncpa [#allocation5], 0
    loop: start=0, step=1, limit=4
    $region2: #{predictor_forward.2} parent=1 // loop_pre_header
      _
    $region3: #{predictor_forward.2} parent=1 // loop_header
      %s18 = sphi 0, %s22
      %p19 = scmp.ge.s32.totalorder %s18, 4
      %s28 = sphi 0, %s30
      %s31 = sphi 0, %s28
      %s32 = sphi 0, %s31
      %s48 = sphi 0, %s32
      %s52 = sphi 0, %s52
      %s54 = sphi 0, %s52
      %s55 = sphi 0, %s54
      %s69 = sphi 0, %s55
      %s73 = sphi 0, %s73
      %s75 = sphi 0, %s73
      %s76 = sphi 0, %s75
      %s90 = sphi 0, %s76
      %s94 = sphi 0, %s94
      %s96 = sphi 0, %s94
      %s97 = sphi 0, %s96
      %s111 = sphi 0, %s97
      %s115 = sphi 0, %s115
      %s117 = sphi 0, %s115
      %s118 = sphi 0, %s117
      %s132 = sphi 0, %s118
      %s136 = sphi 0, %s136
      %s138 = sphi 0, %s136
      %s139 = sphi 0, %s138
      %s153 = sphi 0, %s139
      %s157 = sphi 0, %s157
      %s159 = sphi 0, %s157
      %s160 = sphi 0, %s159
      %s174 = sphi 0, %s160
      %s178 = sphi 0, %s178
      %s180 = sphi 0, %s178
      %s181 = sphi 0, %s180
      %s195 = sphi 0, %s181
      %s199 = sphi 0, %s199
      %s201 = sphi 0, %s199
      %s202 = sphi 0, %s201
      %s216 = sphi 0, %s202
      %s220 = sphi 0, %s220
      %s222 = sphi 0, %s220
      %s223 = sphi 0, %s222
      %s237 = sphi 0, %s223
      %s243 = sphi 0, %s245
      %s246 = sphi 0, %s243
      %s247 = sphi 0, %s246
      %s263 = sphi 0, %s247
    $region4: #{predictor_forward.2} parent=1 // loop_header_branch
      %21 = sbr.rel (%p19) target = $region8
    $region5: #{predictor_forward.2} parent=1 // loop_body
      %s23 = ssub.s32 %s18, 1
      %s24 = ssub.s32 %s18, 2
      %s25 = sadd.s32 %s18, 1
      %s26 = ssub.s32 %s18, %s25
      %p27 = scmp.eq.s32.totalorder %s26, 0
      %s29 = sadd.s32 %s28, 1
      %s30 = scalar_select %p27, %s28, %s29
      %p33 = pneg %p27
      %p34 = scmp.eq.s32.totalorder %s18, 1
      %p35 = por %p33, %p34
      %p36 = scmp.ne.s32.totalorder %s28, %s31
      %p37 = scmp.eq.s32.totalorder %s18, 0
      %p38 = por %p36, %p37
      %p39 = scmp.ne.s32.totalorder %s28, %s31
      %p40 = scmp.eq.s32.totalorder %s23, 1
      %p41 = por %p39, %p40
      %p42 = scmp.ne.s32.totalorder %s31, %s32
      %p43 = scmp.eq.s32.totalorder %s23, 0
      %p44 = por %p42, %p43
      %p45 = scmp.ne.s32.totalorder %s31, %s32
      %p46 = scmp.eq.s32.totalorder %s24, 1
      %p47 = por %p45, %p46
      %p49 = scmp.ne.s32.totalorder %s32, %s48
      %p50 = scmp.eq.s32.totalorder %s24, 0
      %p51 = por %p49, %p50
      %s53 = sadd.s32 %s52, 1
      %p56 = scmp.eq.s32.totalorder %s18, 1
      %p57 = scmp.ne.s32.totalorder %s52, %s54
      %p58 = scmp.eq.s32.totalorder %s18, 0
      %p59 = por %p57, %p58
      %p60 = scmp.ne.s32.totalorder %s52, %s54
      %p61 = scmp.eq.s32.totalorder %s23, 1
      %p62 = por %p60, %p61
      %p63 = scmp.ne.s32.totalorder %s54, %s55
      %p64 = scmp.eq.s32.totalorder %s23, 0
      %p65 = por %p63, %p64
      %p66 = scmp.ne.s32.totalorder %s54, %s55
      %p67 = scmp.eq.s32.totalorder %s24, 1
      %p68 = por %p66, %p67
      %p70 = scmp.ne.s32.totalorder %s55, %s69
      %p71 = scmp.eq.s32.totalorder %s24, 0
      %p72 = por %p70, %p71
      %s74 = sadd.s32 %s73, 1
      %p77 = scmp.eq.s32.totalorder %s18, 1
      %p78 = scmp.ne.s32.totalorder %s73, %s75
      %p79 = scmp.eq.s32.totalorder %s18, 0
      %p80 = por %p78, %p79
      %p81 = scmp.ne.s32.totalorder %s73, %s75
      %p82 = scmp.eq.s32.totalorder %s23, 1
      %p83 = por %p81, %p82
      %p84 = scmp.ne.s32.totalorder %s75, %s76
      %p85 = scmp.eq.s32.totalorder %s23, 0
      %p86 = por %p84, %p85
      %p87 = scmp.ne.s32.totalorder %s75, %s76
      %p88 = scmp.eq.s32.totalorder %s24, 1
      %p89 = por %p87, %p88
      %p91 = scmp.ne.s32.totalorder %s76, %s90
      %p92 = scmp.eq.s32.totalorder %s24, 0
      %p93 = por %p91, %p92
      %s95 = sadd.s32 %s94, 1
      %p98 = scmp.eq.s32.totalorder %s18, 1
      %p99 = scmp.ne.s32.totalorder %s94, %s96
      %p100 = scmp.eq.s32.totalorder %s18, 0
      %p101 = por %p99, %p100
      %p102 = scmp.ne.s32.totalorder %s94, %s96
      %p103 = scmp.eq.s32.totalorder %s23, 1
      %p104 = por %p102, %p103
      %p105 = scmp.ne.s32.totalorder %s96, %s97
      %p106 = scmp.eq.s32.totalorder %s23, 0
      %p107 = por %p105, %p106
      %p108 = scmp.ne.s32.totalorder %s96, %s97
      %p109 = scmp.eq.s32.totalorder %s24, 1
      %p110 = por %p108, %p109
      %p112 = scmp.ne.s32.totalorder %s97, %s111
      %p113 = scmp.eq.s32.totalorder %s24, 0
      %p114 = por %p112, %p113
      %s116 = sadd.s32 %s115, 1
      %p119 = scmp.eq.s32.totalorder %s18, 1
      %p120 = scmp.ne.s32.totalorder %s115, %s117
      %p121 = scmp.eq.s32.totalorder %s18, 0
      %p122 = por %p120, %p121
      %p123 = scmp.ne.s32.totalorder %s115, %s117
      %p124 = scmp.eq.s32.totalorder %s23, 1
      %p125 = por %p123, %p124
      %p126 = scmp.ne.s32.totalorder %s117, %s118
      %p127 = scmp.eq.s32.totalorder %s23, 0
      %p128 = por %p126, %p127
      %p129 = scmp.ne.s32.totalorder %s117, %s118
      %p130 = scmp.eq.s32.totalorder %s24, 1
      %p131 = por %p129, %p130
      %p133 = scmp.ne.s32.totalorder %s118, %s132
      %p134 = scmp.eq.s32.totalorder %s24, 0
      %p135 = por %p133, %p134
      %s137 = sadd.s32 %s136, 1
      %p140 = scmp.eq.s32.totalorder %s18, 1
      %p141 = scmp.ne.s32.totalorder %s136, %s138
      %p142 = scmp.eq.s32.totalorder %s18, 0
      %p143 = por %p141, %p142
      %p144 = scmp.ne.s32.totalorder %s136, %s138
      %p145 = scmp.eq.s32.totalorder %s23, 1
      %p146 = por %p144, %p145
      %p147 = scmp.ne.s32.totalorder %s138, %s139
      %p148 = scmp.eq.s32.totalorder %s23, 0
      %p149 = por %p147, %p148
      %p150 = scmp.ne.s32.totalorder %s138, %s139
      %p151 = scmp.eq.s32.totalorder %s24, 1
      %p152 = por %p150, %p151
      %p154 = scmp.ne.s32.totalorder %s139, %s153
      %p155 = scmp.eq.s32.totalorder %s24, 0
      %p156 = por %p154, %p155
      %s158 = sadd.s32 %s157, 1
      %p161 = scmp.eq.s32.totalorder %s18, 1
      %p162 = scmp.ne.s32.totalorder %s157, %s159
      %p163 = scmp.eq.s32.totalorder %s18, 0
      %p164 = por %p162, %p163
      %p165 = scmp.ne.s32.totalorder %s157, %s159
      %p166 = scmp.eq.s32.totalorder %s23, 1
      %p167 = por %p165, %p166
      %p168 = scmp.ne.s32.totalorder %s159, %s160
      %p169 = scmp.eq.s32.totalorder %s23, 0
      %p170 = por %p168, %p169
      %p171 = scmp.ne.s32.totalorder %s159, %s160
      %p172 = scmp.eq.s32.totalorder %s24, 1
      %p173 = por %p171, %p172
      %p175 = scmp.ne.s32.totalorder %s160, %s174
      %p176 = scmp.eq.s32.totalorder %s24, 0
      %p177 = por %p175, %p176
      %s179 = sadd.s32 %s178, 1
      %p182 = scmp.eq.s32.totalorder %s18, 1
      %p183 = scmp.ne.s32.totalorder %s178, %s180
      %p184 = scmp.eq.s32.totalorder %s18, 0
      %p185 = por %p183, %p184
      %p186 = scmp.ne.s32.totalorder %s178, %s180
      %p187 = scmp.eq.s32.totalorder %s23, 1
      %p188 = por %p186, %p187
      %p189 = scmp.ne.s32.totalorder %s180, %s181
      %p190 = scmp.eq.s32.totalorder %s23, 0
      %p191 = por %p189, %p190
      %p192 = scmp.ne.s32.totalorder %s180, %s181
      %p193 = scmp.eq.s32.totalorder %s24, 1
      %p194 = por %p192, %p193
      %p196 = scmp.ne.s32.totalorder %s181, %s195
      %p197 = scmp.eq.s32.totalorder %s24, 0
      %p198 = por %p196, %p197
      %s200 = sadd.s32 %s199, 1
      %p203 = scmp.eq.s32.totalorder %s18, 1
      %p204 = scmp.ne.s32.totalorder %s199, %s201
      %p205 = scmp.eq.s32.totalorder %s18, 0
      %p206 = por %p204, %p205
      %p207 = scmp.ne.s32.totalorder %s199, %s201
      %p208 = scmp.eq.s32.totalorder %s23, 1
      %p209 = por %p207, %p208
      %p210 = scmp.ne.s32.totalorder %s201, %s202
      %p211 = scmp.eq.s32.totalorder %s23, 0
      %p212 = por %p210, %p211
      %p213 = scmp.ne.s32.totalorder %s201, %s202
      %p214 = scmp.eq.s32.totalorder %s24, 1
      %p215 = por %p213, %p214
      %p217 = scmp.ne.s32.totalorder %s202, %s216
      %p218 = scmp.eq.s32.totalorder %s24, 0
      %p219 = por %p217, %p218
      %s221 = sadd.s32 %s220, 1
      %p224 = scmp.eq.s32.totalorder %s18, 1
      %p225 = scmp.ne.s32.totalorder %s220, %s222
      %p226 = scmp.eq.s32.totalorder %s18, 0
      %p227 = por %p225, %p226
      %p228 = scmp.ne.s32.totalorder %s220, %s222
      %p229 = scmp.eq.s32.totalorder %s23, 1
      %p230 = por %p228, %p229
      %p231 = scmp.ne.s32.totalorder %s222, %s223
      %p232 = scmp.eq.s32.totalorder %s23, 0
      %p233 = por %p231, %p232
      %p234 = scmp.ne.s32.totalorder %s222, %s223
      %p235 = scmp.eq.s32.totalorder %s24, 1
      %p236 = por %p234, %p235
      %p238 = scmp.ne.s32.totalorder %s223, %s237
      %p239 = scmp.eq.s32.totalorder %s24, 0
      %p240 = por %p238, %p239
      %s241 = ssub.s32 %s18, %s25
      %p242 = scmp.eq.s32.totalorder %s241, 0
      %s244 = sadd.s32 %s243, 1
      %s245 = scalar_select %p242, %s243, %s244
      %p248 = pneg %p242
      %p249 = scmp.eq.s32.totalorder %s18, 1
      %p250 = por %p248, %p249
      %p251 = scmp.ne.s32.totalorder %s243, %s246
      %p252 = scmp.eq.s32.totalorder %s18, 0
      %p253 = por %p251, %p252
      %p254 = scmp.ne.s32.totalorder %s243, %s246
      %p255 = scmp.eq.s32.totalorder %s23, 1
      %p256 = por %p254, %p255
      %p257 = scmp.ne.s32.totalorder %s246, %s247
      %p258 = scmp.eq.s32.totalorder %s23, 0
      %p259 = por %p257, %p258
      %p260 = scmp.ne.s32.totalorder %s246, %s247
      %p261 = scmp.eq.s32.totalorder %s24, 1
      %p262 = por %p260, %p261
      %p264 = scmp.ne.s32.totalorder %s247, %s263
      %p265 = scmp.eq.s32.totalorder %s24, 0
      %p266 = por %p264, %p265
      %p267 = scmp.le.s32.totalorder 1, %s18
      %p268 = scmp.lt.s32.totalorder %s18, 3
      %p269 = pnand %p267, %p268
      %p270 = pneg %p269
      // Predicated region
      $region9: #{predictor_forward.2} parent=5 // pred_check
        _
      $region10: #{predictor_forward.2} parent=5 // pred_check_branch
        %272 = sbr.rel (%p269) target = $region12
      $region11: #{predictor_forward.2} parent=5 // pred_region
        %s273 = ssub.s32 %s18, 1
        // Predicated region
        $region13: #{predictor_forward.2} parent=11 // pred_check
          %p274 = pneg %p65
        $region14: #{predictor_forward.2} parent=11 // pred_check_branch
          %276 = sbr.rel (%p274) target = $region16
        $region15: #{predictor_forward.2} parent=11 // pred_region
          _
        $region16: #{predictor_forward.2} parent=11 // pred_fallthru
          _
        // Predicated region
        $region17: #{predictor_forward.2} parent=11 // pred_check
          %p277 = pneg %p86
        $region18: #{predictor_forward.2} parent=11 // pred_check_branch
          %279 = sbr.rel (%p277) target = $region20
        $region19: #{predictor_forward.2} parent=11 // pred_region
          _
        $region20: #{predictor_forward.2} parent=11 // pred_fallthru
          _
        // Predicated region
        $region21: #{predictor_forward.2} parent=11 // pred_check
          %p280 = pneg %p107
        $region22: #{predictor_forward.2} parent=11 // pred_check_branch
          %282 = sbr.rel (%p280) target = $region24
        $region23: #{predictor_forward.2} parent=11 // pred_region
          _
        $region24: #{predictor_forward.2} parent=11 // pred_fallthru
          _
        // Predicated region
        $region25: #{predictor_forward.2} parent=11 // pred_check
          %p283 = pneg %p128
        $region26: #{predictor_forward.2} parent=11 // pred_check_branch
          %285 = sbr.rel (%p283) target = $region28
        $region27: #{predictor_forward.2} parent=11 // pred_region
          _
        $region28: #{predictor_forward.2} parent=11 // pred_fallthru
          _
        // Predicated region
        $region29: #{predictor_forward.2} parent=11 // pred_check
          %p286 = pneg %p149
        $region30: #{predictor_forward.2} parent=11 // pred_check_branch
          %288 = sbr.rel (%p286) target = $region32
        $region31: #{predictor_forward.2} parent=11 // pred_region
          %s290 = ssub.s32 8192, 8192
          %291 = vsyncadd [#allocation3], %s290
          %s292 = sshll.u32 [#allocation2], 4
          %s293 = int_to_ptr.vmem [resolvable:$true] %s292
          %298 = dma.hbm_to_vmem [thread:$0]  %s5, 8192, %s293, [#allocation3], 256, 256, 16
        $region32: #{predictor_forward.2} parent=11 // pred_fallthru
          _
        // Predicated region
        $region33: #{predictor_forward.2} parent=11 // pred_check
          %p299 = pneg %p170
        $region34: #{predictor_forward.2} parent=11 // pred_check_branch
          %301 = sbr.rel (%p299) target = $region36
        $region35: #{predictor_forward.2} parent=11 // pred_region
          %s303 = ssub.s32 8192, 8192
          %304 = vsyncadd [#allocation5], %s303
          %s305 = sshll.u32 [#allocation4], 4
          %s306 = int_to_ptr.vmem [resolvable:$true] %s305
          %311 = dma.hbm_to_vmem [thread:$0]  %s6, 8192, %s306, [#allocation5], 256, 256, 16
        $region36: #{predictor_forward.2} parent=11 // pred_fallthru
          _
        // Predicated region
        $region37: #{predictor_forward.2} parent=11 // pred_check
          %p312 = pneg %p191
        $region38: #{predictor_forward.2} parent=11 // pred_check_branch
          %314 = sbr.rel (%p312) target = $region40
        $region39: #{predictor_forward.2} parent=11 // pred_region
          _
        $region40: #{predictor_forward.2} parent=11 // pred_fallthru
          _
        // Predicated region
        $region41: #{predictor_forward.2} parent=11 // pred_check
          %p315 = pneg %p212
        $region42: #{predictor_forward.2} parent=11 // pred_check_branch
          %317 = sbr.rel (%p315) target = $region44
        $region43: #{predictor_forward.2} parent=11 // pred_region
          %s319 = ssub.s32 8192, 8192
          %320 = vsyncadd [#allocation5], %s319
          %s321 = sshll.u32 [#allocation6], 4
          %s322 = int_to_ptr.vmem [resolvable:$true] %s321
          %327 = dma.hbm_to_vmem [thread:$0]  %s8, 8192, %s322, [#allocation5], 128, 128, 8
        $region44: #{predictor_forward.2} parent=11 // pred_fallthru
          _
        // Predicated region
        $region45: #{predictor_forward.2} parent=11 // pred_check
          %p328 = pneg %p233
        $region46: #{predictor_forward.2} parent=11 // pred_check_branch
          %330 = sbr.rel (%p328) target = $region48
        $region47: #{predictor_forward.2} parent=11 // pred_region
          _
        $region48: #{predictor_forward.2} parent=11 // pred_fallthru
          _
      $region12: #{predictor_forward.2} parent=5 // pred_fallthru
        _
      %p331 = scmp.lt.s32.totalorder %s18, 2
      // Predicated region
      $region49: #{predictor_forward.2} parent=5 // pred_check
        %p332 = pneg %p331
      $region50: #{predictor_forward.2} parent=5 // pred_check_branch
        %334 = sbr.rel (%p332) target = $region52
      $region51: #{predictor_forward.2} parent=5 // pred_region
        // Predicated region
        $region53: #{predictor_forward.2} parent=51 // pred_check
          %p335 = pneg %p38
        $region54: #{predictor_forward.2} parent=51 // pred_check_branch
          %337 = sbr.rel (%p335) target = $region56
        $region55: #{predictor_forward.2} parent=51 // pred_region
          %p338 = scmp.lt.s32.totalorder %s18, 1
          %s339 = scalar_select %p338, %s18, 1
          %s340 = smul.addr %s339, 16
          %s341 = smul.addr %s340, 8
          %s342 = scalar_lea.vmem %s0, %s341
        $region56: #{predictor_forward.2} parent=51 // pred_fallthru
          _
      $region52: #{predictor_forward.2} parent=5 // pred_fallthru
        _
      %p343 = scmp.le.s32.totalorder 1, %s18
      %p344 = scmp.lt.s32.totalorder %s18, 3
      %p345 = pnand %p343, %p344
      %p346 = pneg %p345
      // Predicated region
      $region57: #{predictor_forward.2} parent=5 // pred_check
        _
      $region58: #{predictor_forward.2} parent=5 // pred_check_branch
        %348 = sbr.rel (%p345) target = $region60
      $region59: #{predictor_forward.2} parent=5 // pred_region
        %s349 = ssub.s32 %s18, 1
        // Predicated region
        $region61: #{predictor_forward.2} parent=59 // pred_check
          %p350 = pneg %p149
        $region62: #{predictor_forward.2} parent=59 // pred_check_branch
          %352 = sbr.rel (%p350) target = $region64
        $region63: #{predictor_forward.2} parent=59 // pred_region
          %353 = dma.done [#allocation3], 8192
        $region64: #{predictor_forward.2} parent=59 // pred_fallthru
          _
        // Predicated region
        $region65: #{predictor_forward.2} parent=59 // pred_check
          %p354 = pneg %p170
        $region66: #{predictor_forward.2} parent=59 // pred_check_branch
          %356 = sbr.rel (%p354) target = $region68
        $region67: #{predictor_forward.2} parent=59 // pred_region
          %357 = dma.done [#allocation5], 8192
        $region68: #{predictor_forward.2} parent=59 // pred_fallthru
          _
        // Predicated region
        $region69: #{predictor_forward.2} parent=59 // pred_check
          %p358 = pneg %p212
        $region70: #{predictor_forward.2} parent=59 // pred_check_branch
          %360 = sbr.rel (%p358) target = $region72
        $region71: #{predictor_forward.2} parent=59 // pred_region
          %361 = dma.done [#allocation5], 8192
        $region72: #{predictor_forward.2} parent=59 // pred_fallthru
          _
        %p362 = scmp.lt.s32.totalorder %s23, 1
        %s363 = scalar_select %p362, %s23, 1
        %s364 = smul.addr %s363, 16
        %s365 = smul.addr %s364, 8
        %s366 = scalar_lea.vmem %s0, %s365
        %p367 = pneg %p44
        %p368 = pneg %p41
        %p369 = pneg %p65
        %p370 = pneg %p62
        %p371 = pneg %p86
        %p372 = pneg %p83
        %p373 = pneg %p107
        %p374 = pneg %p104
        %p375 = pneg %p128
        %p376 = pneg %p125
        %p377 = pneg %p149
        %p378 = pneg %p146
        %p379 = pneg %p170
        %p380 = pneg %p167
        %p381 = pneg %p191
        %p382 = pneg %p188
        %p383 = pneg %p212
        %p384 = pneg %p209
        %p385 = pneg %p233
        %p386 = pneg %p230
        %p387 = pneg %p259
        %p388 = pneg %p256
        %p389 = scmp.lt.s32.totalorder %s23, 1
        %s390 = scalar_select %p389, %s23, 1
        %s391 = smul.addr %s390, 2
        %s392 = scalar_lea.vmem %s10, %s391
        %p393 = scmp.lt.s32.totalorder %s23, 1
        %s394 = scalar_select %p393, %s23, 1
        %s395 = smul.addr %s394, 16
        %s396 = smul.addr %s395, 8
        %s397 = scalar_lea.vmem %s0, %s396
        %p398 = scmp.lt.s32.totalorder %s23, 1
        %s399 = scalar_select %p398, %s23, 1
        %s400 = smul.addr %s399, 2
        %s401 = scalar_lea.vmem %s10, %s400
        %v403 = vld [vmem:[%s397] sm:$0xff]
        %v404 = vld [vmem:[%s397 + $0x8] sm:$0xff]
        %v405 = vld [vmem:[%s397 + $0x10] sm:$0xff]
        %v406 = vld [vmem:[%s397 + $0x18] sm:$0xff]
        %v407 = vld [vmem:[%s397 + $0x20] sm:$0xff]
        %v408 = vld [vmem:[%s397 + $0x28] sm:$0xff]
        %v409 = vld [vmem:[%s397 + $0x30] sm:$0xff]
        %v410 = vld [vmem:[%s397 + $0x38] sm:$0xff]
        %v411 = vld [vmem:[%s397 + $0x40] sm:$0xff]
        %v412 = vld [vmem:[%s397 + $0x48] sm:$0xff]
        %v413 = vld [vmem:[%s397 + $0x50] sm:$0xff]
        %v414 = vld [vmem:[%s397 + $0x58] sm:$0xff]
        %v415 = vld [vmem:[%s397 + $0x60] sm:$0xff]
        %v416 = vld [vmem:[%s397 + $0x68] sm:$0xff]
        %v417 = vld [vmem:[%s397 + $0x70] sm:$0xff]
        %v418 = vld [vmem:[%s397 + $0x78] sm:$0xff]
        %v419 = vld [vmem:[%s1] sm:$0x7]
        %421 = vset.pattern.permute.xlu0 0
        %422 = vperm.xlu0 %421, %v403
        %v423 = vpop.permute.xlu0 %422
        %426 = vset.pattern.permute.xlu0 0
        %427 = vperm.xlu0 %426, %v404
        %v428 = vpop.permute.xlu0 %427
        %431 = vset.pattern.permute.xlu0 0
        %432 = vperm.xlu0 %431, %v405
        %v433 = vpop.permute.xlu0 %432
        %436 = vset.pattern.permute.xlu0 0
        %437 = vperm.xlu0 %436, %v406
        %v438 = vpop.permute.xlu0 %437
        %441 = vset.pattern.permute.xlu0 0
        %442 = vperm.xlu0 %441, %v407
        %v443 = vpop.permute.xlu0 %442
        %446 = vset.pattern.permute.xlu0 0
        %447 = vperm.xlu0 %446, %v408
        %v448 = vpop.permute.xlu0 %447
        %451 = vset.pattern.permute.xlu0 0
        %452 = vperm.xlu0 %451, %v409
        %v453 = vpop.permute.xlu0 %452
        %456 = vset.pattern.permute.xlu0 0
        %457 = vperm.xlu0 %456, %v410
        %v458 = vpop.permute.xlu0 %457
        %461 = vset.pattern.permute.xlu0 0
        %462 = vperm.xlu0 %461, %v411
        %v463 = vpop.permute.xlu0 %462
        %466 = vset.pattern.permute.xlu0 0
        %467 = vperm.xlu0 %466, %v412
        %v468 = vpop.permute.xlu0 %467
        %471 = vset.pattern.permute.xlu0 0
        %472 = vperm.xlu0 %471, %v413
        %v473 = vpop.permute.xlu0 %472
        %476 = vset.pattern.permute.xlu0 0
        %477 = vperm.xlu0 %476, %v414
        %v478 = vpop.permute.xlu0 %477
        %481 = vset.pattern.permute.xlu0 0
        %482 = vperm.xlu0 %481, %v415
        %v483 = vpop.permute.xlu0 %482
        %486 = vset.pattern.permute.xlu0 0
        %487 = vperm.xlu0 %486, %v416
        %v488 = vpop.permute.xlu0 %487
        %491 = vset.pattern.permute.xlu0 0
        %492 = vperm.xlu0 %491, %v417
        %v493 = vpop.permute.xlu0 %492
        %496 = vset.pattern.permute.xlu0 0
        %497 = vperm.xlu0 %496, %v418
        %v498 = vpop.permute.xlu0 %497
        %v500 = vlaneseq
        %v501 = vshrl.u32 %v500, 7
        %v502 = vsub.s32 0, %v501
        %v503 = vrot.slane %v419, %v502
        %v504 = vmul.f32 %v423, %v503
        %v505 = vmul.f32 %v428, %v503
        %v506 = vmul.f32 %v433, %v503
        %v507 = vmul.f32 %v438, %v503
        %v508 = vmul.f32 %v443, %v503
        %v509 = vmul.f32 %v448, %v503
        %v510 = vmul.f32 %v453, %v503
        %v511 = vmul.f32 %v458, %v503
        %v512 = vmul.f32 %v463, %v503
        %v513 = vmul.f32 %v468, %v503
        %v514 = vmul.f32 %v473, %v503
        %v515 = vmul.f32 %v478, %v503
        %v516 = vmul.f32 %v483, %v503
        %v517 = vmul.f32 %v488, %v503
        %v518 = vmul.f32 %v493, %v503
        %v519 = vmul.f32 %v498, %v503
        %520 = vset.pattern.permute.xlu0 1
        %521 = vperm.xlu0 %520, %v403
        %v522 = vpop.permute.xlu0 %521
        %524 = vset.pattern.permute.xlu0 1
        %525 = vperm.xlu0 %524, %v404
        %v526 = vpop.permute.xlu0 %525
        %528 = vset.pattern.permute.xlu0 1
        %529 = vperm.xlu0 %528, %v405
        %v530 = vpop.permute.xlu0 %529
        %532 = vset.pattern.permute.xlu0 1
        %533 = vperm.xlu0 %532, %v406
        %v534 = vpop.permute.xlu0 %533
        %536 = vset.pattern.permute.xlu0 1
        %537 = vperm.xlu0 %536, %v407
        %v538 = vpop.permute.xlu0 %537
        %540 = vset.pattern.permute.xlu0 1
        %541 = vperm.xlu0 %540, %v408
        %v542 = vpop.permute.xlu0 %541
        %544 = vset.pattern.permute.xlu0 1
        %545 = vperm.xlu0 %544, %v409
        %v546 = vpop.permute.xlu0 %545
        %548 = vset.pattern.permute.xlu0 1
        %549 = vperm.xlu0 %548, %v410
        %v550 = vpop.permute.xlu0 %549
        %552 = vset.pattern.permute.xlu0 1
        %553 = vperm.xlu0 %552, %v411
        %v554 = vpop.permute.xlu0 %553
        %556 = vset.pattern.permute.xlu0 1
        %557 = vperm.xlu0 %556, %v412
        %v558 = vpop.permute.xlu0 %557
        %560 = vset.pattern.permute.xlu0 1
        %561 = vperm.xlu0 %560, %v413
        %v562 = vpop.permute.xlu0 %561
        %564 = vset.pattern.permute.xlu0 1
        %565 = vperm.xlu0 %564, %v414
        %v566 = vpop.permute.xlu0 %565
        %568 = vset.pattern.permute.xlu0 1
        %569 = vperm.xlu0 %568, %v415
        %v570 = vpop.permute.xlu0 %569
        %572 = vset.pattern.permute.xlu0 1
        %573 = vperm.xlu0 %572, %v416
        %v574 = vpop.permute.xlu0 %573
        %576 = vset.pattern.permute.xlu0 1
        %577 = vperm.xlu0 %576, %v417
        %v578 = vpop.permute.xlu0 %577
        %580 = vset.pattern.permute.xlu0 1
        %581 = vperm.xlu0 %580, %v418
        %v582 = vpop.permute.xlu0 %581
        %v584 = vlaneseq
        %v585 = vshrl.u32 %v584, 7
        %v586 = vsub.s32 1, %v585
        %v587 = vrot.slane %v419, %v586
        %v588 = vmul.f32 %v522, %v587
        %v589 = vmul.f32 %v526, %v587
        %v590 = vmul.f32 %v530, %v587
        %v591 = vmul.f32 %v534, %v587
        %v592 = vmul.f32 %v538, %v587
        %v593 = vmul.f32 %v542, %v587
        %v594 = vmul.f32 %v546, %v587
        %v595 = vmul.f32 %v550, %v587
        %v596 = vmul.f32 %v554, %v587
        %v597 = vmul.f32 %v558, %v587
        %v598 = vmul.f32 %v562, %v587
        %v599 = vmul.f32 %v566, %v587
        %v600 = vmul.f32 %v570, %v587
        %v601 = vmul.f32 %v574, %v587
        %v602 = vmul.f32 %v578, %v587
        %v603 = vmul.f32 %v582, %v587
        %v604 = vadd.f32 %v504, %v588
        %v605 = vadd.f32 %v505, %v589
        %v606 = vadd.f32 %v506, %v590
        %v607 = vadd.f32 %v507, %v591
        %v608 = vadd.f32 %v508, %v592
        %v609 = vadd.f32 %v509, %v593
        %v610 = vadd.f32 %v510, %v594
        %v611 = vadd.f32 %v511, %v595
        %v612 = vadd.f32 %v512, %v596
        %v613 = vadd.f32 %v513, %v597
        %v614 = vadd.f32 %v514, %v598
        %v615 = vadd.f32 %v515, %v599
        %v616 = vadd.f32 %v516, %v600
        %v617 = vadd.f32 %v517, %v601
        %v618 = vadd.f32 %v518, %v602
        %v619 = vadd.f32 %v519, %v603
        %620 = vset.pattern.permute.xlu0 2
        %621 = vperm.xlu0 %620, %v403
        %v622 = vpop.permute.xlu0 %621
        %624 = vset.pattern.permute.xlu0 2
        %625 = vperm.xlu0 %624, %v404
        %v626 = vpop.permute.xlu0 %625
        %628 = vset.pattern.permute.xlu0 2
        %629 = vperm.xlu0 %628, %v405
        %v630 = vpop.permute.xlu0 %629
        %632 = vset.pattern.permute.xlu0 2
        %633 = vperm.xlu0 %632, %v406
        %v634 = vpop.permute.xlu0 %633
        %636 = vset.pattern.permute.xlu0 2
        %637 = vperm.xlu0 %636, %v407
        %v638 = vpop.permute.xlu0 %637
        %640 = vset.pattern.permute.xlu0 2
        %641 = vperm.xlu0 %640, %v408
        %v642 = vpop.permute.xlu0 %641
        %644 = vset.pattern.permute.xlu0 2
        %645 = vperm.xlu0 %644, %v409
        %v646 = vpop.permute.xlu0 %645
        %648 = vset.pattern.permute.xlu0 2
        %649 = vperm.xlu0 %648, %v410
        %v650 = vpop.permute.xlu0 %649
        %652 = vset.pattern.permute.xlu0 2
        %653 = vperm.xlu0 %652, %v411
        %v654 = vpop.permute.xlu0 %653
        %656 = vset.pattern.permute.xlu0 2
        %657 = vperm.xlu0 %656, %v412
        %v658 = vpop.permute.xlu0 %657
        %660 = vset.pattern.permute.xlu0 2
        %661 = vperm.xlu0 %660, %v413
        %v662 = vpop.permute.xlu0 %661
        %664 = vset.pattern.permute.xlu0 2
        %665 = vperm.xlu0 %664, %v414
        %v666 = vpop.permute.xlu0 %665
        %668 = vset.pattern.permute.xlu0 2
        %669 = vperm.xlu0 %668, %v415
        %v670 = vpop.permute.xlu0 %669
        %672 = vset.pattern.permute.xlu0 2
        %673 = vperm.xlu0 %672, %v416
        %v674 = vpop.permute.xlu0 %673
        %676 = vset.pattern.permute.xlu0 2
        %677 = vperm.xlu0 %676, %v417
        %v678 = vpop.permute.xlu0 %677
        %680 = vset.pattern.permute.xlu0 2
        %681 = vperm.xlu0 %680, %v418
        %v682 = vpop.permute.xlu0 %681
        %v684 = vlaneseq
        %v685 = vshrl.u32 %v684, 7
        %v686 = vsub.s32 2, %v685
        %v687 = vrot.slane %v419, %v686
        %v688 = vmul.f32 %v622, %v687
        %v689 = vmul.f32 %v626, %v687
        %v690 = vmul.f32 %v630, %v687
        %v691 = vmul.f32 %v634, %v687
        %v692 = vmul.f32 %v638, %v687
        %v693 = vmul.f32 %v642, %v687
        %v694 = vmul.f32 %v646, %v687
        %v695 = vmul.f32 %v650, %v687
        %v696 = vmul.f32 %v654, %v687
        %v697 = vmul.f32 %v658, %v687
        %v698 = vmul.f32 %v662, %v687
        %v699 = vmul.f32 %v666, %v687
        %v700 = vmul.f32 %v670, %v687
        %v701 = vmul.f32 %v674, %v687
        %v702 = vmul.f32 %v678, %v687
        %v703 = vmul.f32 %v682, %v687
        %v704 = vadd.f32 %v604, %v688
        %v705 = vadd.f32 %v605, %v689
        %v706 = vadd.f32 %v606, %v690
        %v707 = vadd.f32 %v607, %v691
        %v708 = vadd.f32 %v608, %v692
        %v709 = vadd.f32 %v609, %v693
        %v710 = vadd.f32 %v610, %v694
        %v711 = vadd.f32 %v611, %v695
        %v712 = vadd.f32 %v612, %v696
        %v713 = vadd.f32 %v613, %v697
        %v714 = vadd.f32 %v614, %v698
        %v715 = vadd.f32 %v615, %v699
        %v716 = vadd.f32 %v616, %v700
        %v717 = vadd.f32 %v617, %v701
        %v718 = vadd.f32 %v618, %v702
        %v719 = vadd.f32 %v619, %v703
        %v720 = vld [vmem:[%s2] sm:$0x1]
        %v722 = vlaneseq
        %v723 = vshrl.u32 %v722, 7
        %v724 = vsub.s32 0, %v723
        %v725 = vrot.slane %v720, %v724
        %v727 = vadd.f32 %v704, %v725
        %v728 = vadd.f32 %v705, %v725
        %v729 = vadd.f32 %v706, %v725
        %v730 = vadd.f32 %v707, %v725
        %v731 = vadd.f32 %v708, %v725
        %v732 = vadd.f32 %v709, %v725
        %v733 = vadd.f32 %v710, %v725
        %v734 = vadd.f32 %v711, %v725
        %v735 = vadd.f32 %v712, %v725
        %v736 = vadd.f32 %v713, %v725
        %v737 = vadd.f32 %v714, %v725
        %v738 = vadd.f32 %v715, %v725
        %v739 = vadd.f32 %v716, %v725
        %v740 = vadd.f32 %v717, %v725
        %v741 = vadd.f32 %v718, %v725
        %v742 = vadd.f32 %v719, %v725
        %v743 = vmax.f32 %v727, 0.0
        %v744 = vmax.f32 %v728, 0.0
        %v745 = vmax.f32 %v729, 0.0
        %v746 = vmax.f32 %v730, 0.0
        %v747 = vmax.f32 %v731, 0.0
        %v748 = vmax.f32 %v732, 0.0
        %v749 = vmax.f32 %v733, 0.0
        %v750 = vmax.f32 %v734, 0.0
        %v751 = vmax.f32 %v735, 0.0
        %v752 = vmax.f32 %v736, 0.0
        %v753 = vmax.f32 %v737, 0.0
        %v754 = vmax.f32 %v738, 0.0
        %v755 = vmax.f32 %v739, 0.0
        %v756 = vmax.f32 %v740, 0.0
        %v757 = vmax.f32 %v741, 0.0
        %v758 = vmax.f32 %v742, 0.0
        %v759 = vpack.c.bf16 %v744, %v743
        %v760 = vpack.c.bf16 %v746, %v745
        %v761 = vpack.c.bf16 %v748, %v747
        %v762 = vpack.c.bf16 %v750, %v749
        %v763 = vpack.c.bf16 %v752, %v751
        %v764 = vpack.c.bf16 %v754, %v753
        %v765 = vpack.c.bf16 %v756, %v755
        %v766 = vpack.c.bf16 %v758, %v757
        %v767 = vld [vmem:[%s3] sm:$0xff]
        %v768 = vld [vmem:[%s3 + $0x8] sm:$0xff]
        %v769 = vld [vmem:[%s3 + $0x10] sm:$0xff]
        %v770 = vld [vmem:[%s3 + $0x18] sm:$0xff]
        %v771 = vld [vmem:[%s3 + $0x20] sm:$0xff]
        %v772 = vld [vmem:[%s3 + $0x28] sm:$0xff]
        %v773 = vld [vmem:[%s3 + $0x30] sm:$0xff]
        %v774 = vld [vmem:[%s3 + $0x38] sm:$0xff]
        %v775 = vld [vmem:[%s3 + $0x40] sm:$0xff]
        %v776 = vld [vmem:[%s3 + $0x48] sm:$0xff]
        %v777 = vld [vmem:[%s3 + $0x50] sm:$0xff]
        %v778 = vld [vmem:[%s3 + $0x58] sm:$0xff]
        %v779 = vld [vmem:[%s3 + $0x60] sm:$0xff]
        %v780 = vld [vmem:[%s3 + $0x68] sm:$0xff]
        %v781 = vld [vmem:[%s3 + $0x70] sm:$0xff]
        %v782 = vld [vmem:[%s3 + $0x78] sm:$0xff]
        %v783 = vld [vmem:[%s4] sm:$0x3]
        %v785 = vlaneseq
        %v786 = vshrl.u32 %v785, 7
        %v787 = vsub.s32 0, %v786
        %v788 = vrot.slane %v783, %v787
        %v789 = vlaneseq
        %v790 = vshrl.u32 %v789, 7
        %v791 = vsub.s32 1, %v790
        %v792 = vrot.slane %v783, %v791
        %v811 = vunpack.c.l.b16 %v767
        %v812 = vunpack.c.h.b16 %v767
        %v813 = vunpack.c.l.b16 %v768
        %v814 = vunpack.c.h.b16 %v768
        %v815 = vunpack.c.l.b16 %v769
        %v816 = vunpack.c.h.b16 %v769
        %v817 = vunpack.c.l.b16 %v770
        %v818 = vunpack.c.h.b16 %v770
        %v819 = vunpack.c.l.b16 %v771
        %v820 = vunpack.c.h.b16 %v771
        %v821 = vunpack.c.l.b16 %v772
        %v822 = vunpack.c.h.b16 %v772
        %v823 = vunpack.c.l.b16 %v773
        %v824 = vunpack.c.h.b16 %v773
        %v825 = vunpack.c.l.b16 %v774
        %v826 = vunpack.c.h.b16 %v774
        %v827 = vunpack.c.l.b16 %v775
        %v828 = vunpack.c.h.b16 %v775
        %v829 = vunpack.c.l.b16 %v776
        %v830 = vunpack.c.h.b16 %v776
        %v831 = vunpack.c.l.b16 %v777
        %v832 = vunpack.c.h.b16 %v777
        %v833 = vunpack.c.l.b16 %v778
        %v834 = vunpack.c.h.b16 %v778
        %v835 = vunpack.c.l.b16 %v779
        %v836 = vunpack.c.h.b16 %v779
        %v837 = vunpack.c.l.b16 %v780
        %v838 = vunpack.c.h.b16 %v780
        %v839 = vunpack.c.l.b16 %v781
        %v840 = vunpack.c.h.b16 %v781
        %v841 = vunpack.c.l.b16 %v782
        %v842 = vunpack.c.h.b16 %v782
        %v843 = vpack.c.b16 %v813, %v811
        %v844 = vpack.c.b16 %v814, %v812
        %v845 = vpack.c.b16 %v817, %v815
        %v846 = vpack.c.b16 %v818, %v816
        %v847 = vpack.c.b16 %v821, %v819
        %v848 = vpack.c.b16 %v822, %v820
        %v849 = vpack.c.b16 %v825, %v823
        %v850 = vpack.c.b16 %v826, %v824
        %v851 = vpack.c.b16 %v829, %v827
        %v852 = vpack.c.b16 %v830, %v828
        %v853 = vpack.c.b16 %v833, %v831
        %v854 = vpack.c.b16 %v834, %v832
        %v855 = vpack.c.b16 %v837, %v835
        %v856 = vpack.c.b16 %v838, %v836
        %v857 = vpack.c.b16 %v841, %v839
        %v858 = vpack.c.b16 %v842, %v840
        %875 = vmatprep.subr.bf16.mxu0 %v844
        %876 = vmatpush1.bf16.msra.mxu0 %v843
        %877 = vmatprep.subr.bf16.mxu0 %v846
        %878 = vmatpush1.bf16.msra.mxu0 %v845
        %879 = vmatprep.subr.bf16.mxu0 %v848
        %880 = vmatpush1.bf16.msra.mxu0 %v847
        %881 = vmatprep.subr.bf16.mxu0 %v850
        %882 = vmatpush1.bf16.msra.mxu0 %v849
        %883 = vmatprep.subr.bf16.mxu0 %v852
        %884 = vmatpush1.bf16.msra.mxu0 %v851
        %885 = vmatprep.subr.bf16.mxu0 %v854
        %886 = vmatpush1.bf16.msra.mxu0 %v853
        %887 = vmatprep.subr.bf16.mxu0 %v856
        %888 = vmatpush1.bf16.msra.mxu0 %v855
        %889 = vmatprep.subr.bf16.mxu0 %v858
        %890 = vmatpush1.bf16.msra.mxu0 %v857
        %891 = vmatprep.subr.bf16.mxu0 0
        %892 = vmatpush1.bf16.msra.mxu0 0
        %893 = vmatprep.subr.bf16.mxu0 0
        %894 = vmatpush1.bf16.msra.mxu0 0
        %895 = vmatprep.subr.bf16.mxu0 0
        %896 = vmatpush1.bf16.msra.mxu0 0
        %897 = vmatprep.subr.bf16.mxu0 0
        %898 = vmatpush1.bf16.msra.mxu0 0
        %899 = vmatprep.subr.bf16.mxu0 0
        %900 = vmatpush1.bf16.msra.mxu0 0
        %901 = vmatprep.subr.bf16.mxu0 0
        %902 = vmatpush1.bf16.msra.mxu0 0
        %903 = vmatprep.subr.bf16.mxu0 0
        %904 = vmatpush1.bf16.msra.mxu0 0
        %905 = vmatprep.subr.bf16.mxu0 0
        %906 = vmatpush1.bf16.msra.mxu0 0
        %907 = vmatprep.mubr.bf16.mxu0 0
        %908 = vmatmul.mubr.bf16.gmra.mrb[0].mxu0 %v759
        %v909 = vpop.f32.mrb[0].mxu0
        %v910 = vadd.f32 %v788, %v909
        %v911 = vpop.f32.mrb[0].mxu0
        %v912 = vadd.f32 %v792, %v911
        %v913 = vpop.f32.mrb[0].mxu0
        %v914 = vadd.f32 %v788, %v913
        %v915 = vpop.f32.mrb[0].mxu0
        %v916 = vadd.f32 %v792, %v915
        %917 = vmatprep.mubr.bf16.mxu0 0
        %918 = vmatmul.mubr.bf16.gmra.mrb[0].mxu0 %v760
        %v919 = vpop.f32.mrb[0].mxu0
        %v920 = vadd.f32 %v788, %v919
        %v921 = vpop.f32.mrb[0].mxu0
        %v922 = vadd.f32 %v792, %v921
        %v923 = vpop.f32.mrb[0].mxu0
        %v924 = vadd.f32 %v788, %v923
        %v925 = vpop.f32.mrb[0].mxu0
        %v926 = vadd.f32 %v792, %v925
        %927 = vmatprep.mubr.bf16.mxu0 0
        %928 = vmatmul.mubr.bf16.gmra.mrb[0].mxu0 %v761
        %v929 = vpop.f32.mrb[0].mxu0
        %v930 = vadd.f32 %v788, %v929
        %v931 = vpop.f32.mrb[0].mxu0
        %v932 = vadd.f32 %v792, %v931
        %v933 = vpop.f32.mrb[0].mxu0
        %v934 = vadd.f32 %v788, %v933
        %v935 = vpop.f32.mrb[0].mxu0
        %v936 = vadd.f32 %v792, %v935
        %937 = vmatprep.mubr.bf16.mxu0 0
        %938 = vmatmul.mubr.bf16.gmra.mrb[0].mxu0 %v762
        %v939 = vpop.f32.mrb[0].mxu0
        %v940 = vadd.f32 %v788, %v939
        %v941 = vpop.f32.mrb[0].mxu0
        %v942 = vadd.f32 %v792, %v941
        %v943 = vpop.f32.mrb[0].mxu0
        %v944 = vadd.f32 %v788, %v943
        %v945 = vpop.f32.mrb[0].mxu0
        %v946 = vadd.f32 %v792, %v945
        %947 = vmatprep.mubr.bf16.mxu0 0
        %948 = vmatmul.mubr.bf16.gmra.mrb[0].mxu0 %v763
        %v949 = vpop.f32.mrb[0].mxu0
        %v950 = vadd.f32 %v788, %v949
        %v951 = vpop.f32.mrb[0].mxu0
        %v952 = vadd.f32 %v792, %v951
        %v953 = vpop.f32.mrb[0].mxu0
        %v954 = vadd.f32 %v788, %v953
        %v955 = vpop.f32.mrb[0].mxu0
        %v956 = vadd.f32 %v792, %v955
        %957 = vmatprep.mubr.bf16.mxu0 0
        %958 = vmatmul.mubr.bf16.gmra.mrb[0].mxu0 %v764
        %v959 = vpop.f32.mrb[0].mxu0
        %v960 = vadd.f32 %v788, %v959
        %v961 = vpop.f32.mrb[0].mxu0
        %v962 = vadd.f32 %v792, %v961
        %v963 = vpop.f32.mrb[0].mxu0
        %v964 = vadd.f32 %v788, %v963
        %v965 = vpop.f32.mrb[0].mxu0
        %v966 = vadd.f32 %v792, %v965
        %967 = vmatprep.mubr.bf16.mxu0 0
        %968 = vmatmul.mubr.bf16.gmra.mrb[0].mxu0 %v765
        %v969 = vpop.f32.mrb[0].mxu0
        %v970 = vadd.f32 %v788, %v969
        %v971 = vpop.f32.mrb[0].mxu0
        %v972 = vadd.f32 %v792, %v971
        %v973 = vpop.f32.mrb[0].mxu0
        %v974 = vadd.f32 %v788, %v973
        %v975 = vpop.f32.mrb[0].mxu0
        %v976 = vadd.f32 %v792, %v975
        %977 = vmatprep.mubr.bf16.mxu0 0
        %978 = vmatmul.mubr.bf16.gmra.mrb[0].mxu0 %v766
        %v979 = vpop.f32.mrb[0].mxu0
        %v980 = vadd.f32 %v788, %v979
        %v981 = vpop.f32.mrb[0].mxu0
        %v982 = vadd.f32 %v792, %v981
        %v983 = vpop.f32.mrb[0].mxu0
        %v984 = vadd.f32 %v788, %v983
        %v985 = vpop.f32.mrb[0].mxu0
        %v986 = vadd.f32 %v792, %v985
        %987 = vdwg.mxu0
        %v988 = vmax.f32 %v910, %v920
        %v989 = vmax.f32 %v914, %v924
        %v990 = vmax.f32 %v988, %v930
        %v991 = vmax.f32 %v989, %v934
        %v992 = vmax.f32 %v990, %v940
        %v993 = vmax.f32 %v991, %v944
        %v994 = vmax.f32 %v992, %v950
        %v995 = vmax.f32 %v993, %v954
        %v996 = vmax.f32 %v994, %v960
        %v997 = vmax.f32 %v995, %v964
        %v998 = vmax.f32 %v996, %v970
        %v999 = vmax.f32 %v997, %v974
        %v1000 = vmax.f32 %v998, %v980
        %v1001 = vmax.f32 %v999, %v984
        %v1002 = vmax.f32 %v1000, %v1001
        %v1003 = vrot.slane %v1002, 4
        %v1004 = vmax.f32 %v1002, %v1003
        %v1005 = vrot.slane %v1004, 2
        %v1006 = vmax.f32 %v1004, %v1005
        %v1007 = vrot.slane %v1006, 1
        %v1008 = vmax.f32 %v1006, %v1007
        %v1009 = vmax.f32 %v912, %v922
        %v1010 = vmax.f32 %v916, %v926
        %v1011 = vmax.f32 %v1009, %v932
        %v1012 = vmax.f32 %v1010, %v936
        %v1013 = vmax.f32 %v1011, %v942
        %v1014 = vmax.f32 %v1012, %v946
        %v1015 = vmax.f32 %v1013, %v952
        %v1016 = vmax.f32 %v1014, %v956
        %v1017 = vmax.f32 %v1015, %v962
        %v1018 = vmax.f32 %v1016, %v966
        %v1019 = vmax.f32 %v1017, %v972
        %v1020 = vmax.f32 %v1018, %v976
        %v1021 = vmax.f32 %v1019, %v982
        %v1022 = vmax.f32 %v1020, %v986
        %v1023 = vmax.f32 %v1021, %v1022
        %v1024 = vrot.slane %v1023, 4
        %v1025 = vmax.f32 %v1023, %v1024
        %v1026 = vrot.slane %v1025, 2
        %v1027 = vmax.f32 %v1025, %v1026
        %v1028 = vrot.slane %v1027, 1
        %v1029 = vmax.f32 %v1027, %v1028
        %v1030 = vpack.c.bf16 %v1008, %v1008
        %v1031 = vpack.c.bf16 %v1029, %v1029
        %v1032 = vld [vmem:[#allocation2] sm:$0xff]
        %v1033 = vld [vmem:[#allocation2 + $0x8] sm:$0xff]
        %v1034 = vld [vmem:[#allocation2 + $0x10] sm:$0xff]
        %v1035 = vld [vmem:[#allocation2 + $0x18] sm:$0xff]
        %v1036 = vld [vmem:[#allocation2 + $0x20] sm:$0xff]
        %v1037 = vld [vmem:[#allocation2 + $0x28] sm:$0xff]
        %v1038 = vld [vmem:[#allocation2 + $0x30] sm:$0xff]
        %v1039 = vld [vmem:[#allocation2 + $0x38] sm:$0xff]
        %v1040 = vld [vmem:[#allocation2 + $0x40] sm:$0xff]
        %v1041 = vld [vmem:[#allocation2 + $0x48] sm:$0xff]
        %v1042 = vld [vmem:[#allocation2 + $0x50] sm:$0xff]
        %v1043 = vld [vmem:[#allocation2 + $0x58] sm:$0xff]
        %v1044 = vld [vmem:[#allocation2 + $0x60] sm:$0xff]
        %v1045 = vld [vmem:[#allocation2 + $0x68] sm:$0xff]
        %v1046 = vld [vmem:[#allocation2 + $0x70] sm:$0xff]
        %v1047 = vld [vmem:[#allocation2 + $0x78] sm:$0xff]
        %v1048 = vld [vmem:[#allocation2 + $0x80] sm:$0xff]
        %v1049 = vld [vmem:[#allocation2 + $0x88] sm:$0xff]
        %v1050 = vld [vmem:[#allocation2 + $0x90] sm:$0xff]
        %v1051 = vld [vmem:[#allocation2 + $0x98] sm:$0xff]
        %v1052 = vld [vmem:[#allocation2 + $0xa0] sm:$0xff]
        %v1053 = vld [vmem:[#allocation2 + $0xa8] sm:$0xff]
        %v1054 = vld [vmem:[#allocation2 + $0xb0] sm:$0xff]
        %v1055 = vld [vmem:[#allocation2 + $0xb8] sm:$0xff]
        %v1056 = vld [vmem:[#allocation2 + $0xc0] sm:$0xff]
        %v1057 = vld [vmem:[#allocation2 + $0xc8] sm:$0xff]
        %v1058 = vld [vmem:[#allocation2 + $0xd0] sm:$0xff]
        %v1059 = vld [vmem:[#allocation2 + $0xd8] sm:$0xff]
        %v1060 = vld [vmem:[#allocation2 + $0xe0] sm:$0xff]
        %v1061 = vld [vmem:[#allocation2 + $0xe8] sm:$0xff]
        %v1062 = vld [vmem:[#allocation2 + $0xf0] sm:$0xff]
        %v1063 = vld [vmem:[#allocation2 + $0xf8] sm:$0xff]
        %v1064 = vld [vmem:[#allocation2 + $0x100] sm:$0xff]
        %v1065 = vld [vmem:[#allocation2 + $0x108] sm:$0xff]
        %v1066 = vld [vmem:[#allocation2 + $0x110] sm:$0xff]
        %v1067 = vld [vmem:[#allocation2 + $0x118] sm:$0xff]
        %v1068 = vld [vmem:[#allocation2 + $0x120] sm:$0xff]
        %v1069 = vld [vmem:[#allocation2 + $0x128] sm:$0xff]
        %v1070 = vld [vmem:[#allocation2 + $0x130] sm:$0xff]
        %v1071 = vld [vmem:[#allocation2 + $0x138] sm:$0xff]
        %v1072 = vld [vmem:[#allocation2 + $0x140] sm:$0xff]
        %v1073 = vld [vmem:[#allocation2 + $0x148] sm:$0xff]
        %v1074 = vld [vmem:[#allocation2 + $0x150] sm:$0xff]
        %v1075 = vld [vmem:[#allocation2 + $0x158] sm:$0xff]
        %v1076 = vld [vmem:[#allocation2 + $0x160] sm:$0xff]
        %v1077 = vld [vmem:[#allocation2 + $0x168] sm:$0xff]
        %v1078 = vld [vmem:[#allocation2 + $0x170] sm:$0xff]
        %v1079 = vld [vmem:[#allocation2 + $0x178] sm:$0xff]
        %v1080 = vld [vmem:[#allocation2 + $0x180] sm:$0xff]
        %v1081 = vld [vmem:[#allocation2 + $0x188] sm:$0xff]
        %v1082 = vld [vmem:[#allocation2 + $0x190] sm:$0xff]
        %v1083 = vld [vmem:[#allocation2 + $0x198] sm:$0xff]
        %v1084 = vld [vmem:[#allocation2 + $0x1a0] sm:$0xff]
        %v1085 = vld [vmem:[#allocation2 + $0x1a8] sm:$0xff]
        %v1086 = vld [vmem:[#allocation2 + $0x1b0] sm:$0xff]
        %v1087 = vld [vmem:[#allocation2 + $0x1b8] sm:$0xff]
        %v1088 = vld [vmem:[#allocation2 + $0x1c0] sm:$0xff]
        %v1089 = vld [vmem:[#allocation2 + $0x1c8] sm:$0xff]
        %v1090 = vld [vmem:[#allocation2 + $0x1d0] sm:$0xff]
        %v1091 = vld [vmem:[#allocation2 + $0x1d8] sm:$0xff]
        %v1092 = vld [vmem:[#allocation2 + $0x1e0] sm:$0xff]
        %v1093 = vld [vmem:[#allocation2 + $0x1e8] sm:$0xff]
        %v1094 = vld [vmem:[#allocation2 + $0x1f0] sm:$0xff]
        %v1095 = vld [vmem:[#allocation2 + $0x1f8] sm:$0xff]
        %v1160 = vunpack.c.l.b16 %v1032
        %v1161 = vunpack.c.h.b16 %v1032
        %v1162 = vunpack.c.l.b16 %v1033
        %v1163 = vunpack.c.h.b16 %v1033
        %v1164 = vunpack.c.l.b16 %v1034
        %v1165 = vunpack.c.h.b16 %v1034
        %v1166 = vunpack.c.l.b16 %v1035
        %v1167 = vunpack.c.h.b16 %v1035
        %v1168 = vunpack.c.l.b16 %v1036
        %v1169 = vunpack.c.h.b16 %v1036
        %v1170 = vunpack.c.l.b16 %v1037
        %v1171 = vunpack.c.h.b16 %v1037
        %v1172 = vunpack.c.l.b16 %v1038
        %v1173 = vunpack.c.h.b16 %v1038
        %v1174 = vunpack.c.l.b16 %v1039
        %v1175 = vunpack.c.h.b16 %v1039
        %v1176 = vunpack.c.l.b16 %v1040
        %v1177 = vunpack.c.h.b16 %v1040
        %v1178 = vunpack.c.l.b16 %v1041
        %v1179 = vunpack.c.h.b16 %v1041
        %v1180 = vunpack.c.l.b16 %v1042
        %v1181 = vunpack.c.h.b16 %v1042
        %v1182 = vunpack.c.l.b16 %v1043
        %v1183 = vunpack.c.h.b16 %v1043
        %v1184 = vunpack.c.l.b16 %v1044
        %v1185 = vunpack.c.h.b16 %v1044
        %v1186 = vunpack.c.l.b16 %v1045
        %v1187 = vunpack.c.h.b16 %v1045
        %v1188 = vunpack.c.l.b16 %v1046
        %v1189 = vunpack.c.h.b16 %v1046
        %v1190 = vunpack.c.l.b16 %v1047
        %v1191 = vunpack.c.h.b16 %v1047
        %v1192 = vunpack.c.l.b16 %v1048
        %v1193 = vunpack.c.h.b16 %v1048
        %v1194 = vunpack.c.l.b16 %v1049
        %v1195 = vunpack.c.h.b16 %v1049
        %v1196 = vunpack.c.l.b16 %v1050
        %v1197 = vunpack.c.h.b16 %v1050
        %v1198 = vunpack.c.l.b16 %v1051
        %v1199 = vunpack.c.h.b16 %v1051
        %v1200 = vunpack.c.l.b16 %v1052
        %v1201 = vunpack.c.h.b16 %v1052
        %v1202 = vunpack.c.l.b16 %v1053
        %v1203 = vunpack.c.h.b16 %v1053
        %v1204 = vunpack.c.l.b16 %v1054
        %v1205 = vunpack.c.h.b16 %v1054
        %v1206 = vunpack.c.l.b16 %v1055
        %v1207 = vunpack.c.h.b16 %v1055
        %v1208 = vunpack.c.l.b16 %v1056
        %v1209 = vunpack.c.h.b16 %v1056
        %v1210 = vunpack.c.l.b16 %v1057
        %v1211 = vunpack.c.h.b16 %v1057
        %v1212 = vunpack.c.l.b16 %v1058
        %v1213 = vunpack.c.h.b16 %v1058
        %v1214 = vunpack.c.l.b16 %v1059
        %v1215 = vunpack.c.h.b16 %v1059
        %v1216 = vunpack.c.l.b16 %v1060
        %v1217 = vunpack.c.h.b16 %v1060
        %v1218 = vunpack.c.l.b16 %v1061
        %v1219 = vunpack.c.h.b16 %v1061
        %v1220 = vunpack.c.l.b16 %v1062
        %v1221 = vunpack.c.h.b16 %v1062
        %v1222 = vunpack.c.l.b16 %v1063
        %v1223 = vunpack.c.h.b16 %v1063
        %v1224 = vunpack.c.l.b16 %v1064
        %v1225 = vunpack.c.h.b16 %v1064
        %v1226 = vunpack.c.l.b16 %v1065
        %v1227 = vunpack.c.h.b16 %v1065
        %v1228 = vunpack.c.l.b16 %v1066
        %v1229 = vunpack.c.h.b16 %v1066
        %v1230 = vunpack.c.l.b16 %v1067
        %v1231 = vunpack.c.h.b16 %v1067
        %v1232 = vunpack.c.l.b16 %v1068
        %v1233 = vunpack.c.h.b16 %v1068
        %v1234 = vunpack.c.l.b16 %v1069
        %v1235 = vunpack.c.h.b16 %v1069
        %v1236 = vunpack.c.l.b16 %v1070
        %v1237 = vunpack.c.h.b16 %v1070
        %v1238 = vunpack.c.l.b16 %v1071
        %v1239 = vunpack.c.h.b16 %v1071
        %v1240 = vunpack.c.l.b16 %v1072
        %v1241 = vunpack.c.h.b16 %v1072
        %v1242 = vunpack.c.l.b16 %v1073
        %v1243 = vunpack.c.h.b16 %v1073
        %v1244 = vunpack.c.l.b16 %v1074
        %v1245 = vunpack.c.h.b16 %v1074
        %v1246 = vunpack.c.l.b16 %v1075
        %v1247 = vunpack.c.h.b16 %v1075
        %v1248 = vunpack.c.l.b16 %v1076
        %v1249 = vunpack.c.h.b16 %v1076
        %v1250 = vunpack.c.l.b16 %v1077
        %v1251 = vunpack.c.h.b16 %v1077
        %v1252 = vunpack.c.l.b16 %v1078
        %v1253 = vunpack.c.h.b16 %v1078
        %v1254 = vunpack.c.l.b16 %v1079
        %v1255 = vunpack.c.h.b16 %v1079
        %v1256 = vunpack.c.l.b16 %v1080
        %v1257 = vunpack.c.h.b16 %v1080
        %v1258 = vunpack.c.l.b16 %v1081
        %v1259 = vunpack.c.h.b16 %v1081
        %v1260 = vunpack.c.l.b16 %v1082
        %v1261 = vunpack.c.h.b16 %v1082
        %v1262 = vunpack.c.l.b16 %v1083
        %v1263 = vunpack.c.h.b16 %v1083
        %v1264 = vunpack.c.l.b16 %v1084
        %v1265 = vunpack.c.h.b16 %v1084
        %v1266 = vunpack.c.l.b16 %v1085
        %v1267 = vunpack.c.h.b16 %v1085
        %v1268 = vunpack.c.l.b16 %v1086
        %v1269 = vunpack.c.h.b16 %v1086
        %v1270 = vunpack.c.l.b16 %v1087
        %v1271 = vunpack.c.h.b16 %v1087
        %v1272 = vunpack.c.l.b16 %v1088
        %v1273 = vunpack.c.h.b16 %v1088
        %v1274 = vunpack.c.l.b16 %v1089
        %v1275 = vunpack.c.h.b16 %v1089
        %v1276 = vunpack.c.l.b16 %v1090
        %v1277 = vunpack.c.h.b16 %v1090
        %v1278 = vunpack.c.l.b16 %v1091
        %v1279 = vunpack.c.h.b16 %v1091
        %v1280 = vunpack.c.l.b16 %v1092
        %v1281 = vunpack.c.h.b16 %v1092
        %v1282 = vunpack.c.l.b16 %v1093
        %v1283 = vunpack.c.h.b16 %v1093
        %v1284 = vunpack.c.l.b16 %v1094
        %v1285 = vunpack.c.h.b16 %v1094
        %v1286 = vunpack.c.l.b16 %v1095
        %v1287 = vunpack.c.h.b16 %v1095
        %v1288 = vpack.c.b16 %v1164, %v1160
        %v1289 = vpack.c.b16 %v1165, %v1161
        %v1290 = vpack.c.b16 %v1166, %v1162
        %v1291 = vpack.c.b16 %v1167, %v1163
        %v1292 = vpack.c.b16 %v1172, %v1168
        %v1293 = vpack.c.b16 %v1173, %v1169
        %v1294 = vpack.c.b16 %v1174, %v1170
        %v1295 = vpack.c.b16 %v1175, %v1171
        %v1296 = vpack.c.b16 %v1180, %v1176
        %v1297 = vpack.c.b16 %v1181, %v1177
        %v1298 = vpack.c.b16 %v1182, %v1178
        %v1299 = vpack.c.b16 %v1183, %v1179
        %v1300 = vpack.c.b16 %v1188, %v1184
        %v1301 = vpack.c.b16 %v1189, %v1185
        %v1302 = vpack.c.b16 %v1190, %v1186
        %v1303 = vpack.c.b16 %v1191, %v1187
        %v1304 = vpack.c.b16 %v1196, %v1192
        %v1305 = vpack.c.b16 %v1197, %v1193
        %v1306 = vpack.c.b16 %v1198, %v1194
        %v1307 = vpack.c.b16 %v1199, %v1195
        %v1308 = vpack.c.b16 %v1204, %v1200
        %v1309 = vpack.c.b16 %v1205, %v1201
        %v1310 = vpack.c.b16 %v1206, %v1202
        %v1311 = vpack.c.b16 %v1207, %v1203
        %v1312 = vpack.c.b16 %v1212, %v1208
        %v1313 = vpack.c.b16 %v1213, %v1209
        %v1314 = vpack.c.b16 %v1214, %v1210
        %v1315 = vpack.c.b16 %v1215, %v1211
        %v1316 = vpack.c.b16 %v1220, %v1216
        %v1317 = vpack.c.b16 %v1221, %v1217
        %v1318 = vpack.c.b16 %v1222, %v1218
        %v1319 = vpack.c.b16 %v1223, %v1219
        %v1320 = vpack.c.b16 %v1228, %v1224
        %v1321 = vpack.c.b16 %v1229, %v1225
        %v1322 = vpack.c.b16 %v1230, %v1226
        %v1323 = vpack.c.b16 %v1231, %v1227
        %v1324 = vpack.c.b16 %v1236, %v1232
        %v1325 = vpack.c.b16 %v1237, %v1233
        %v1326 = vpack.c.b16 %v1238, %v1234
        %v1327 = vpack.c.b16 %v1239, %v1235
        %v1328 = vpack.c.b16 %v1244, %v1240
        %v1329 = vpack.c.b16 %v1245, %v1241
        %v1330 = vpack.c.b16 %v1246, %v1242
        %v1331 = vpack.c.b16 %v1247, %v1243
        %v1332 = vpack.c.b16 %v1252, %v1248
        %v1333 = vpack.c.b16 %v1253, %v1249
        %v1334 = vpack.c.b16 %v1254, %v1250
        %v1335 = vpack.c.b16 %v1255, %v1251
        %v1336 = vpack.c.b16 %v1260, %v1256
        %v1337 = vpack.c.b16 %v1261, %v1257
        %v1338 = vpack.c.b16 %v1262, %v1258
        %v1339 = vpack.c.b16 %v1263, %v1259
        %v1340 = vpack.c.b16 %v1268, %v1264
        %v1341 = vpack.c.b16 %v1269, %v1265
        %v1342 = vpack.c.b16 %v1270, %v1266
        %v1343 = vpack.c.b16 %v1271, %v1267
        %v1344 = vpack.c.b16 %v1276, %v1272
        %v1345 = vpack.c.b16 %v1277, %v1273
        %v1346 = vpack.c.b16 %v1278, %v1274
        %v1347 = vpack.c.b16 %v1279, %v1275
        %v1348 = vpack.c.b16 %v1284, %v1280
        %v1349 = vpack.c.b16 %v1285, %v1281
        %v1350 = vpack.c.b16 %v1286, %v1282
        %v1351 = vpack.c.b16 %v1287, %v1283
        %1416 = vmatprep.subr.bf16.mxu0 %v1289
        %1417 = vmatpush1.bf16.msra.mxu0 %v1288
        %1418 = vmatprep.subr.bf16.mxu0 %v1293
        %1419 = vmatpush1.bf16.msra.mxu0 %v1292
        %1420 = vmatprep.subr.bf16.mxu0 %v1297
        %1421 = vmatpush1.bf16.msra.mxu0 %v1296
        %1422 = vmatprep.subr.bf16.mxu0 %v1301
        %1423 = vmatpush1.bf16.msra.mxu0 %v1300
        %1424 = vmatprep.subr.bf16.mxu0 %v1305
        %1425 = vmatpush1.bf16.msra.mxu0 %v1304
        %1426 = vmatprep.subr.bf16.mxu0 %v1309
        %1427 = vmatpush1.bf16.msra.mxu0 %v1308
        %1428 = vmatprep.subr.bf16.mxu0 %v1313
        %1429 = vmatpush1.bf16.msra.mxu0 %v1312
        %1430 = vmatprep.subr.bf16.mxu0 %v1317
        %1431 = vmatpush1.bf16.msra.mxu0 %v1316
        %1432 = vmatprep.subr.bf16.mxu0 %v1321
        %1433 = vmatpush1.bf16.msra.mxu0 %v1320
        %1434 = vmatprep.subr.bf16.mxu0 %v1325
        %1435 = vmatpush1.bf16.msra.mxu0 %v1324
        %1436 = vmatprep.subr.bf16.mxu0 %v1329
        %1437 = vmatpush1.bf16.msra.mxu0 %v1328
        %1438 = vmatprep.subr.bf16.mxu0 %v1333
        %1439 = vmatpush1.bf16.msra.mxu0 %v1332
        %1440 = vmatprep.subr.bf16.mxu0 %v1337
        %1441 = vmatpush1.bf16.msra.mxu0 %v1336
        %1442 = vmatprep.subr.bf16.mxu0 %v1341
        %1443 = vmatpush1.bf16.msra.mxu0 %v1340
        %1444 = vmatprep.subr.bf16.mxu0 %v1345
        %1445 = vmatpush1.bf16.msra.mxu0 %v1344
        %1446 = vmatprep.subr.bf16.mxu0 %v1349
        %1447 = vmatpush1.bf16.msra.mxu0 %v1348
        %1448 = vmatprep.mubr.bf16.mxu0 %v1031
        %1449 = vmatmul.mubr.bf16.gmra.mrb[0].mxu0 %v1030
        %v1450 = vpop.f32.mrb[0].mxu0
        %v1451 = vadd.f32 0.0, %v1450
        %v1452 = vpop.f32.mrb[0].mxu0
        %v1453 = vadd.f32 0.0, %v1452
        %v1454 = vpop.f32.mrb[0].mxu0
        %v1455 = vpop.f32.mrb[0].mxu0
        %1456 = vdwg.mxu0
        %1457 = vmatprep.subr.bf16.mxu0 %v1291
        %1458 = vmatpush1.bf16.msra.mxu0 %v1290
        %1459 = vmatprep.subr.bf16.mxu0 %v1295
        %1460 = vmatpush1.bf16.msra.mxu0 %v1294
        %1461 = vmatprep.subr.bf16.mxu0 %v1299
        %1462 = vmatpush1.bf16.msra.mxu0 %v1298
        %1463 = vmatprep.subr.bf16.mxu0 %v1303
        %1464 = vmatpush1.bf16.msra.mxu0 %v1302
        %1465 = vmatprep.subr.bf16.mxu0 %v1307
        %1466 = vmatpush1.bf16.msra.mxu0 %v1306
        %1467 = vmatprep.subr.bf16.mxu0 %v1311
        %1468 = vmatpush1.bf16.msra.mxu0 %v1310
        %1469 = vmatprep.subr.bf16.mxu0 %v1315
        %1470 = vmatpush1.bf16.msra.mxu0 %v1314
        %1471 = vmatprep.subr.bf16.mxu0 %v1319
        %1472 = vmatpush1.bf16.msra.mxu0 %v1318
        %1473 = vmatprep.subr.bf16.mxu0 %v1323
        %1474 = vmatpush1.bf16.msra.mxu0 %v1322
        %1475 = vmatprep.subr.bf16.mxu0 %v1327
        %1476 = vmatpush1.bf16.msra.mxu0 %v1326
        %1477 = vmatprep.subr.bf16.mxu0 %v1331
        %1478 = vmatpush1.bf16.msra.mxu0 %v1330
        %1479 = vmatprep.subr.bf16.mxu0 %v1335
        %1480 = vmatpush1.bf16.msra.mxu0 %v1334
        %1481 = vmatprep.subr.bf16.mxu0 %v1339
        %1482 = vmatpush1.bf16.msra.mxu0 %v1338
        %1483 = vmatprep.subr.bf16.mxu0 %v1343
        %1484 = vmatpush1.bf16.msra.mxu0 %v1342
        %1485 = vmatprep.subr.bf16.mxu0 %v1347
        %1486 = vmatpush1.bf16.msra.mxu0 %v1346
        %1487 = vmatprep.subr.bf16.mxu0 %v1351
        %1488 = vmatpush1.bf16.msra.mxu0 %v1350
        %1489 = vmatprep.mubr.bf16.mxu0 %v1031
        %1490 = vmatmul.mubr.bf16.gmra.mrb[0].mxu0 %v1030
        %v1491 = vpop.f32.mrb[0].mxu0
        %v1492 = vadd.f32 0.0, %v1491
        %v1493 = vpop.f32.mrb[0].mxu0
        %v1494 = vadd.f32 0.0, %v1493
        %v1495 = vpop.f32.mrb[0].mxu0
        %v1496 = vpop.f32.mrb[0].mxu0
        %1497 = vdwg.mxu0
        %v1498 = vpack.c.bf16 %v914, %v910
        %v1499 = vpack.c.bf16 %v916, %v912
        %v1500 = vpack.c.bf16 %v924, %v920
        %v1501 = vpack.c.bf16 %v926, %v922
        %v1502 = vpack.c.bf16 %v934, %v930
        %v1503 = vpack.c.bf16 %v936, %v932
        %v1504 = vpack.c.bf16 %v944, %v940
        %v1505 = vpack.c.bf16 %v946, %v942
        %v1506 = vpack.c.bf16 %v954, %v950
        %v1507 = vpack.c.bf16 %v956, %v952
        %v1508 = vpack.c.bf16 %v964, %v960
        %v1509 = vpack.c.bf16 %v966, %v962
        %v1510 = vpack.c.bf16 %v974, %v970
        %v1511 = vpack.c.bf16 %v976, %v972
        %v1512 = vpack.c.bf16 %v984, %v980
        %v1513 = vpack.c.bf16 %v986, %v982
        %v1514 = vld [vmem:[#allocation4] sm:$0xff]
        %v1515 = vld [vmem:[#allocation4 + $0x8] sm:$0xff]
        %v1516 = vld [vmem:[#allocation4 + $0x10] sm:$0xff]
        %v1517 = vld [vmem:[#allocation4 + $0x18] sm:$0xff]
        %v1518 = vld [vmem:[#allocation4 + $0x20] sm:$0xff]
        %v1519 = vld [vmem:[#allocation4 + $0x28] sm:$0xff]
        %v1520 = vld [vmem:[#allocation4 + $0x30] sm:$0xff]
        %v1521 = vld [vmem:[#allocation4 + $0x38] sm:$0xff]
        %v1522 = vld [vmem:[#allocation4 + $0x40] sm:$0xff]
        %v1523 = vld [vmem:[#allocation4 + $0x48] sm:$0xff]
        %v1524 = vld [vmem:[#allocation4 + $0x50] sm:$0xff]
        %v1525 = vld [vmem:[#allocation4 + $0x58] sm:$0xff]
        %v1526 = vld [vmem:[#allocation4 + $0x60] sm:$0xff]
        %v1527 = vld [vmem:[#allocation4 + $0x68] sm:$0xff]
        %v1528 = vld [vmem:[#allocation4 + $0x70] sm:$0xff]
        %v1529 = vld [vmem:[#allocation4 + $0x78] sm:$0xff]
        %v1530 = vld [vmem:[#allocation4 + $0x80] sm:$0xff]
        %v1531 = vld [vmem:[#allocation4 + $0x88] sm:$0xff]
        %v1532 = vld [vmem:[#allocation4 + $0x90] sm:$0xff]
        %v1533 = vld [vmem:[#allocation4 + $0x98] sm:$0xff]
        %v1534 = vld [vmem:[#allocation4 + $0xa0] sm:$0xff]
        %v1535 = vld [vmem:[#allocation4 + $0xa8] sm:$0xff]
        %v1536 = vld [vmem:[#allocation4 + $0xb0] sm:$0xff]
        %v1537 = vld [vmem:[#allocation4 + $0xb8] sm:$0xff]
        %v1538 = vld [vmem:[#allocation4 + $0xc0] sm:$0xff]
        %v1539 = vld [vmem:[#allocation4 + $0xc8] sm:$0xff]
        %v1540 = vld [vmem:[#allocation4 + $0xd0] sm:$0xff]
        %v1541 = vld [vmem:[#allocation4 + $0xd8] sm:$0xff]
        %v1542 = vld [vmem:[#allocation4 + $0xe0] sm:$0xff]
        %v1543 = vld [vmem:[#allocation4 + $0xe8] sm:$0xff]
        %v1544 = vld [vmem:[#allocation4 + $0xf0] sm:$0xff]
        %v1545 = vld [vmem:[#allocation4 + $0xf8] sm:$0xff]
        %v1546 = vld [vmem:[#allocation4 + $0x100] sm:$0xff]
        %v1547 = vld [vmem:[#allocation4 + $0x108] sm:$0xff]
        %v1548 = vld [vmem:[#allocation4 + $0x110] sm:$0xff]
        %v1549 = vld [vmem:[#allocation4 + $0x118] sm:$0xff]
        %v1550 = vld [vmem:[#allocation4 + $0x120] sm:$0xff]
        %v1551 = vld [vmem:[#allocation4 + $0x128] sm:$0xff]
        %v1552 = vld [vmem:[#allocation4 + $0x130] sm:$0xff]
        %v1553 = vld [vmem:[#allocation4 + $0x138] sm:$0xff]
        %v1554 = vld [vmem:[#allocation4 + $0x140] sm:$0xff]
        %v1555 = vld [vmem:[#allocation4 + $0x148] sm:$0xff]
        %v1556 = vld [vmem:[#allocation4 + $0x150] sm:$0xff]
        %v1557 = vld [vmem:[#allocation4 + $0x158] sm:$0xff]
        %v1558 = vld [vmem:[#allocation4 + $0x160] sm:$0xff]
        %v1559 = vld [vmem:[#allocation4 + $0x168] sm:$0xff]
        %v1560 = vld [vmem:[#allocation4 + $0x170] sm:$0xff]
        %v1561 = vld [vmem:[#allocation4 + $0x178] sm:$0xff]
        %v1562 = vld [vmem:[#allocation4 + $0x180] sm:$0xff]
        %v1563 = vld [vmem:[#allocation4 + $0x188] sm:$0xff]
        %v1564 = vld [vmem:[#allocation4 + $0x190] sm:$0xff]
        %v1565 = vld [vmem:[#allocation4 + $0x198] sm:$0xff]
        %v1566 = vld [vmem:[#allocation4 + $0x1a0] sm:$0xff]
        %v1567 = vld [vmem:[#allocation4 + $0x1a8] sm:$0xff]
        %v1568 = vld [vmem:[#allocation4 + $0x1b0] sm:$0xff]
        %v1569 = vld [vmem:[#allocation4 + $0x1b8] sm:$0xff]
        %v1570 = vld [vmem:[#allocation4 + $0x1c0] sm:$0xff]
        %v1571 = vld [vmem:[#allocation4 + $0x1c8] sm:$0xff]
        %v1572 = vld [vmem:[#allocation4 + $0x1d0] sm:$0xff]
        %v1573 = vld [vmem:[#allocation4 + $0x1d8] sm:$0xff]
        %v1574 = vld [vmem:[#allocation4 + $0x1e0] sm:$0xff]
        %v1575 = vld [vmem:[#allocation4 + $0x1e8] sm:$0xff]
        %v1576 = vld [vmem:[#allocation4 + $0x1f0] sm:$0xff]
        %v1577 = vld [vmem:[#allocation4 + $0x1f8] sm:$0xff]
        %v1642 = vunpack.c.l.b16 %v1514
        %v1643 = vunpack.c.h.b16 %v1514
        %v1644 = vunpack.c.l.b16 %v1515
        %v1645 = vunpack.c.h.b16 %v1515
        %v1646 = vunpack.c.l.b16 %v1516
        %v1647 = vunpack.c.h.b16 %v1516
        %v1648 = vunpack.c.l.b16 %v1517
        %v1649 = vunpack.c.h.b16 %v1517
        %v1650 = vunpack.c.l.b16 %v1518
        %v1651 = vunpack.c.h.b16 %v1518
        %v1652 = vunpack.c.l.b16 %v1519
        %v1653 = vunpack.c.h.b16 %v1519
        %v1654 = vunpack.c.l.b16 %v1520
        %v1655 = vunpack.c.h.b16 %v1520
        %v1656 = vunpack.c.l.b16 %v1521
        %v1657 = vunpack.c.h.b16 %v1521
        %v1658 = vunpack.c.l.b16 %v1522
        %v1659 = vunpack.c.h.b16 %v1522
        %v1660 = vunpack.c.l.b16 %v1523
        %v1661 = vunpack.c.h.b16 %v1523
        %v1662 = vunpack.c.l.b16 %v1524
        %v1663 = vunpack.c.h.b16 %v1524
        %v1664 = vunpack.c.l.b16 %v1525
        %v1665 = vunpack.c.h.b16 %v1525
        %v1666 = vunpack.c.l.b16 %v1526
        %v1667 = vunpack.c.h.b16 %v1526
        %v1668 = vunpack.c.l.b16 %v1527
        %v1669 = vunpack.c.h.b16 %v1527
        %v1670 = vunpack.c.l.b16 %v1528
        %v1671 = vunpack.c.h.b16 %v1528
        %v1672 = vunpack.c.l.b16 %v1529
        %v1673 = vunpack.c.h.b16 %v1529
        %v1674 = vunpack.c.l.b16 %v1530
        %v1675 = vunpack.c.h.b16 %v1530
        %v1676 = vunpack.c.l.b16 %v1531
        %v1677 = vunpack.c.h.b16 %v1531
        %v1678 = vunpack.c.l.b16 %v1532
        %v1679 = vunpack.c.h.b16 %v1532
        %v1680 = vunpack.c.l.b16 %v1533
        %v1681 = vunpack.c.h.b16 %v1533
        %v1682 = vunpack.c.l.b16 %v1534
        %v1683 = vunpack.c.h.b16 %v1534
        %v1684 = vunpack.c.l.b16 %v1535
        %v1685 = vunpack.c.h.b16 %v1535
        %v1686 = vunpack.c.l.b16 %v1536
        %v1687 = vunpack.c.h.b16 %v1536
        %v1688 = vunpack.c.l.b16 %v1537
        %v1689 = vunpack.c.h.b16 %v1537
        %v1690 = vunpack.c.l.b16 %v1538
        %v1691 = vunpack.c.h.b16 %v1538
        %v1692 = vunpack.c.l.b16 %v1539
        %v1693 = vunpack.c.h.b16 %v1539
        %v1694 = vunpack.c.l.b16 %v1540
        %v1695 = vunpack.c.h.b16 %v1540
        %v1696 = vunpack.c.l.b16 %v1541
        %v1697 = vunpack.c.h.b16 %v1541
        %v1698 = vunpack.c.l.b16 %v1542
        %v1699 = vunpack.c.h.b16 %v1542
        %v1700 = vunpack.c.l.b16 %v1543
        %v1701 = vunpack.c.h.b16 %v1543
        %v1702 = vunpack.c.l.b16 %v1544
        %v1703 = vunpack.c.h.b16 %v1544
        %v1704 = vunpack.c.l.b16 %v1545
        %v1705 = vunpack.c.h.b16 %v1545
        %v1706 = vunpack.c.l.b16 %v1546
        %v1707 = vunpack.c.h.b16 %v1546
        %v1708 = vunpack.c.l.b16 %v1547
        %v1709 = vunpack.c.h.b16 %v1547
        %v1710 = vunpack.c.l.b16 %v1548
        %v1711 = vunpack.c.h.b16 %v1548
        %v1712 = vunpack.c.l.b16 %v1549
        %v1713 = vunpack.c.h.b16 %v1549
        %v1714 = vunpack.c.l.b16 %v1550
        %v1715 = vunpack.c.h.b16 %v1550
        %v1716 = vunpack.c.l.b16 %v1551
        %v1717 = vunpack.c.h.b16 %v1551
        %v1718 = vunpack.c.l.b16 %v1552
        %v1719 = vunpack.c.h.b16 %v1552
        %v1720 = vunpack.c.l.b16 %v1553
        %v1721 = vunpack.c.h.b16 %v1553
        %v1722 = vunpack.c.l.b16 %v1554
        %v1723 = vunpack.c.h.b16 %v1554
        %v1724 = vunpack.c.l.b16 %v1555
        %v1725 = vunpack.c.h.b16 %v1555
        %v1726 = vunpack.c.l.b16 %v1556
        %v1727 = vunpack.c.h.b16 %v1556
        %v1728 = vunpack.c.l.b16 %v1557
        %v1729 = vunpack.c.h.b16 %v1557
        %v1730 = vunpack.c.l.b16 %v1558
        %v1731 = vunpack.c.h.b16 %v1558
        %v1732 = vunpack.c.l.b16 %v1559
        %v1733 = vunpack.c.h.b16 %v1559
        %v1734 = vunpack.c.l.b16 %v1560
        %v1735 = vunpack.c.h.b16 %v1560
        %v1736 = vunpack.c.l.b16 %v1561
        %v1737 = vunpack.c.h.b16 %v1561
        %v1738 = vunpack.c.l.b16 %v1562
        %v1739 = vunpack.c.h.b16 %v1562
        %v1740 = vunpack.c.l.b16 %v1563
        %v1741 = vunpack.c.h.b16 %v1563
        %v1742 = vunpack.c.l.b16 %v1564
        %v1743 = vunpack.c.h.b16 %v1564
        %v1744 = vunpack.c.l.b16 %v1565
        %v1745 = vunpack.c.h.b16 %v1565
        %v1746 = vunpack.c.l.b16 %v1566
        %v1747 = vunpack.c.h.b16 %v1566
        %v1748 = vunpack.c.l.b16 %v1567
        %v1749 = vunpack.c.h.b16 %v1567
        %v1750 = vunpack.c.l.b16 %v1568
        %v1751 = vunpack.c.h.b16 %v1568
        %v1752 = vunpack.c.l.b16 %v1569
        %v1753 = vunpack.c.h.b16 %v1569
        %v1754 = vunpack.c.l.b16 %v1570
        %v1755 = vunpack.c.h.b16 %v1570
        %v1756 = vunpack.c.l.b16 %v1571
        %v1757 = vunpack.c.h.b16 %v1571
        %v1758 = vunpack.c.l.b16 %v1572
        %v1759 = vunpack.c.h.b16 %v1572
        %v1760 = vunpack.c.l.b16 %v1573
        %v1761 = vunpack.c.h.b16 %v1573
        %v1762 = vunpack.c.l.b16 %v1574
        %v1763 = vunpack.c.h.b16 %v1574
        %v1764 = vunpack.c.l.b16 %v1575
        %v1765 = vunpack.c.h.b16 %v1575
        %v1766 = vunpack.c.l.b16 %v1576
        %v1767 = vunpack.c.h.b16 %v1576
        %v1768 = vunpack.c.l.b16 %v1577
        %v1769 = vunpack.c.h.b16 %v1577
        %v1770 = vpack.c.b16 %v1646, %v1642
        %v1771 = vpack.c.b16 %v1647, %v1643
        %v1772 = vpack.c.b16 %v1648, %v1644
        %v1773 = vpack.c.b16 %v1649, %v1645
        %v1774 = vpack.c.b16 %v1654, %v1650
        %v1775 = vpack.c.b16 %v1655, %v1651
        %v1776 = vpack.c.b16 %v1656, %v1652
        %v1777 = vpack.c.b16 %v1657, %v1653
        %v1778 = vpack.c.b16 %v1662, %v1658
        %v1779 = vpack.c.b16 %v1663, %v1659
        %v1780 = vpack.c.b16 %v1664, %v1660
        %v1781 = vpack.c.b16 %v1665, %v1661
        %v1782 = vpack.c.b16 %v1670, %v1666
        %v1783 = vpack.c.b16 %v1671, %v1667
        %v1784 = vpack.c.b16 %v1672, %v1668
        %v1785 = vpack.c.b16 %v1673, %v1669
        %v1786 = vpack.c.b16 %v1678, %v1674
        %v1787 = vpack.c.b16 %v1679, %v1675
        %v1788 = vpack.c.b16 %v1680, %v1676
        %v1789 = vpack.c.b16 %v1681, %v1677
        %v1790 = vpack.c.b16 %v1686, %v1682
        %v1791 = vpack.c.b16 %v1687, %v1683
        %v1792 = vpack.c.b16 %v1688, %v1684
        %v1793 = vpack.c.b16 %v1689, %v1685
        %v1794 = vpack.c.b16 %v1694, %v1690
        %v1795 = vpack.c.b16 %v1695, %v1691
        %v1796 = vpack.c.b16 %v1696, %v1692
        %v1797 = vpack.c.b16 %v1697, %v1693
        %v1798 = vpack.c.b16 %v1702, %v1698
        %v1799 = vpack.c.b16 %v1703, %v1699
        %v1800 = vpack.c.b16 %v1704, %v1700
        %v1801 = vpack.c.b16 %v1705, %v1701
        %v1802 = vpack.c.b16 %v1710, %v1706
        %v1803 = vpack.c.b16 %v1711, %v1707
        %v1804 = vpack.c.b16 %v1712, %v1708
        %v1805 = vpack.c.b16 %v1713, %v1709
        %v1806 = vpack.c.b16 %v1718, %v1714
        %v1807 = vpack.c.b16 %v1719, %v1715
        %v1808 = vpack.c.b16 %v1720, %v1716
        %v1809 = vpack.c.b16 %v1721, %v1717
        %v1810 = vpack.c.b16 %v1726, %v1722
        %v1811 = vpack.c.b16 %v1727, %v1723
        %v1812 = vpack.c.b16 %v1728, %v1724
        %v1813 = vpack.c.b16 %v1729, %v1725
        %v1814 = vpack.c.b16 %v1734, %v1730
        %v1815 = vpack.c.b16 %v1735, %v1731
        %v1816 = vpack.c.b16 %v1736, %v1732
        %v1817 = vpack.c.b16 %v1737, %v1733
        %v1818 = vpack.c.b16 %v1742, %v1738
        %v1819 = vpack.c.b16 %v1743, %v1739
        %v1820 = vpack.c.b16 %v1744, %v1740
        %v1821 = vpack.c.b16 %v1745, %v1741
        %v1822 = vpack.c.b16 %v1750, %v1746
        %v1823 = vpack.c.b16 %v1751, %v1747
        %v1824 = vpack.c.b16 %v1752, %v1748
        %v1825 = vpack.c.b16 %v1753, %v1749
        %v1826 = vpack.c.b16 %v1758, %v1754
        %v1827 = vpack.c.b16 %v1759, %v1755
        %v1828 = vpack.c.b16 %v1760, %v1756
        %v1829 = vpack.c.b16 %v1761, %v1757
        %v1830 = vpack.c.b16 %v1766, %v1762
        %v1831 = vpack.c.b16 %v1767, %v1763
        %v1832 = vpack.c.b16 %v1768, %v1764
        %v1833 = vpack.c.b16 %v1769, %v1765
        %1898 = vmatprep.subr.bf16.mxu0 %v1771
        %1899 = vmatpush1.bf16.msra.mxu0 %v1770
        %1900 = vmatprep.subr.bf16.mxu0 %v1775
        %1901 = vmatpush1.bf16.msra.mxu0 %v1774
        %1902 = vmatprep.subr.bf16.mxu0 %v1779
        %1903 = vmatpush1.bf16.msra.mxu0 %v1778
        %1904 = vmatprep.subr.bf16.mxu0 %v1783
        %1905 = vmatpush1.bf16.msra.mxu0 %v1782
        %1906 = vmatprep.subr.bf16.mxu0 %v1787
        %1907 = vmatpush1.bf16.msra.mxu0 %v1786
        %1908 = vmatprep.subr.bf16.mxu0 %v1791
        %1909 = vmatpush1.bf16.msra.mxu0 %v1790
        %1910 = vmatprep.subr.bf16.mxu0 %v1795
        %1911 = vmatpush1.bf16.msra.mxu0 %v1794
        %1912 = vmatprep.subr.bf16.mxu0 %v1799
        %1913 = vmatpush1.bf16.msra.mxu0 %v1798
        %1914 = vmatprep.subr.bf16.mxu0 %v1803
        %1915 = vmatpush1.bf16.msra.mxu0 %v1802
        %1916 = vmatprep.subr.bf16.mxu0 %v1807
        %1917 = vmatpush1.bf16.msra.mxu0 %v1806
        %1918 = vmatprep.subr.bf16.mxu0 %v1811
        %1919 = vmatpush1.bf16.msra.mxu0 %v1810
        %1920 = vmatprep.subr.bf16.mxu0 %v1815
        %1921 = vmatpush1.bf16.msra.mxu0 %v1814
        %1922 = vmatprep.subr.bf16.mxu0 %v1819
        %1923 = vmatpush1.bf16.msra.mxu0 %v1818
        %1924 = vmatprep.subr.bf16.mxu0 %v1823
        %1925 = vmatpush1.bf16.msra.mxu0 %v1822
        %1926 = vmatprep.subr.bf16.mxu0 %v1827
        %1927 = vmatpush1.bf16.msra.mxu0 %v1826
        %1928 = vmatprep.subr.bf16.mxu0 %v1831
        %1929 = vmatpush1.bf16.msra.mxu0 %v1830
        %1930 = vmatprep.mubr.bf16.mxu0 %v1499
        %1931 = vmatmul.mubr.bf16.gmra.mrb[0].mxu0 %v1498
        %v1932 = vpop.f32.mrb[0].mxu0
        %v1933 = vadd.f32 0.0, %v1932
        %v1934 = vpop.f32.mrb[0].mxu0
        %v1935 = vadd.f32 0.0, %v1934
        %v1936 = vpop.f32.mrb[0].mxu0
        %v1937 = vadd.f32 0.0, %v1936
        %v1938 = vpop.f32.mrb[0].mxu0
        %v1939 = vadd.f32 0.0, %v1938
        %1940 = vmatprep.mubr.bf16.mxu0 %v1501
        %1941 = vmatmul.mubr.bf16.gmra.mrb[0].mxu0 %v1500
        %v1942 = vpop.f32.mrb[0].mxu0
        %v1943 = vadd.f32 0.0, %v1942
        %v1944 = vpop.f32.mrb[0].mxu0
        %v1945 = vadd.f32 0.0, %v1944
        %v1946 = vpop.f32.mrb[0].mxu0
        %v1947 = vadd.f32 0.0, %v1946
        %v1948 = vpop.f32.mrb[0].mxu0
        %v1949 = vadd.f32 0.0, %v1948
        %1950 = vmatprep.mubr.bf16.mxu0 %v1503
        %1951 = vmatmul.mubr.bf16.gmra.mrb[0].mxu0 %v1502
        %v1952 = vpop.f32.mrb[0].mxu0
        %v1953 = vadd.f32 0.0, %v1952
        %v1954 = vpop.f32.mrb[0].mxu0
        %v1955 = vadd.f32 0.0, %v1954
        %v1956 = vpop.f32.mrb[0].mxu0
        %v1957 = vadd.f32 0.0, %v1956
        %v1958 = vpop.f32.mrb[0].mxu0
        %v1959 = vadd.f32 0.0, %v1958
        %1960 = vmatprep.mubr.bf16.mxu0 %v1505
        %1961 = vmatmul.mubr.bf16.gmra.mrb[0].mxu0 %v1504
        %v1962 = vpop.f32.mrb[0].mxu0
        %v1963 = vadd.f32 0.0, %v1962
        %v1964 = vpop.f32.mrb[0].mxu0
        %v1965 = vadd.f32 0.0, %v1964
        %v1966 = vpop.f32.mrb[0].mxu0
        %v1967 = vadd.f32 0.0, %v1966
        %v1968 = vpop.f32.mrb[0].mxu0
        %v1969 = vadd.f32 0.0, %v1968
        %1970 = vmatprep.mubr.bf16.mxu0 %v1507
        %1971 = vmatmul.mubr.bf16.gmra.mrb[0].mxu0 %v1506
        %v1972 = vpop.f32.mrb[0].mxu0
        %v1973 = vadd.f32 0.0, %v1972
        %v1974 = vpop.f32.mrb[0].mxu0
        %v1975 = vadd.f32 0.0, %v1974
        %v1976 = vpop.f32.mrb[0].mxu0
        %v1977 = vadd.f32 0.0, %v1976
        %v1978 = vpop.f32.mrb[0].mxu0
        %v1979 = vadd.f32 0.0, %v1978
        %1980 = vmatprep.mubr.bf16.mxu0 %v1509
        %1981 = vmatmul.mubr.bf16.gmra.mrb[0].mxu0 %v1508
        %v1982 = vpop.f32.mrb[0].mxu0
        %v1983 = vadd.f32 0.0, %v1982
        %v1984 = vpop.f32.mrb[0].mxu0
        %v1985 = vadd.f32 0.0, %v1984
        %v1986 = vpop.f32.mrb[0].mxu0
        %v1987 = vadd.f32 0.0, %v1986
        %v1988 = vpop.f32.mrb[0].mxu0
        %v1989 = vadd.f32 0.0, %v1988
        %1990 = vmatprep.mubr.bf16.mxu0 %v1511
        %1991 = vmatmul.mubr.bf16.gmra.mrb[0].mxu0 %v1510
        %v1992 = vpop.f32.mrb[0].mxu0
        %v1993 = vadd.f32 0.0, %v1992
        %v1994 = vpop.f32.mrb[0].mxu0
        %v1995 = vadd.f32 0.0, %v1994
        %v1996 = vpop.f32.mrb[0].mxu0
        %v1997 = vadd.f32 0.0, %v1996
        %v1998 = vpop.f32.mrb[0].mxu0
        %v1999 = vadd.f32 0.0, %v1998
        %2000 = vmatprep.mubr.bf16.mxu0 %v1513
        %2001 = vmatmul.mubr.bf16.gmra.mrb[0].mxu0 %v1512
        %v2002 = vpop.f32.mrb[0].mxu0
        %v2003 = vadd.f32 0.0, %v2002
        %v2004 = vpop.f32.mrb[0].mxu0
        %v2005 = vadd.f32 0.0, %v2004
        %v2006 = vpop.f32.mrb[0].mxu0
        %v2007 = vadd.f32 0.0, %v2006
        %v2008 = vpop.f32.mrb[0].mxu0
        %v2009 = vadd.f32 0.0, %v2008
        %2010 = vdwg.mxu0
        %2011 = vmatprep.subr.bf16.mxu0 %v1773
        %2012 = vmatpush1.bf16.msra.mxu0 %v1772
        %2013 = vmatprep.subr.bf16.mxu0 %v1777
        %2014 = vmatpush1.bf16.msra.mxu0 %v1776
        %2015 = vmatprep.subr.bf16.mxu0 %v1781
        %2016 = vmatpush1.bf16.msra.mxu0 %v1780
        %2017 = vmatprep.subr.bf16.mxu0 %v1785
        %2018 = vmatpush1.bf16.msra.mxu0 %v1784
        %2019 = vmatprep.subr.bf16.mxu0 %v1789
        %2020 = vmatpush1.bf16.msra.mxu0 %v1788
        %2021 = vmatprep.subr.bf16.mxu0 %v1793
        %2022 = vmatpush1.bf16.msra.mxu0 %v1792
        %2023 = vmatprep.subr.bf16.mxu0 %v1797
        %2024 = vmatpush1.bf16.msra.mxu0 %v1796
        %2025 = vmatprep.subr.bf16.mxu0 %v1801
        %2026 = vmatpush1.bf16.msra.mxu0 %v1800
        %2027 = vmatprep.subr.bf16.mxu0 %v1805
        %2028 = vmatpush1.bf16.msra.mxu0 %v1804
        %2029 = vmatprep.subr.bf16.mxu0 %v1809
        %2030 = vmatpush1.bf16.msra.mxu0 %v1808
        %2031 = vmatprep.subr.bf16.mxu0 %v1813
        %2032 = vmatpush1.bf16.msra.mxu0 %v1812
        %2033 = vmatprep.subr.bf16.mxu0 %v1817
        %2034 = vmatpush1.bf16.msra.mxu0 %v1816
        %2035 = vmatprep.subr.bf16.mxu0 %v1821
        %2036 = vmatpush1.bf16.msra.mxu0 %v1820
        %2037 = vmatprep.subr.bf16.mxu0 %v1825
        %2038 = vmatpush1.bf16.msra.mxu0 %v1824
        %2039 = vmatprep.subr.bf16.mxu0 %v1829
        %2040 = vmatpush1.bf16.msra.mxu0 %v1828
        %2041 = vmatprep.subr.bf16.mxu0 %v1833
        %2042 = vmatpush1.bf16.msra.mxu0 %v1832
        %2043 = vmatprep.mubr.bf16.mxu0 %v1499
        %2044 = vmatmul.mubr.bf16.gmra.mrb[0].mxu0 %v1498
        %v2045 = vpop.f32.mrb[0].mxu0
        %v2046 = vadd.f32 0.0, %v2045
        %v2047 = vpop.f32.mrb[0].mxu0
        %v2048 = vadd.f32 0.0, %v2047
        %v2049 = vpop.f32.mrb[0].mxu0
        %v2050 = vadd.f32 0.0, %v2049
        %v2051 = vpop.f32.mrb[0].mxu0
        %v2052 = vadd.f32 0.0, %v2051
        %2053 = vmatprep.mubr.bf16.mxu0 %v1501
        %2054 = vmatmul.mubr.bf16.gmra.mrb[0].mxu0 %v1500
        %v2055 = vpop.f32.mrb[0].mxu0
        %v2056 = vadd.f32 0.0, %v2055
        %v2057 = vpop.f32.mrb[0].mxu0
        %v2058 = vadd.f32 0.0, %v2057
        %v2059 = vpop.f32.mrb[0].mxu0
        %v2060 = vadd.f32 0.0, %v2059
        %v2061 = vpop.f32.mrb[0].mxu0
        %v2062 = vadd.f32 0.0, %v2061
        %2063 = vmatprep.mubr.bf16.mxu0 %v1503
        %2064 = vmatmul.mubr.bf16.gmra.mrb[0].mxu0 %v1502
        %v2065 = vpop.f32.mrb[0].mxu0
        %v2066 = vadd.f32 0.0, %v2065
        %v2067 = vpop.f32.mrb[0].mxu0
        %v2068 = vadd.f32 0.0, %v2067
        %v2069 = vpop.f32.mrb[0].mxu0
        %v2070 = vadd.f32 0.0, %v2069
        %v2071 = vpop.f32.mrb[0].mxu0
        %v2072 = vadd.f32 0.0, %v2071
        %2073 = vmatprep.mubr.bf16.mxu0 %v1505
        %2074 = vmatmul.mubr.bf16.gmra.mrb[0].mxu0 %v1504
        %v2075 = vpop.f32.mrb[0].mxu0
        %v2076 = vadd.f32 0.0, %v2075
        %v2077 = vpop.f32.mrb[0].mxu0
        %v2078 = vadd.f32 0.0, %v2077
        %v2079 = vpop.f32.mrb[0].mxu0
        %v2080 = vadd.f32 0.0, %v2079
        %v2081 = vpop.f32.mrb[0].mxu0
        %v2082 = vadd.f32 0.0, %v2081
        %2083 = vmatprep.mubr.bf16.mxu0 %v1507
        %2084 = vmatmul.mubr.bf16.gmra.mrb[0].mxu0 %v1506
        %v2085 = vpop.f32.mrb[0].mxu0
        %v2086 = vadd.f32 0.0, %v2085
        %v2087 = vpop.f32.mrb[0].mxu0
        %v2088 = vadd.f32 0.0, %v2087
        %v2089 = vpop.f32.mrb[0].mxu0
        %v2090 = vadd.f32 0.0, %v2089
        %v2091 = vpop.f32.mrb[0].mxu0
        %v2092 = vadd.f32 0.0, %v2091
        %2093 = vmatprep.mubr.bf16.mxu0 %v1509
        %2094 = vmatmul.mubr.bf16.gmra.mrb[0].mxu0 %v1508
        %v2095 = vpop.f32.mrb[0].mxu0
        %v2096 = vadd.f32 0.0, %v2095
        %v2097 = vpop.f32.mrb[0].mxu0
        %v2098 = vadd.f32 0.0, %v2097
        %v2099 = vpop.f32.mrb[0].mxu0
        %v2100 = vadd.f32 0.0, %v2099
        %v2101 = vpop.f32.mrb[0].mxu0
        %v2102 = vadd.f32 0.0, %v2101
        %2103 = vmatprep.mubr.bf16.mxu0 %v1511
        %2104 = vmatmul.mubr.bf16.gmra.mrb[0].mxu0 %v1510
        %v2105 = vpop.f32.mrb[0].mxu0
        %v2106 = vadd.f32 0.0, %v2105
        %v2107 = vpop.f32.mrb[0].mxu0
        %v2108 = vadd.f32 0.0, %v2107
        %v2109 = vpop.f32.mrb[0].mxu0
        %v2110 = vadd.f32 0.0, %v2109
        %v2111 = vpop.f32.mrb[0].mxu0
        %v2112 = vadd.f32 0.0, %v2111
        %2113 = vmatprep.mubr.bf16.mxu0 %v1513
        %2114 = vmatmul.mubr.bf16.gmra.mrb[0].mxu0 %v1512
        %v2115 = vpop.f32.mrb[0].mxu0
        %v2116 = vadd.f32 0.0, %v2115
        %v2117 = vpop.f32.mrb[0].mxu0
        %v2118 = vadd.f32 0.0, %v2117
        %v2119 = vpop.f32.mrb[0].mxu0
        %v2120 = vadd.f32 0.0, %v2119
        %v2121 = vpop.f32.mrb[0].mxu0
        %v2122 = vadd.f32 0.0, %v2121
        %2123 = vdwg.mxu0
        %v2124 = vlaneseq
        %v2125 = vshrl.u32 %v2124, 7
        %v2126 = vsub.s32 0, %v2125
        %v2127 = vrot.slane %v1451, %v2126
        %v2128 = vlaneseq
        %v2129 = vshrl.u32 %v2128, 7
        %v2130 = vsub.s32 0, %v2129
        %v2131 = vrot.slane %v1453, %v2130
        %v2132 = vlaneseq
        %v2133 = vshrl.u32 %v2132, 7
        %v2134 = vsub.s32 0, %v2133
        %v2135 = vrot.slane %v1492, %v2134
        %v2136 = vlaneseq
        %v2137 = vshrl.u32 %v2136, 7
        %v2138 = vsub.s32 0, %v2137
        %v2139 = vrot.slane %v1494, %v2138
        %v2140 = vadd.f32 %v1933, %v2127
        %v2141 = vadd.f32 %v1935, %v2131
        %v2142 = vadd.f32 %v2046, %v2135
        %v2143 = vadd.f32 %v2048, %v2139
        %v2144 = vadd.f32 %v1937, %v2127
        %v2145 = vadd.f32 %v1939, %v2131
        %v2146 = vadd.f32 %v2050, %v2135
        %v2147 = vadd.f32 %v2052, %v2139
        %v2148 = vadd.f32 %v1943, %v2127
        %v2149 = vadd.f32 %v1945, %v2131
        %v2150 = vadd.f32 %v2056, %v2135
        %v2151 = vadd.f32 %v2058, %v2139
        %v2152 = vadd.f32 %v1947, %v2127
        %v2153 = vadd.f32 %v1949, %v2131
        %v2154 = vadd.f32 %v2060, %v2135
        %v2155 = vadd.f32 %v2062, %v2139
        %v2156 = vadd.f32 %v1953, %v2127
        %v2157 = vadd.f32 %v1955, %v2131
        %v2158 = vadd.f32 %v2066, %v2135
        %v2159 = vadd.f32 %v2068, %v2139
        %v2160 = vadd.f32 %v1957, %v2127
        %v2161 = vadd.f32 %v1959, %v2131
        %v2162 = vadd.f32 %v2070, %v2135
        %v2163 = vadd.f32 %v2072, %v2139
        %v2164 = vadd.f32 %v1963, %v2127
        %v2165 = vadd.f32 %v1965, %v2131
        %v2166 = vadd.f32 %v2076, %v2135
        %v2167 = vadd.f32 %v2078, %v2139
        %v2168 = vadd.f32 %v1967, %v2127
        %v2169 = vadd.f32 %v1969, %v2131
        %v2170 = vadd.f32 %v2080, %v2135
        %v2171 = vadd.f32 %v2082, %v2139
        %v2172 = vadd.f32 %v1973, %v2127
        %v2173 = vadd.f32 %v1975, %v2131
        %v2174 = vadd.f32 %v2086, %v2135
        %v2175 = vadd.f32 %v2088, %v2139
        %v2176 = vadd.f32 %v1977, %v2127
        %v2177 = vadd.f32 %v1979, %v2131
        %v2178 = vadd.f32 %v2090, %v2135
        %v2179 = vadd.f32 %v2092, %v2139
        %v2180 = vadd.f32 %v1983, %v2127
        %v2181 = vadd.f32 %v1985, %v2131
        %v2182 = vadd.f32 %v2096, %v2135
        %v2183 = vadd.f32 %v2098, %v2139
        %v2184 = vadd.f32 %v1987, %v2127
        %v2185 = vadd.f32 %v1989, %v2131
        %v2186 = vadd.f32 %v2100, %v2135
        %v2187 = vadd.f32 %v2102, %v2139
        %v2188 = vadd.f32 %v1993, %v2127
        %v2189 = vadd.f32 %v1995, %v2131
        %v2190 = vadd.f32 %v2106, %v2135
        %v2191 = vadd.f32 %v2108, %v2139
        %v2192 = vadd.f32 %v1997, %v2127
        %v2193 = vadd.f32 %v1999, %v2131
        %v2194 = vadd.f32 %v2110, %v2135
        %v2195 = vadd.f32 %v2112, %v2139
        %v2196 = vadd.f32 %v2003, %v2127
        %v2197 = vadd.f32 %v2005, %v2131
        %v2198 = vadd.f32 %v2116, %v2135
        %v2199 = vadd.f32 %v2118, %v2139
        %v2200 = vadd.f32 %v2007, %v2127
        %v2201 = vadd.f32 %v2009, %v2131
        %v2202 = vadd.f32 %v2120, %v2135
        %v2203 = vadd.f32 %v2122, %v2139
        %v2204 = vld [vmem:[%s7] sm:$0xf]
        %v2206 = vlaneseq
        %v2207 = vshrl.u32 %v2206, 7
        %v2208 = vsub.s32 0, %v2207
        %v2209 = vrot.slane %v2204, %v2208
        %v2210 = vlaneseq
        %v2211 = vshrl.u32 %v2210, 7
        %v2212 = vsub.s32 1, %v2211
        %v2213 = vrot.slane %v2204, %v2212
        %v2214 = vlaneseq
        %v2215 = vshrl.u32 %v2214, 7
        %v2216 = vsub.s32 2, %v2215
        %v2217 = vrot.slane %v2204, %v2216
        %v2218 = vlaneseq
        %v2219 = vshrl.u32 %v2218, 7
        %v2220 = vsub.s32 3, %v2219
        %v2221 = vrot.slane %v2204, %v2220
        %v2226 = vadd.f32 %v2140, %v2209
        %v2227 = vadd.f32 %v2141, %v2213
        %v2228 = vadd.f32 %v2142, %v2217
        %v2229 = vadd.f32 %v2143, %v2221
        %v2230 = vadd.f32 %v2144, %v2209
        %v2231 = vadd.f32 %v2145, %v2213
        %v2232 = vadd.f32 %v2146, %v2217
        %v2233 = vadd.f32 %v2147, %v2221
        %v2234 = vadd.f32 %v2148, %v2209
        %v2235 = vadd.f32 %v2149, %v2213
        %v2236 = vadd.f32 %v2150, %v2217
        %v2237 = vadd.f32 %v2151, %v2221
        %v2238 = vadd.f32 %v2152, %v2209
        %v2239 = vadd.f32 %v2153, %v2213
        %v2240 = vadd.f32 %v2154, %v2217
        %v2241 = vadd.f32 %v2155, %v2221
        %v2242 = vadd.f32 %v2156, %v2209
        %v2243 = vadd.f32 %v2157, %v2213
        %v2244 = vadd.f32 %v2158, %v2217
        %v2245 = vadd.f32 %v2159, %v2221
        %v2246 = vadd.f32 %v2160, %v2209
        %v2247 = vadd.f32 %v2161, %v2213
        %v2248 = vadd.f32 %v2162, %v2217
        %v2249 = vadd.f32 %v2163, %v2221
        %v2250 = vadd.f32 %v2164, %v2209
        %v2251 = vadd.f32 %v2165, %v2213
        %v2252 = vadd.f32 %v2166, %v2217
        %v2253 = vadd.f32 %v2167, %v2221
        %v2254 = vadd.f32 %v2168, %v2209
        %v2255 = vadd.f32 %v2169, %v2213
        %v2256 = vadd.f32 %v2170, %v2217
        %v2257 = vadd.f32 %v2171, %v2221
        %v2258 = vadd.f32 %v2172, %v2209
        %v2259 = vadd.f32 %v2173, %v2213
        %v2260 = vadd.f32 %v2174, %v2217
        %v2261 = vadd.f32 %v2175, %v2221
        %v2262 = vadd.f32 %v2176, %v2209
        %v2263 = vadd.f32 %v2177, %v2213
        %v2264 = vadd.f32 %v2178, %v2217
        %v2265 = vadd.f32 %v2179, %v2221
        %v2266 = vadd.f32 %v2180, %v2209
        %v2267 = vadd.f32 %v2181, %v2213
        %v2268 = vadd.f32 %v2182, %v2217
        %v2269 = vadd.f32 %v2183, %v2221
        %v2270 = vadd.f32 %v2184, %v2209
        %v2271 = vadd.f32 %v2185, %v2213
        %v2272 = vadd.f32 %v2186, %v2217
        %v2273 = vadd.f32 %v2187, %v2221
        %v2274 = vadd.f32 %v2188, %v2209
        %v2275 = vadd.f32 %v2189, %v2213
        %v2276 = vadd.f32 %v2190, %v2217
        %v2277 = vadd.f32 %v2191, %v2221
        %v2278 = vadd.f32 %v2192, %v2209
        %v2279 = vadd.f32 %v2193, %v2213
        %v2280 = vadd.f32 %v2194, %v2217
        %v2281 = vadd.f32 %v2195, %v2221
        %v2282 = vadd.f32 %v2196, %v2209
        %v2283 = vadd.f32 %v2197, %v2213
        %v2284 = vadd.f32 %v2198, %v2217
        %v2285 = vadd.f32 %v2199, %v2221
        %v2286 = vadd.f32 %v2200, %v2209
        %v2287 = vadd.f32 %v2201, %v2213
        %v2288 = vadd.f32 %v2202, %v2217
        %v2289 = vadd.f32 %v2203, %v2221
        %v2290 = vmax.f32 %v2226, 0.0
        %v2291 = vmax.f32 %v2227, 0.0
        %v2292 = vmax.f32 %v2228, 0.0
        %v2293 = vmax.f32 %v2229, 0.0
        %v2294 = vmax.f32 %v2230, 0.0
        %v2295 = vmax.f32 %v2231, 0.0
        %v2296 = vmax.f32 %v2232, 0.0
        %v2297 = vmax.f32 %v2233, 0.0
        %v2298 = vmax.f32 %v2234, 0.0
        %v2299 = vmax.f32 %v2235, 0.0
        %v2300 = vmax.f32 %v2236, 0.0
        %v2301 = vmax.f32 %v2237, 0.0
        %v2302 = vmax.f32 %v2238, 0.0
        %v2303 = vmax.f32 %v2239, 0.0
        %v2304 = vmax.f32 %v2240, 0.0
        %v2305 = vmax.f32 %v2241, 0.0
        %v2306 = vmax.f32 %v2242, 0.0
        %v2307 = vmax.f32 %v2243, 0.0
        %v2308 = vmax.f32 %v2244, 0.0
        %v2309 = vmax.f32 %v2245, 0.0
        %v2310 = vmax.f32 %v2246, 0.0
        %v2311 = vmax.f32 %v2247, 0.0
        %v2312 = vmax.f32 %v2248, 0.0
        %v2313 = vmax.f32 %v2249, 0.0
        %v2314 = vmax.f32 %v2250, 0.0
        %v2315 = vmax.f32 %v2251, 0.0
        %v2316 = vmax.f32 %v2252, 0.0
        %v2317 = vmax.f32 %v2253, 0.0
        %v2318 = vmax.f32 %v2254, 0.0
        %v2319 = vmax.f32 %v2255, 0.0
        %v2320 = vmax.f32 %v2256, 0.0
        %v2321 = vmax.f32 %v2257, 0.0
        %v2322 = vmax.f32 %v2258, 0.0
        %v2323 = vmax.f32 %v2259, 0.0
        %v2324 = vmax.f32 %v2260, 0.0
        %v2325 = vmax.f32 %v2261, 0.0
        %v2326 = vmax.f32 %v2262, 0.0
        %v2327 = vmax.f32 %v2263, 0.0
        %v2328 = vmax.f32 %v2264, 0.0
        %v2329 = vmax.f32 %v2265, 0.0
        %v2330 = vmax.f32 %v2266, 0.0
        %v2331 = vmax.f32 %v2267, 0.0
        %v2332 = vmax.f32 %v2268, 0.0
        %v2333 = vmax.f32 %v2269, 0.0
        %v2334 = vmax.f32 %v2270, 0.0
        %v2335 = vmax.f32 %v2271, 0.0
        %v2336 = vmax.f32 %v2272, 0.0
        %v2337 = vmax.f32 %v2273, 0.0
        %v2338 = vmax.f32 %v2274, 0.0
        %v2339 = vmax.f32 %v2275, 0.0
        %v2340 = vmax.f32 %v2276, 0.0
        %v2341 = vmax.f32 %v2277, 0.0
        %v2342 = vmax.f32 %v2278, 0.0
        %v2343 = vmax.f32 %v2279, 0.0
        %v2344 = vmax.f32 %v2280, 0.0
        %v2345 = vmax.f32 %v2281, 0.0
        %v2346 = vmax.f32 %v2282, 0.0
        %v2347 = vmax.f32 %v2283, 0.0
        %v2348 = vmax.f32 %v2284, 0.0
        %v2349 = vmax.f32 %v2285, 0.0
        %v2350 = vmax.f32 %v2286, 0.0
        %v2351 = vmax.f32 %v2287, 0.0
        %v2352 = vmax.f32 %v2288, 0.0
        %v2353 = vmax.f32 %v2289, 0.0
        %v2354 = vpack.c.bf16 %v2294, %v2290
        %v2355 = vpack.c.bf16 %v2295, %v2291
        %v2356 = vpack.c.bf16 %v2296, %v2292
        %v2357 = vpack.c.bf16 %v2297, %v2293
        %v2358 = vpack.c.bf16 %v2302, %v2298
        %v2359 = vpack.c.bf16 %v2303, %v2299
        %v2360 = vpack.c.bf16 %v2304, %v2300
        %v2361 = vpack.c.bf16 %v2305, %v2301
        %v2362 = vpack.c.bf16 %v2310, %v2306
        %v2363 = vpack.c.bf16 %v2311, %v2307
        %v2364 = vpack.c.bf16 %v2312, %v2308
        %v2365 = vpack.c.bf16 %v2313, %v2309
        %v2366 = vpack.c.bf16 %v2318, %v2314
        %v2367 = vpack.c.bf16 %v2319, %v2315
        %v2368 = vpack.c.bf16 %v2320, %v2316
        %v2369 = vpack.c.bf16 %v2321, %v2317
        %v2370 = vpack.c.bf16 %v2326, %v2322
        %v2371 = vpack.c.bf16 %v2327, %v2323
        %v2372 = vpack.c.bf16 %v2328, %v2324
        %v2373 = vpack.c.bf16 %v2329, %v2325
        %v2374 = vpack.c.bf16 %v2334, %v2330
        %v2375 = vpack.c.bf16 %v2335, %v2331
        %v2376 = vpack.c.bf16 %v2336, %v2332
        %v2377 = vpack.c.bf16 %v2337, %v2333
        %v2378 = vpack.c.bf16 %v2342, %v2338
        %v2379 = vpack.c.bf16 %v2343, %v2339
        %v2380 = vpack.c.bf16 %v2344, %v2340
        %v2381 = vpack.c.bf16 %v2345, %v2341
        %v2382 = vpack.c.bf16 %v2350, %v2346
        %v2383 = vpack.c.bf16 %v2351, %v2347
        %v2384 = vpack.c.bf16 %v2352, %v2348
        %v2385 = vpack.c.bf16 %v2353, %v2349
        %v2386 = vld [vmem:[#allocation6] sm:$0xff]
        %v2387 = vld [vmem:[#allocation6 + $0x8] sm:$0xff]
        %v2388 = vld [vmem:[#allocation6 + $0x10] sm:$0xff]
        %v2389 = vld [vmem:[#allocation6 + $0x18] sm:$0xff]
        %v2390 = vld [vmem:[#allocation6 + $0x20] sm:$0xff]
        %v2391 = vld [vmem:[#allocation6 + $0x28] sm:$0xff]
        %v2392 = vld [vmem:[#allocation6 + $0x30] sm:$0xff]
        %v2393 = vld [vmem:[#allocation6 + $0x38] sm:$0xff]
        %v2394 = vld [vmem:[#allocation6 + $0x40] sm:$0xff]
        %v2395 = vld [vmem:[#allocation6 + $0x48] sm:$0xff]
        %v2396 = vld [vmem:[#allocation6 + $0x50] sm:$0xff]
        %v2397 = vld [vmem:[#allocation6 + $0x58] sm:$0xff]
        %v2398 = vld [vmem:[#allocation6 + $0x60] sm:$0xff]
        %v2399 = vld [vmem:[#allocation6 + $0x68] sm:$0xff]
        %v2400 = vld [vmem:[#allocation6 + $0x70] sm:$0xff]
        %v2401 = vld [vmem:[#allocation6 + $0x78] sm:$0xff]
        %v2402 = vld [vmem:[#allocation6 + $0x80] sm:$0xff]
        %v2403 = vld [vmem:[#allocation6 + $0x88] sm:$0xff]
        %v2404 = vld [vmem:[#allocation6 + $0x90] sm:$0xff]
        %v2405 = vld [vmem:[#allocation6 + $0x98] sm:$0xff]
        %v2406 = vld [vmem:[#allocation6 + $0xa0] sm:$0xff]
        %v2407 = vld [vmem:[#allocation6 + $0xa8] sm:$0xff]
        %v2408 = vld [vmem:[#allocation6 + $0xb0] sm:$0xff]
        %v2409 = vld [vmem:[#allocation6 + $0xb8] sm:$0xff]
        %v2410 = vld [vmem:[#allocation6 + $0xc0] sm:$0xff]
        %v2411 = vld [vmem:[#allocation6 + $0xc8] sm:$0xff]
        %v2412 = vld [vmem:[#allocation6 + $0xd0] sm:$0xff]
        %v2413 = vld [vmem:[#allocation6 + $0xd8] sm:$0xff]
        %v2414 = vld [vmem:[#allocation6 + $0xe0] sm:$0xff]
        %v2415 = vld [vmem:[#allocation6 + $0xe8] sm:$0xff]
        %v2416 = vld [vmem:[#allocation6 + $0xf0] sm:$0xff]
        %v2417 = vld [vmem:[#allocation6 + $0xf8] sm:$0xff]
        %v2418 = vld [vmem:[#allocation6 + $0x100] sm:$0xff]
        %v2419 = vld [vmem:[#allocation6 + $0x108] sm:$0xff]
        %v2420 = vld [vmem:[#allocation6 + $0x110] sm:$0xff]
        %v2421 = vld [vmem:[#allocation6 + $0x118] sm:$0xff]
        %v2422 = vld [vmem:[#allocation6 + $0x120] sm:$0xff]
        %v2423 = vld [vmem:[#allocation6 + $0x128] sm:$0xff]
        %v2424 = vld [vmem:[#allocation6 + $0x130] sm:$0xff]
        %v2425 = vld [vmem:[#allocation6 + $0x138] sm:$0xff]
        %v2426 = vld [vmem:[#allocation6 + $0x140] sm:$0xff]
        %v2427 = vld [vmem:[#allocation6 + $0x148] sm:$0xff]
        %v2428 = vld [vmem:[#allocation6 + $0x150] sm:$0xff]
        %v2429 = vld [vmem:[#allocation6 + $0x158] sm:$0xff]
        %v2430 = vld [vmem:[#allocation6 + $0x160] sm:$0xff]
        %v2431 = vld [vmem:[#allocation6 + $0x168] sm:$0xff]
        %v2432 = vld [vmem:[#allocation6 + $0x170] sm:$0xff]
        %v2433 = vld [vmem:[#allocation6 + $0x178] sm:$0xff]
        %v2434 = vld [vmem:[#allocation6 + $0x180] sm:$0xff]
        %v2435 = vld [vmem:[#allocation6 + $0x188] sm:$0xff]
        %v2436 = vld [vmem:[#allocation6 + $0x190] sm:$0xff]
        %v2437 = vld [vmem:[#allocation6 + $0x198] sm:$0xff]
        %v2438 = vld [vmem:[#allocation6 + $0x1a0] sm:$0xff]
        %v2439 = vld [vmem:[#allocation6 + $0x1a8] sm:$0xff]
        %v2440 = vld [vmem:[#allocation6 + $0x1b0] sm:$0xff]
        %v2441 = vld [vmem:[#allocation6 + $0x1b8] sm:$0xff]
        %v2442 = vld [vmem:[#allocation6 + $0x1c0] sm:$0xff]
        %v2443 = vld [vmem:[#allocation6 + $0x1c8] sm:$0xff]
        %v2444 = vld [vmem:[#allocation6 + $0x1d0] sm:$0xff]
        %v2445 = vld [vmem:[#allocation6 + $0x1d8] sm:$0xff]
        %v2446 = vld [vmem:[#allocation6 + $0x1e0] sm:$0xff]
        %v2447 = vld [vmem:[#allocation6 + $0x1e8] sm:$0xff]
        %v2448 = vld [vmem:[#allocation6 + $0x1f0] sm:$0xff]
        %v2449 = vld [vmem:[#allocation6 + $0x1f8] sm:$0xff]
        %v2450 = vld [vmem:[%s9] sm:$0x3]
        %v2452 = vlaneseq
        %v2453 = vshrl.u32 %v2452, 7
        %v2454 = vsub.s32 0, %v2453
        %v2455 = vrot.slane %v2450, %v2454
        %v2456 = vlaneseq
        %v2457 = vshrl.u32 %v2456, 7
        %v2458 = vsub.s32 1, %v2457
        %v2459 = vrot.slane %v2450, %v2458
        %v2526 = vunpack.c.l.b16 %v2386
        %v2527 = vunpack.c.h.b16 %v2386
        %v2528 = vunpack.c.l.b16 %v2387
        %v2529 = vunpack.c.h.b16 %v2387
        %v2530 = vunpack.c.l.b16 %v2388
        %v2531 = vunpack.c.h.b16 %v2388
        %v2532 = vunpack.c.l.b16 %v2389
        %v2533 = vunpack.c.h.b16 %v2389
        %v2534 = vunpack.c.l.b16 %v2390
        %v2535 = vunpack.c.h.b16 %v2390
        %v2536 = vunpack.c.l.b16 %v2391
        %v2537 = vunpack.c.h.b16 %v2391
        %v2538 = vunpack.c.l.b16 %v2392
        %v2539 = vunpack.c.h.b16 %v2392
        %v2540 = vunpack.c.l.b16 %v2393
        %v2541 = vunpack.c.h.b16 %v2393
        %v2542 = vunpack.c.l.b16 %v2394
        %v2543 = vunpack.c.h.b16 %v2394
        %v2544 = vunpack.c.l.b16 %v2395
        %v2545 = vunpack.c.h.b16 %v2395
        %v2546 = vunpack.c.l.b16 %v2396
        %v2547 = vunpack.c.h.b16 %v2396
        %v2548 = vunpack.c.l.b16 %v2397
        %v2549 = vunpack.c.h.b16 %v2397
        %v2550 = vunpack.c.l.b16 %v2398
        %v2551 = vunpack.c.h.b16 %v2398
        %v2552 = vunpack.c.l.b16 %v2399
        %v2553 = vunpack.c.h.b16 %v2399
        %v2554 = vunpack.c.l.b16 %v2400
        %v2555 = vunpack.c.h.b16 %v2400
        %v2556 = vunpack.c.l.b16 %v2401
        %v2557 = vunpack.c.h.b16 %v2401
        %v2558 = vunpack.c.l.b16 %v2402
        %v2559 = vunpack.c.h.b16 %v2402
        %v2560 = vunpack.c.l.b16 %v2403
        %v2561 = vunpack.c.h.b16 %v2403
        %v2562 = vunpack.c.l.b16 %v2404
        %v2563 = vunpack.c.h.b16 %v2404
        %v2564 = vunpack.c.l.b16 %v2405
        %v2565 = vunpack.c.h.b16 %v2405
        %v2566 = vunpack.c.l.b16 %v2406
        %v2567 = vunpack.c.h.b16 %v2406
        %v2568 = vunpack.c.l.b16 %v2407
        %v2569 = vunpack.c.h.b16 %v2407
        %v2570 = vunpack.c.l.b16 %v2408
        %v2571 = vunpack.c.h.b16 %v2408
        %v2572 = vunpack.c.l.b16 %v2409
        %v2573 = vunpack.c.h.b16 %v2409
        %v2574 = vunpack.c.l.b16 %v2410
        %v2575 = vunpack.c.h.b16 %v2410
        %v2576 = vunpack.c.l.b16 %v2411
        %v2577 = vunpack.c.h.b16 %v2411
        %v2578 = vunpack.c.l.b16 %v2412
        %v2579 = vunpack.c.h.b16 %v2412
        %v2580 = vunpack.c.l.b16 %v2413
        %v2581 = vunpack.c.h.b16 %v2413
        %v2582 = vunpack.c.l.b16 %v2414
        %v2583 = vunpack.c.h.b16 %v2414
        %v2584 = vunpack.c.l.b16 %v2415
        %v2585 = vunpack.c.h.b16 %v2415
        %v2586 = vunpack.c.l.b16 %v2416
        %v2587 = vunpack.c.h.b16 %v2416
        %v2588 = vunpack.c.l.b16 %v2417
        %v2589 = vunpack.c.h.b16 %v2417
        %v2590 = vunpack.c.l.b16 %v2418
        %v2591 = vunpack.c.h.b16 %v2418
        %v2592 = vunpack.c.l.b16 %v2419
        %v2593 = vunpack.c.h.b16 %v2419
        %v2594 = vunpack.c.l.b16 %v2420
        %v2595 = vunpack.c.h.b16 %v2420
        %v2596 = vunpack.c.l.b16 %v2421
        %v2597 = vunpack.c.h.b16 %v2421
        %v2598 = vunpack.c.l.b16 %v2422
        %v2599 = vunpack.c.h.b16 %v2422
        %v2600 = vunpack.c.l.b16 %v2423
        %v2601 = vunpack.c.h.b16 %v2423
        %v2602 = vunpack.c.l.b16 %v2424
        %v2603 = vunpack.c.h.b16 %v2424
        %v2604 = vunpack.c.l.b16 %v2425
        %v2605 = vunpack.c.h.b16 %v2425
        %v2606 = vunpack.c.l.b16 %v2426
        %v2607 = vunpack.c.h.b16 %v2426
        %v2608 = vunpack.c.l.b16 %v2427
        %v2609 = vunpack.c.h.b16 %v2427
        %v2610 = vunpack.c.l.b16 %v2428
        %v2611 = vunpack.c.h.b16 %v2428
        %v2612 = vunpack.c.l.b16 %v2429
        %v2613 = vunpack.c.h.b16 %v2429
        %v2614 = vunpack.c.l.b16 %v2430
        %v2615 = vunpack.c.h.b16 %v2430
        %v2616 = vunpack.c.l.b16 %v2431
        %v2617 = vunpack.c.h.b16 %v2431
        %v2618 = vunpack.c.l.b16 %v2432
        %v2619 = vunpack.c.h.b16 %v2432
        %v2620 = vunpack.c.l.b16 %v2433
        %v2621 = vunpack.c.h.b16 %v2433
        %v2622 = vunpack.c.l.b16 %v2434
        %v2623 = vunpack.c.h.b16 %v2434
        %v2624 = vunpack.c.l.b16 %v2435
        %v2625 = vunpack.c.h.b16 %v2435
        %v2626 = vunpack.c.l.b16 %v2436
        %v2627 = vunpack.c.h.b16 %v2436
        %v2628 = vunpack.c.l.b16 %v2437
        %v2629 = vunpack.c.h.b16 %v2437
        %v2630 = vunpack.c.l.b16 %v2438
        %v2631 = vunpack.c.h.b16 %v2438
        %v2632 = vunpack.c.l.b16 %v2439
        %v2633 = vunpack.c.h.b16 %v2439
        %v2634 = vunpack.c.l.b16 %v2440
        %v2635 = vunpack.c.h.b16 %v2440
        %v2636 = vunpack.c.l.b16 %v2441
        %v2637 = vunpack.c.h.b16 %v2441
        %v2638 = vunpack.c.l.b16 %v2442
        %v2639 = vunpack.c.h.b16 %v2442
        %v2640 = vunpack.c.l.b16 %v2443
        %v2641 = vunpack.c.h.b16 %v2443
        %v2642 = vunpack.c.l.b16 %v2444
        %v2643 = vunpack.c.h.b16 %v2444
        %v2644 = vunpack.c.l.b16 %v2445
        %v2645 = vunpack.c.h.b16 %v2445
        %v2646 = vunpack.c.l.b16 %v2446
        %v2647 = vunpack.c.h.b16 %v2446
        %v2648 = vunpack.c.l.b16 %v2447
        %v2649 = vunpack.c.h.b16 %v2447
        %v2650 = vunpack.c.l.b16 %v2448
        %v2651 = vunpack.c.h.b16 %v2448
        %v2652 = vunpack.c.l.b16 %v2449
        %v2653 = vunpack.c.h.b16 %v2449
        %v2654 = vpack.c.b16 %v2528, %v2526
        %v2655 = vpack.c.b16 %v2529, %v2527
        %v2656 = vpack.c.b16 %v2532, %v2530
        %v2657 = vpack.c.b16 %v2533, %v2531
        %v2658 = vpack.c.b16 %v2536, %v2534
        %v2659 = vpack.c.b16 %v2537, %v2535
        %v2660 = vpack.c.b16 %v2540, %v2538
        %v2661 = vpack.c.b16 %v2541, %v2539
        %v2662 = vpack.c.b16 %v2544, %v2542
        %v2663 = vpack.c.b16 %v2545, %v2543
        %v2664 = vpack.c.b16 %v2548, %v2546
        %v2665 = vpack.c.b16 %v2549, %v2547
        %v2666 = vpack.c.b16 %v2552, %v2550
        %v2667 = vpack.c.b16 %v2553, %v2551
        %v2668 = vpack.c.b16 %v2556, %v2554
        %v2669 = vpack.c.b16 %v2557, %v2555
        %v2670 = vpack.c.b16 %v2560, %v2558
        %v2671 = vpack.c.b16 %v2561, %v2559
        %v2672 = vpack.c.b16 %v2564, %v2562
        %v2673 = vpack.c.b16 %v2565, %v2563
        %v2674 = vpack.c.b16 %v2568, %v2566
        %v2675 = vpack.c.b16 %v2569, %v2567
        %v2676 = vpack.c.b16 %v2572, %v2570
        %v2677 = vpack.c.b16 %v2573, %v2571
        %v2678 = vpack.c.b16 %v2576, %v2574
        %v2679 = vpack.c.b16 %v2577, %v2575
        %v2680 = vpack.c.b16 %v2580, %v2578
        %v2681 = vpack.c.b16 %v2581, %v2579
        %v2682 = vpack.c.b16 %v2584, %v2582
        %v2683 = vpack.c.b16 %v2585, %v2583
        %v2684 = vpack.c.b16 %v2588, %v2586
        %v2685 = vpack.c.b16 %v2589, %v2587
        %v2686 = vpack.c.b16 %v2592, %v2590
        %v2687 = vpack.c.b16 %v2593, %v2591
        %v2688 = vpack.c.b16 %v2596, %v2594
        %v2689 = vpack.c.b16 %v2597, %v2595
        %v2690 = vpack.c.b16 %v2600, %v2598
        %v2691 = vpack.c.b16 %v2601, %v2599
        %v2692 = vpack.c.b16 %v2604, %v2602
        %v2693 = vpack.c.b16 %v2605, %v2603
        %v2694 = vpack.c.b16 %v2608, %v2606
        %v2695 = vpack.c.b16 %v2609, %v2607
        %v2696 = vpack.c.b16 %v2612, %v2610
        %v2697 = vpack.c.b16 %v2613, %v2611
        %v2698 = vpack.c.b16 %v2616, %v2614
        %v2699 = vpack.c.b16 %v2617, %v2615
        %v2700 = vpack.c.b16 %v2620, %v2618
        %v2701 = vpack.c.b16 %v2621, %v2619
        %v2702 = vpack.c.b16 %v2624, %v2622
        %v2703 = vpack.c.b16 %v2625, %v2623
        %v2704 = vpack.c.b16 %v2628, %v2626
        %v2705 = vpack.c.b16 %v2629, %v2627
        %v2706 = vpack.c.b16 %v2632, %v2630
        %v2707 = vpack.c.b16 %v2633, %v2631
        %v2708 = vpack.c.b16 %v2636, %v2634
        %v2709 = vpack.c.b16 %v2637, %v2635
        %v2710 = vpack.c.b16 %v2640, %v2638
        %v2711 = vpack.c.b16 %v2641, %v2639
        %v2712 = vpack.c.b16 %v2644, %v2642
        %v2713 = vpack.c.b16 %v2645, %v2643
        %v2714 = vpack.c.b16 %v2648, %v2646
        %v2715 = vpack.c.b16 %v2649, %v2647
        %v2716 = vpack.c.b16 %v2652, %v2650
        %v2717 = vpack.c.b16 %v2653, %v2651
        %2782 = vmatprep.subr.bf16.mxu0 %v2655
        %2783 = vmatpush1.bf16.msra.mxu0 %v2654
        %2784 = vmatprep.subr.bf16.mxu0 %v2657
        %2785 = vmatpush1.bf16.msra.mxu0 %v2656
        %2786 = vmatprep.subr.bf16.mxu0 %v2659
        %2787 = vmatpush1.bf16.msra.mxu0 %v2658
        %2788 = vmatprep.subr.bf16.mxu0 %v2661
        %2789 = vmatpush1.bf16.msra.mxu0 %v2660
        %2790 = vmatprep.subr.bf16.mxu0 %v2663
        %2791 = vmatpush1.bf16.msra.mxu0 %v2662
        %2792 = vmatprep.subr.bf16.mxu0 %v2665
        %2793 = vmatpush1.bf16.msra.mxu0 %v2664
        %2794 = vmatprep.subr.bf16.mxu0 %v2667
        %2795 = vmatpush1.bf16.msra.mxu0 %v2666
        %2796 = vmatprep.subr.bf16.mxu0 %v2669
        %2797 = vmatpush1.bf16.msra.mxu0 %v2668
        %2798 = vmatprep.subr.bf16.mxu0 %v2671
        %2799 = vmatpush1.bf16.msra.mxu0 %v2670
        %2800 = vmatprep.subr.bf16.mxu0 %v2673
        %2801 = vmatpush1.bf16.msra.mxu0 %v2672
        %2802 = vmatprep.subr.bf16.mxu0 %v2675
        %2803 = vmatpush1.bf16.msra.mxu0 %v2674
        %2804 = vmatprep.subr.bf16.mxu0 %v2677
        %2805 = vmatpush1.bf16.msra.mxu0 %v2676
        %2806 = vmatprep.subr.bf16.mxu0 %v2679
        %2807 = vmatpush1.bf16.msra.mxu0 %v2678
        %2808 = vmatprep.subr.bf16.mxu0 %v2681
        %2809 = vmatpush1.bf16.msra.mxu0 %v2680
        %2810 = vmatprep.subr.bf16.mxu0 %v2683
        %2811 = vmatpush1.bf16.msra.mxu0 %v2682
        %2812 = vmatprep.subr.bf16.mxu0 %v2685
        %2813 = vmatpush1.bf16.msra.mxu0 %v2684
        %2814 = vmatprep.mubr.bf16.mxu0 %v2355
        %2815 = vmatmul.mubr.bf16.gmra.mrb[0].mxu0 %v2354
        %v2816 = vpop.f32.mrb[0].mxu0
        %v2817 = vadd.f32 %v2455, %v2816
        %v2818 = vpop.f32.mrb[0].mxu0
        %v2819 = vadd.f32 %v2459, %v2818
        %v2820 = vpop.f32.mrb[0].mxu0
        %v2821 = vadd.f32 %v2455, %v2820
        %v2822 = vpop.f32.mrb[0].mxu0
        %v2823 = vadd.f32 %v2459, %v2822
        %2824 = vmatprep.mubr.bf16.mxu0 %v2359
        %2825 = vmatmul.mubr.bf16.gmra.mrb[0].mxu0 %v2358
        %v2826 = vpop.f32.mrb[0].mxu0
        %v2827 = vadd.f32 %v2455, %v2826
        %v2828 = vpop.f32.mrb[0].mxu0
        %v2829 = vadd.f32 %v2459, %v2828
        %v2830 = vpop.f32.mrb[0].mxu0
        %v2831 = vadd.f32 %v2455, %v2830
        %v2832 = vpop.f32.mrb[0].mxu0
        %v2833 = vadd.f32 %v2459, %v2832
        %2834 = vmatprep.mubr.bf16.mxu0 %v2363
        %2835 = vmatmul.mubr.bf16.gmra.mrb[0].mxu0 %v2362
        %v2836 = vpop.f32.mrb[0].mxu0
        %v2837 = vadd.f32 %v2455, %v2836
        %v2838 = vpop.f32.mrb[0].mxu0
        %v2839 = vadd.f32 %v2459, %v2838
        %v2840 = vpop.f32.mrb[0].mxu0
        %v2841 = vadd.f32 %v2455, %v2840
        %v2842 = vpop.f32.mrb[0].mxu0
        %v2843 = vadd.f32 %v2459, %v2842
        %2844 = vmatprep.mubr.bf16.mxu0 %v2367
        %2845 = vmatmul.mubr.bf16.gmra.mrb[0].mxu0 %v2366
        %v2846 = vpop.f32.mrb[0].mxu0
        %v2847 = vadd.f32 %v2455, %v2846
        %v2848 = vpop.f32.mrb[0].mxu0
        %v2849 = vadd.f32 %v2459, %v2848
        %v2850 = vpop.f32.mrb[0].mxu0
        %v2851 = vadd.f32 %v2455, %v2850
        %v2852 = vpop.f32.mrb[0].mxu0
        %v2853 = vadd.f32 %v2459, %v2852
        %2854 = vmatprep.mubr.bf16.mxu0 %v2371
        %2855 = vmatmul.mubr.bf16.gmra.mrb[0].mxu0 %v2370
        %v2856 = vpop.f32.mrb[0].mxu0
        %v2857 = vadd.f32 %v2455, %v2856
        %v2858 = vpop.f32.mrb[0].mxu0
        %v2859 = vadd.f32 %v2459, %v2858
        %v2860 = vpop.f32.mrb[0].mxu0
        %v2861 = vadd.f32 %v2455, %v2860
        %v2862 = vpop.f32.mrb[0].mxu0
        %v2863 = vadd.f32 %v2459, %v2862
        %2864 = vmatprep.mubr.bf16.mxu0 %v2375
        %2865 = vmatmul.mubr.bf16.gmra.mrb[0].mxu0 %v2374
        %v2866 = vpop.f32.mrb[0].mxu0
        %v2867 = vadd.f32 %v2455, %v2866
        %v2868 = vpop.f32.mrb[0].mxu0
        %v2869 = vadd.f32 %v2459, %v2868
        %v2870 = vpop.f32.mrb[0].mxu0
        %v2871 = vadd.f32 %v2455, %v2870
        %v2872 = vpop.f32.mrb[0].mxu0
        %v2873 = vadd.f32 %v2459, %v2872
        %2874 = vmatprep.mubr.bf16.mxu0 %v2379
        %2875 = vmatmul.mubr.bf16.gmra.mrb[0].mxu0 %v2378
        %v2876 = vpop.f32.mrb[0].mxu0
        %v2877 = vadd.f32 %v2455, %v2876
        %v2878 = vpop.f32.mrb[0].mxu0
        %v2879 = vadd.f32 %v2459, %v2878
        %v2880 = vpop.f32.mrb[0].mxu0
        %v2881 = vadd.f32 %v2455, %v2880
        %v2882 = vpop.f32.mrb[0].mxu0
        %v2883 = vadd.f32 %v2459, %v2882
        %2884 = vmatprep.mubr.bf16.mxu0 %v2383
        %2885 = vmatmul.mubr.bf16.gmra.mrb[0].mxu0 %v2382
        %v2886 = vpop.f32.mrb[0].mxu0
        %v2887 = vadd.f32 %v2455, %v2886
        %v2888 = vpop.f32.mrb[0].mxu0
        %v2889 = vadd.f32 %v2459, %v2888
        %v2890 = vpop.f32.mrb[0].mxu0
        %v2891 = vadd.f32 %v2455, %v2890
        %v2892 = vpop.f32.mrb[0].mxu0
        %v2893 = vadd.f32 %v2459, %v2892
        %2894 = vdwg.mxu0
        %2895 = vmatprep.subr.bf16.mxu0 %v2687
        %2896 = vmatpush1.bf16.msra.mxu0 %v2686
        %2897 = vmatprep.subr.bf16.mxu0 %v2689
        %2898 = vmatpush1.bf16.msra.mxu0 %v2688
        %2899 = vmatprep.subr.bf16.mxu0 %v2691
        %2900 = vmatpush1.bf16.msra.mxu0 %v2690
        %2901 = vmatprep.subr.bf16.mxu0 %v2693
        %2902 = vmatpush1.bf16.msra.mxu0 %v2692
        %2903 = vmatprep.subr.bf16.mxu0 %v2695
        %2904 = vmatpush1.bf16.msra.mxu0 %v2694
        %2905 = vmatprep.subr.bf16.mxu0 %v2697
        %2906 = vmatpush1.bf16.msra.mxu0 %v2696
        %2907 = vmatprep.subr.bf16.mxu0 %v2699
        %2908 = vmatpush1.bf16.msra.mxu0 %v2698
        %2909 = vmatprep.subr.bf16.mxu0 %v2701
        %2910 = vmatpush1.bf16.msra.mxu0 %v2700
        %2911 = vmatprep.subr.bf16.mxu0 %v2703
        %2912 = vmatpush1.bf16.msra.mxu0 %v2702
        %2913 = vmatprep.subr.bf16.mxu0 %v2705
        %2914 = vmatpush1.bf16.msra.mxu0 %v2704
        %2915 = vmatprep.subr.bf16.mxu0 %v2707
        %2916 = vmatpush1.bf16.msra.mxu0 %v2706
        %2917 = vmatprep.subr.bf16.mxu0 %v2709
        %2918 = vmatpush1.bf16.msra.mxu0 %v2708
        %2919 = vmatprep.subr.bf16.mxu0 %v2711
        %2920 = vmatpush1.bf16.msra.mxu0 %v2710
        %2921 = vmatprep.subr.bf16.mxu0 %v2713
        %2922 = vmatpush1.bf16.msra.mxu0 %v2712
        %2923 = vmatprep.subr.bf16.mxu0 %v2715
        %2924 = vmatpush1.bf16.msra.mxu0 %v2714
        %2925 = vmatprep.subr.bf16.mxu0 %v2717
        %2926 = vmatpush1.bf16.msra.mxu0 %v2716
        %2927 = vmatprep.mubr.bf16.mxu0 %v2357
        %2928 = vmatmul.mubr.bf16.gmra.mrb[0].mxu0 %v2356
        %v2929 = vpop.f32.mrb[0].mxu0
        %v2930 = vadd.f32 %v2817, %v2929
        %v2931 = vpop.f32.mrb[0].mxu0
        %v2932 = vadd.f32 %v2819, %v2931
        %v2933 = vpop.f32.mrb[0].mxu0
        %v2934 = vadd.f32 %v2821, %v2933
        %v2935 = vpop.f32.mrb[0].mxu0
        %v2936 = vadd.f32 %v2823, %v2935
        %2937 = vmatprep.mubr.bf16.mxu0 %v2361
        %2938 = vmatmul.mubr.bf16.gmra.mrb[0].mxu0 %v2360
        %v2939 = vpop.f32.mrb[0].mxu0
        %v2940 = vadd.f32 %v2827, %v2939
        %v2941 = vpop.f32.mrb[0].mxu0
        %v2942 = vadd.f32 %v2829, %v2941
        %v2943 = vpop.f32.mrb[0].mxu0
        %v2944 = vadd.f32 %v2831, %v2943
        %v2945 = vpop.f32.mrb[0].mxu0
        %v2946 = vadd.f32 %v2833, %v2945
        %2947 = vmatprep.mubr.bf16.mxu0 %v2365
        %2948 = vmatmul.mubr.bf16.gmra.mrb[0].mxu0 %v2364
        %v2949 = vpop.f32.mrb[0].mxu0
        %v2950 = vadd.f32 %v2837, %v2949
        %v2951 = vpop.f32.mrb[0].mxu0
        %v2952 = vadd.f32 %v2839, %v2951
        %v2953 = vpop.f32.mrb[0].mxu0
        %v2954 = vadd.f32 %v2841, %v2953
        %v2955 = vpop.f32.mrb[0].mxu0
        %v2956 = vadd.f32 %v2843, %v2955
        %2957 = vmatprep.mubr.bf16.mxu0 %v2369
        %2958 = vmatmul.mubr.bf16.gmra.mrb[0].mxu0 %v2368
        %v2959 = vpop.f32.mrb[0].mxu0
        %v2960 = vadd.f32 %v2847, %v2959
        %v2961 = vpop.f32.mrb[0].mxu0
        %v2962 = vadd.f32 %v2849, %v2961
        %v2963 = vpop.f32.mrb[0].mxu0
        %v2964 = vadd.f32 %v2851, %v2963
        %v2965 = vpop.f32.mrb[0].mxu0
        %v2966 = vadd.f32 %v2853, %v2965
        %2967 = vmatprep.mubr.bf16.mxu0 %v2373
        %2968 = vmatmul.mubr.bf16.gmra.mrb[0].mxu0 %v2372
        %v2969 = vpop.f32.mrb[0].mxu0
        %v2970 = vadd.f32 %v2857, %v2969
        %v2971 = vpop.f32.mrb[0].mxu0
        %v2972 = vadd.f32 %v2859, %v2971
        %v2973 = vpop.f32.mrb[0].mxu0
        %v2974 = vadd.f32 %v2861, %v2973
        %v2975 = vpop.f32.mrb[0].mxu0
        %v2976 = vadd.f32 %v2863, %v2975
        %2977 = vmatprep.mubr.bf16.mxu0 %v2377
        %2978 = vmatmul.mubr.bf16.gmra.mrb[0].mxu0 %v2376
        %v2979 = vpop.f32.mrb[0].mxu0
        %v2980 = vadd.f32 %v2867, %v2979
        %v2981 = vpop.f32.mrb[0].mxu0
        %v2982 = vadd.f32 %v2869, %v2981
        %v2983 = vpop.f32.mrb[0].mxu0
        %v2984 = vadd.f32 %v2871, %v2983
        %v2985 = vpop.f32.mrb[0].mxu0
        %v2986 = vadd.f32 %v2873, %v2985
        %2987 = vmatprep.mubr.bf16.mxu0 %v2381
        %2988 = vmatmul.mubr.bf16.gmra.mrb[0].mxu0 %v2380
        %v2989 = vpop.f32.mrb[0].mxu0
        %v2990 = vadd.f32 %v2877, %v2989
        %v2991 = vpop.f32.mrb[0].mxu0
        %v2992 = vadd.f32 %v2879, %v2991
        %v2993 = vpop.f32.mrb[0].mxu0
        %v2994 = vadd.f32 %v2881, %v2993
        %v2995 = vpop.f32.mrb[0].mxu0
        %v2996 = vadd.f32 %v2883, %v2995
        %2997 = vmatprep.mubr.bf16.mxu0 %v2385
        %2998 = vmatmul.mubr.bf16.gmra.mrb[0].mxu0 %v2384
        %v2999 = vpop.f32.mrb[0].mxu0
        %v3000 = vadd.f32 %v2887, %v2999
        %v3001 = vpop.f32.mrb[0].mxu0
        %v3002 = vadd.f32 %v2889, %v3001
        %v3003 = vpop.f32.mrb[0].mxu0
        %v3004 = vadd.f32 %v2891, %v3003
        %v3005 = vpop.f32.mrb[0].mxu0
        %v3006 = vadd.f32 %v2893, %v3005
        %3007 = vdwg.mxu0
        %v3008 = vmax.f32 %v2930, %v2940
        %v3009 = vmax.f32 %v2934, %v2944
        %v3010 = vmax.f32 %v3008, %v2950
        %v3011 = vmax.f32 %v3009, %v2954
        %v3012 = vmax.f32 %v3010, %v2960
        %v3013 = vmax.f32 %v3011, %v2964
        %v3014 = vmax.f32 %v3012, %v2970
        %v3015 = vmax.f32 %v3013, %v2974
        %v3016 = vmax.f32 %v3014, %v2980
        %v3017 = vmax.f32 %v3015, %v2984
        %v3018 = vmax.f32 %v3016, %v2990
        %v3019 = vmax.f32 %v3017, %v2994
        %v3020 = vmax.f32 %v3018, %v3000
        %v3021 = vmax.f32 %v3019, %v3004
        %v3022 = vmax.f32 %v3020, %v3021
        %v3023 = vrot.slane %v3022, 4
        %v3024 = vmax.f32 %v3022, %v3023
        %v3025 = vrot.slane %v3024, 2
        %v3026 = vmax.f32 %v3024, %v3025
        %v3027 = vrot.slane %v3026, 1
        %v3028 = vmax.f32 %v3026, %v3027
        %v3029 = vmax.f32 %v2932, %v2942
        %v3030 = vmax.f32 %v2936, %v2946
        %v3031 = vmax.f32 %v3029, %v2952
        %v3032 = vmax.f32 %v3030, %v2956
        %v3033 = vmax.f32 %v3031, %v2962
        %v3034 = vmax.f32 %v3032, %v2966
        %v3035 = vmax.f32 %v3033, %v2972
        %v3036 = vmax.f32 %v3034, %v2976
        %v3037 = vmax.f32 %v3035, %v2982
        %v3038 = vmax.f32 %v3036, %v2986
        %v3039 = vmax.f32 %v3037, %v2992
        %v3040 = vmax.f32 %v3038, %v2996
        %v3041 = vmax.f32 %v3039, %v3002
        %v3042 = vmax.f32 %v3040, %v3006
        %v3043 = vmax.f32 %v3041, %v3042
        %v3044 = vrot.slane %v3043, 4
        %v3045 = vmax.f32 %v3043, %v3044
        %v3046 = vrot.slane %v3045, 2
        %v3047 = vmax.f32 %v3045, %v3046
        %v3048 = vrot.slane %v3047, 1
        %v3049 = vmax.f32 %v3047, %v3048
        %v3052 = vcombine.low %v3028, %v3049
        %v3054 = vunpack.c.l.s4 1966171168
        %v3055 = vunpack.c.0.s8 %v3054
        %v3056 = vlaneseq
        %v3057 = vshrl.u32 %v3056, 7
        %v3058 = vsub.s32 %v3055, %v3057
        %v3059 = vrot.slane %v3052, %v3058
        %v3061 = vunpack.c.l.s4 1966171168
        %v3062 = vunpack.c.0.s8 %v3061
        %v3063 = vlaneseq
        %v3064 = vshrl.u32 %v3063, 7
        %v3065 = vsub.s32 %v3062, %v3064
        %v3066 = vrot.slane %v3059, %v3065
        %v3068 = vlaneseq
        %vm3069 = vcmp.ge.s32.totalorder %v3068, 0
        %vm3070 = vcmp.lt.s32.totalorder %v3068, 256
        %vm3071 = vmand %vm3069, %vm3070
        %3072 = vst.msk [vmem:[%s401] sm:$0x3] %vm3071, %v3066
        %p3073 = scmp.lt.s32.totalorder %s23, 1
        %s3074 = scalar_select %p3073, %s23, 1
        %s3075 = smul.addr %s3074, 2
        %s3076 = scalar_lea.vmem %s10, %s3075
        // Predicated region
        $region73: #{predictor_forward.2} parent=59 // pred_check
          %p3077 = pneg %p256
        $region74: #{predictor_forward.2} parent=59 // pred_check_branch
          %3079 = sbr.rel (%p3077) target = $region76
        $region75: #{predictor_forward.2} parent=59 // pred_region
          _
        $region76: #{predictor_forward.2} parent=59 // pred_fallthru
          _
      $region60: #{predictor_forward.2} parent=5 // pred_fallthru
        _
      %p3080 = scmp.le.s32.totalorder 2, %s18
      // Predicated region
      $region77: #{predictor_forward.2} parent=5 // pred_check
        %p3081 = pneg %p3080
      $region78: #{predictor_forward.2} parent=5 // pred_check_branch
        %3083 = sbr.rel (%p3081) target = $region80
      $region79: #{predictor_forward.2} parent=5 // pred_region
        %s3084 = ssub.s32 %s18, 2
        // Predicated region
        $region81: #{predictor_forward.2} parent=79 // pred_check
          %p3085 = pneg %p262
        $region82: #{predictor_forward.2} parent=79 // pred_check_branch
          %3087 = sbr.rel (%p3085) target = $region84
        $region83: #{predictor_forward.2} parent=79 // pred_region
          %p3088 = scmp.lt.s32.totalorder %s24, 1
          %s3089 = scalar_select %p3088, %s24, 1
          %s3090 = smul.addr %s3089, 2
          %s3091 = scalar_lea.vmem %s10, %s3090
        $region84: #{predictor_forward.2} parent=79 // pred_fallthru
          _
      $region80: #{predictor_forward.2} parent=5 // pred_fallthru
        _
    $region6: #{predictor_forward.2} parent=1 // loop_footer
      %s22 = sadd.s32 1, %s18
    $region7: #{predictor_forward.2} parent=1 // loop_footer_branch
      %17 = sbr.rel target = $region3
    $region8: #{predictor_forward.2} parent=1 // loop_exit
      _
    %3092 = vsyncpa [#allocation3], 1
    %s3093 = scalar_lea.sflag [#allocation3], 1
    %3094 = vsyncpa %s3093, 1
    %3095 = vsyncpa [#allocation5], 1

</llo_original>
